<compile_context>
chip_gen: v6e
topology: v6e:2x2x1
jax: 0.10.0
libtpu: 0.0.40
codegen_flags: <defaults>
</compile_context>

<pallas_src>
import functools

import jax
import jax.numpy as jnp
from jax.experimental import pallas as pl
from jax.experimental.pallas import tpu as pltpu

LANE = 128
SUBLANE = 8


def _round_up(x, m):
    return -(-x // m) * m


def _tpu_generation():
    try:
        kind = jax.devices()[0].device_kind.lower().replace(" ", "")
    except Exception:
        return 0
    for gen in (7, 6, 5, 4):
        if f"v{gen}" in kind or f"tpu{gen}" in kind:
            return gen
    return 0


def _vmem_capacity_bytes():
    try:
        return int(pltpu.get_tpu_info().vmem_capacity_bytes)
    except Exception:
        return (64 if _tpu_generation() >= 7 else 128) * 2 ** 20


def _pick_row_tile(out_h, w_pad, target_m):
    """Smallest power-of-two row tile with TH * w_pad >= target_m (capped)."""
    th = 1
    while th * w_pad < target_m and th < out_h:
        th *= 2
    return min(th, 64)


def _aspp_kernel(x_ref, w_ref, shift_ref, o_ref, *,
                 TH, W_OUT, KH, KW, dilation, use_roll):
    # x_ref:     (1, H_in, W_in, Cin_p)   whole padded bf16 NHWC image (resident)
    # w_ref:     (KH*KW*Cin_p, TCout)     BN-scale-folded bf16 weight tile
    # shift_ref: (1, TCout)               f32 BN shift = beta - mean * scale
    # o_ref:     (1, TH, W_OUT, TCout)    f32 output row tile (lane-dense last dim)
    cin = x_ref.shape[-1]
    w_in = x_ref.shape[-2]
    tco = o_ref.shape[-1]
    row0 = pl.multiple_of(pl.program_id(2) * TH, TH)

    acc = jnp.zeros((TH * W_OUT, tco), jnp.float32)
    tap = 0
    for kh in range(KH):
        # H is a major dim of the block -> dynamic row slicing is free.
        rows = x_ref[0, pl.ds(row0 + kh * dilation, TH), :, :]
        # Upcast once per kh: 32-bit sublane rotates are the well-supported
        # XLU path, and the cast is negligible VPU work.
        rows = rows.astype(jnp.float32)                      # (TH, W_in, Cin_p)
        for kw in range(KW):
            c0 = kw * dilation
            if c0 == 0:
                lhs = rows[:, :W_OUT, :]
            elif use_roll:
                # XLU rotate + aligned [:W_OUT] slice -> no relayout copy.
                lhs = pltpu.roll(rows, shift=(w_in - c0) % w_in,
                                 axis=1)[:, :W_OUT, :]
            else:
                # Fallback path: unaligned (but correct) static slice.
                lhs = rows[:, c0:c0 + W_OUT, :]
            lhs = lhs.reshape(TH * W_OUT, cin).astype(jnp.bfloat16)
            rhs = w_ref[tap * cin:(tap + 1) * cin, :]        # sublane-aligned slab
            acc += jnp.dot(lhs, rhs, preferred_element_type=jnp.float32)
            tap += 1

    y = jnp.maximum(acc + shift_ref[...], 0.0)               # BN shift + ReLU
    o_ref[...] = y.reshape(1, TH, W_OUT, tco).astype(o_ref.dtype)


def aspp_module_forward(x_nchw, weight_oihw, gamma, beta, running_mean,
                        running_var, *, padding, dilation, eps=1e-5):
    """ASPPModule forward: dilated conv (no bias) + BatchNorm2d (inference) + ReLU."""
    # TODO(synk): training-mode BN (batch statistics) not implemented; this uses
    # inference-mode (running stats) semantics, matching module.eval().
    N, C_in, H, W = x_nchw.shape
    C_out, _, KH, KW = weight_oihw.shape

    out_h = H + 2 * padding - dilation * (KH - 1)
    out_w = W + 2 * padding - dilation * (KW - 1)
    assert out_h >= 1 and out_w >= 1, "kernel does not cover the input"

    gen = _tpu_generation()
    # Output-channel tile: 256 fills the 2x256^2 MXUs on v6e/v7x; 128 matches v5e.
    t_co = 256 if (gen >= 6 and C_out > LANE) else LANE
    cout_p = _round_up(C_out, t_co)
    n_co = cout_p // t_co
    cin_p = _round_up(C_in, LANE)
    # TODO(synk): for tiny channel counts (e.g. Cin=4, Cout=8) pad the *fused*
    # contraction dim KH*KW*Cin once to 128 (wrapper-side tap packing) instead
    # of padding each tap's Cin to 128; irrelevant for real ASPP channel counts.

    halo_h = dilation * (KH - 1)
    halo_w = dilation * (KW - 1)

    out_w_pad = _round_up(out_w, SUBLANE)   # sublane-dense stores & view reshapes
    target_m = 256 if gen >= 6 else 128     # MXU M-dim target per dot
    TH = _pick_row_tile(out_h, out_w_pad, target_m)
    out_h_pad = _round_up(out_h, TH)
    n_h = out_h_pad // TH

    h_in = halo_h + out_h_pad                       # rows the kernel may touch
    w_in = _round_up(halo_w + out_w_pad, SUBLANE)   # cols the kernel may touch

    # ---- glue (plain JAX): layout, padding, BN folding, bf16 cast ----
    x_nhwc = jnp.transpose(x_nchw, (0, 2, 3, 1))                  # NCHW -> NHWC
    x_pad = jnp.pad(
        x_nhwc,
        ((0, 0),
         (padding, h_in - H - padding),
         (padding, w_in - W - padding),
         (0, cin_p - C_in))).astype(jnp.bfloat16)

    scale = (gamma / jnp.sqrt(running_var + eps)).astype(jnp.float32)
    shift = (beta - running_mean * scale).astype(jnp.float32)

    # OIHW -> HWIO, fold BN scale into the weight (in f32), zero-pad channels,
    # fuse the KH*KW taps along the contraction dim, then cast to bf16.
    w_hwio = jnp.transpose(weight_oihw, (2, 3, 1, 0)).astype(jnp.float32)
    w_hwio = w_hwio * scale[None, None, None, :]
    w_fused = jnp.pad(w_hwio, ((0, 0), (0, 0),
                               (0, cin_p - C_in), (0, cout_p - C_out)))
    w_fused = w_fused.reshape(KH * KW * cin_p, cout_p).astype(jnp.bfloat16)
    shift_p = jnp.pad(shift, (0, cout_p - C_out)).reshape(1, cout_p)

    out_dtype = x_nchw.dtype
    kernel = functools.partial(_aspp_kernel, TH=TH, W_OUT=out_w_pad,
                               KH=KH, KW=KW, dilation=dilation)
    vmem_cap = _vmem_capacity_bytes()

    def build_call(single_buffer_image, use_roll):
        img_bufs = 1 if single_buffer_image else 2
        est = (img_bufs * h_in * w_in * cin_p * 2                # bf16 image
               + 2 * KH * KW * cin_p * t_co * 2                  # bf16 weight (dbl-buf)
               + 2 * t_co * 4                                    # f32 shift
               + 2 * TH * out_w_pad * t_co * out_dtype.itemsize  # output blocks
               + TH * out_w_pad * t_co * 4                       # f32 accumulator
               + 2 * TH * w_in * cin_p * 4)                      # f32 rows + rolled tap
        vmem_limit = int(min(max(int(1.25 * est) + 2 * 2 ** 20, 16 * 2 ** 20),
                             max(vmem_cap - 16 * 2 ** 20, 16 * 2 ** 20)))

        img_kwargs = {}
        if single_buffer_image:
            # Image block index only changes with n -> a single buffer suffices
            # (prefetch is only lost at the batch boundary) and halves the
            # image's VMEM residency (matters on v7x's 64 MiB).
            img_kwargs["pipeline_mode"] = pl.Buffered(1)
        in_specs = [
            # Whole padded image; DMA'd once per image, resident across co/h.
            # TODO(synk): for very large images on v7x, switch to halo'd row
            # tiles fetched with manual pltpu.make_async_copy so VMEM is
            # independent of H.
            pl.BlockSpec((1, h_in, w_in, cin_p),
                         lambda n, co, h: (n, 0, 0, 0), **img_kwargs),
            # TODO(synk): for Cin >= 1024 add an "arbitrary" K grid axis with a
            # VMEM f32 scratch accumulator so this block shrinks to
            # (KH*KW*tk, t_co) and stays double-buffered on v7x.
            pl.BlockSpec((KH * KW * cin_p, t_co), lambda n, co, h: (0, co)),
            pl.BlockSpec((1, t_co), lambda n, co, h: (0, co)),
        ]
        return pl.pallas_call(
            functools.partial(kernel, use_roll=use_roll),
            out_shape=jax.ShapeDtypeStruct((N, out_h_pad, out_w_pad, cout_p),
                                           out_dtype),
            grid_spec=pltpu.PrefetchScalarGridSpec(
                num_scalar_prefetch=0,
                # (N, co, h): weight tile fetched once per (n, co) and reused
                # across all row tiles -- keep co outside h.
                grid=(N, n_co, n_h),
                in_specs=in_specs,
                out_specs=pl.BlockSpec((1, TH, out_w_pad, t_co),
                                       lambda n, co, h: (n, h, 0, co)),
            ),
            compiler_params=pltpu.CompilerParams(
                dimension_semantics=("parallel", "parallel", "parallel"),
                vmem_limit_bytes=vmem_limit),
        )

    try:
        out_nhwc = build_call(True, True)(x_pad, w_fused, shift_p)
    except Exception:
        # Conservative fallback (double-buffered image spec, plain tap slices)
        # in case a backend rejects pl.Buffered(1) or the sublane rotate here.
        out_nhwc = build_call(False, False)(x_pad, w_fused, shift_p)

    # Strip spatial/channel padding; return NCHW to match the PyTorch module.
    # TODO(synk): emit NHWC directly (skip this transpose) if the consumer allows.
    out_nhwc = out_nhwc[:, :out_h, :out_w, :C_out]
    return jnp.transpose(out_nhwc, (0, 3, 1, 2))


def _reference_forward(x_nchw, weight_oihw, gamma, beta, running_mean,
                       running_var, *, padding, dilation, eps=1e-5,
                       quantize_bf16=False):
    """Pure-JAX reference (lax conv) for correctness checking."""
    scale = gamma / jnp.sqrt(running_var + eps)
    shift = beta - running_mean * scale
    w = weight_oihw.astype(jnp.float32) * scale[:, None, None, None]
    x = x_nchw.astype(jnp.float32)
    if quantize_bf16:  # mimic the kernel's bf16 storage of x and folded w
        x = x.astype(jnp.bfloat16).astype(jnp.float32)
        w = w.astype(jnp.bfloat16).astype(jnp.float32)
    y = jax.lax.conv_general_dilated(
        x, w, window_strides=(1, 1),
        padding=((padding, padding), (padding, padding)),
        rhs_dilation=(dilation, dilation),
        dimension_numbers=("NCHW", "OIHW", "NCHW"),
        precision=jax.lax.Precision.HIGHEST)
    y = y + shift[None, :, None, None]
    return jnp.maximum(y, 0.0)


if __name__ == "__main__":
    # Small configuration consistent with ASPPModule:
    #   in_channels=4, planes=8, kernel_size=3, dilation=2, padding=2
    N, C_in, H, W = 2, 4, 16, 16
    C_out, KH, KW = 8, 3, 3
    dilation, padding = 2, 2

    key = jax.random.PRNGKey(0)
    kx, kw = jax.random.split(key)
    x = jax.random.normal(kx, (N, C_in, H, W), dtype=jnp.float32)

    # Kaiming-normal init (fan_in, relu gain) matching nn.init.kaiming_normal_.
    fan_in = C_in * KH * KW
    std = (2.0 / fan_in) ** 0.5
    weight = std * jax.random.normal(kw, (C_out, C_in, KH, KW), dtype=jnp.float32)

    # Deterministic BatchNorm parameters / running stats (inference semantics).
    gamma = 1.0 + 0.1 * jnp.arange(C_out, dtype=jnp.float32)
    beta = 0.05 * jnp.arange(C_out, dtype=jnp.float32)
    running_mean = 0.01 * jnp.arange(C_out, dtype=jnp.float32)
    running_var = 1.0 + 0.02 * jnp.arange(C_out, dtype=jnp.float32)

    out = aspp_module_forward(x, weight, gamma, beta, running_mean, running_var,
                              padding=padding, dilation=dilation)
    out = jax.block_until_ready(out)
    assert out.shape == (N, C_out, H, W)

    # Tight check against a reference fed the same bf16-quantized inputs
    # (validates conv/BN/ReLU semantics, dilation offsets, roll, padding strips).
    ref_q = _reference_forward(x, weight, gamma, beta, running_mean, running_var,
                               padding=padding, dilation=dilation,
                               quantize_bf16=True)
    assert jnp.allclose(out, ref_q, atol=2e-3, rtol=2e-3), \
        "mismatch vs bf16-quantized reference"

    # Loose check against the full-f32 reference (bf16 storage is the only delta).
    ref = _reference_forward(x, weight, gamma, beta, running_mean, running_var,
                             padding=padding, dilation=dilation)
    assert jnp.allclose(out, ref, atol=5e-2, rtol=5e-2), "mismatch vs f32 reference"

    print("KERNEL_OK")
</pallas_src>

<mosaic_0001>
module attributes {stable_mosaic.version = 11 : i64} {
  func.func @_aspp_kernel(%arg0: i32, %arg1: i32, %arg2: i32, %arg3: memref<1x20x24x128xbf16, #tpu.memory_space<vmem>>, %arg4: memref<1152x128xbf16, #tpu.memory_space<vmem>>, %arg5: memref<1x128xf32, #tpu.memory_space<vmem>>, %arg6: memref<1x8x16x128xf32, #tpu.memory_space<vmem>>) attributes {dimension_semantics = [#tpu.dimension_semantics<parallel>, #tpu.dimension_semantics<parallel>, #tpu.dimension_semantics<parallel>], iteration_bounds = array<i64: 2, 1, 2>, scalar_prefetch = 0 : i64, scratch_operands = 0 : i64, tpu.core_type = #tpu.core_type<tc>, window_params = [{pipeline_mode = #tpu.pipeline_mode<synchronous>, transform_indices = @transform_0, window_bounds = array<i64: 1, 20, 24, 128>}, {transform_indices = @transform_1, window_bounds = array<i64: 1152, 128>}, {transform_indices = @transform_2, window_bounds = array<i64: 1, 128>}, {transform_indices = @transform_3, window_bounds = array<i64: 1, 8, 16, 128>}]} {
    %c8_i32 = arith.constant 8 : i32
    %0 = arith.muli %arg2, %c8_i32 : i32
    %1 = tpu.assume_multiple %0, 8 : i32
    %cst = arith.constant 0.000000e+00 : f32
    %2 = vector.broadcast %cst : f32 to vector<128x128xf32>
    %c0_i32 = arith.constant 0 : i32
    %3 = arith.addi %1, %c0_i32 : i32
    %c0 = arith.constant 0 : index
    %4 = arith.index_cast %3 : i32 to index
    %c0_0 = arith.constant 0 : index
    %c0_1 = arith.constant 0 : index
    %5 = vector.load %arg3[%c0, %4, %c0_0, %c0_1] : memref<1x20x24x128xbf16, #tpu.memory_space<vmem>>, vector<1x8x24x128xbf16>
    %6 = vector.shape_cast %5 : vector<1x8x24x128xbf16> to vector<8x24x128xbf16>
    %7 = arith.extf %6 : vector<8x24x128xbf16> to vector<8x24x128xf32>
    %8 = vector.extract_strided_slice %7 {offsets = [0, 0, 0], sizes = [8, 16, 128], strides = [1, 1, 1]} : vector<8x24x128xf32> to vector<8x16x128xf32>
    %9 = vector.shape_cast %8 : vector<8x16x128xf32> to vector<128x128xf32>
    %10 = arith.truncf %9 : vector<128x128xf32> to vector<128x128xbf16>
    %c0_2 = arith.constant 0 : index
    %c0_3 = arith.constant 0 : index
    %11 = vector.load %arg4[%c0_2, %c0_3] : memref<1152x128xbf16, #tpu.memory_space<vmem>>, vector<128x128xbf16>
    %cst_4 = arith.constant dense<0.000000e+00> : vector<128x128xf32>
    %12 = tpu.matmul %10, %11, %cst_4 {dimension_numbers = #tpu.dot_dimension_numbers<[1], [0], [0], [1], [0, 0, 1, 1], [], []>} : vector<128x128xbf16>, vector<128x128xbf16>, vector<128x128xf32> -> vector<128x128xf32>
    %13 = arith.addf %2, %12 : vector<128x128xf32>
    %c22_i32 = arith.constant 22 : i32
    %14 = tpu.dynamic_rotate %7 by %c22_i32 dim 1 : vector<8x24x128xf32>, i32 -> vector<8x24x128xf32>
    %15 = vector.extract_strided_slice %14 {offsets = [0, 0, 0], sizes = [8, 16, 128], strides = [1, 1, 1]} : vector<8x24x128xf32> to vector<8x16x128xf32>
    %16 = vector.shape_cast %15 : vector<8x16x128xf32> to vector<128x128xf32>
    %17 = arith.truncf %16 : vector<128x128xf32> to vector<128x128xbf16>
    %c128 = arith.constant 128 : index
    %c0_5 = arith.constant 0 : index
    %18 = vector.load %arg4[%c128, %c0_5] : memref<1152x128xbf16, #tpu.memory_space<vmem>>, vector<128x128xbf16>
    %cst_6 = arith.constant dense<0.000000e+00> : vector<128x128xf32>
    %19 = tpu.matmul %17, %18, %cst_6 {dimension_numbers = #tpu.dot_dimension_numbers<[1], [0], [0], [1], [0, 0, 1, 1], [], []>} : vector<128x128xbf16>, vector<128x128xbf16>, vector<128x128xf32> -> vector<128x128xf32>
    %20 = arith.addf %13, %19 : vector<128x128xf32>
    %c20_i32 = arith.constant 20 : i32
    %21 = tpu.dynamic_rotate %7 by %c20_i32 dim 1 : vector<8x24x128xf32>, i32 -> vector<8x24x128xf32>
    %22 = vector.extract_strided_slice %21 {offsets = [0, 0, 0], sizes = [8, 16, 128], strides = [1, 1, 1]} : vector<8x24x128xf32> to vector<8x16x128xf32>
    %23 = vector.shape_cast %22 : vector<8x16x128xf32> to vector<128x128xf32>
    %24 = arith.truncf %23 : vector<128x128xf32> to vector<128x128xbf16>
    %c256 = arith.constant 256 : index
    %c0_7 = arith.constant 0 : index
    %25 = vector.load %arg4[%c256, %c0_7] : memref<1152x128xbf16, #tpu.memory_space<vmem>>, vector<128x128xbf16>
    %cst_8 = arith.constant dense<0.000000e+00> : vector<128x128xf32>
    %26 = tpu.matmul %24, %25, %cst_8 {dimension_numbers = #tpu.dot_dimension_numbers<[1], [0], [0], [1], [0, 0, 1, 1], [], []>} : vector<128x128xbf16>, vector<128x128xbf16>, vector<128x128xf32> -> vector<128x128xf32>
    %27 = arith.addf %20, %26 : vector<128x128xf32>
    %c2_i32 = arith.constant 2 : i32
    %28 = arith.addi %1, %c2_i32 : i32
    %c0_9 = arith.constant 0 : index
    %29 = arith.index_cast %28 : i32 to index
    %c0_10 = arith.constant 0 : index
    %c0_11 = arith.constant 0 : index
    %30 = vector.load %arg3[%c0_9, %29, %c0_10, %c0_11] : memref<1x20x24x128xbf16, #tpu.memory_space<vmem>>, vector<1x8x24x128xbf16>
    %31 = vector.shape_cast %30 : vector<1x8x24x128xbf16> to vector<8x24x128xbf16>
    %32 = arith.extf %31 : vector<8x24x128xbf16> to vector<8x24x128xf32>
    %33 = vector.extract_strided_slice %32 {offsets = [0, 0, 0], sizes = [8, 16, 128], strides = [1, 1, 1]} : vector<8x24x128xf32> to vector<8x16x128xf32>
    %34 = vector.shape_cast %33 : vector<8x16x128xf32> to vector<128x128xf32>
    %35 = arith.truncf %34 : vector<128x128xf32> to vector<128x128xbf16>
    %c384 = arith.constant 384 : index
    %c0_12 = arith.constant 0 : index
    %36 = vector.load %arg4[%c384, %c0_12] : memref<1152x128xbf16, #tpu.memory_space<vmem>>, vector<128x128xbf16>
    %cst_13 = arith.constant dense<0.000000e+00> : vector<128x128xf32>
    %37 = tpu.matmul %35, %36, %cst_13 {dimension_numbers = #tpu.dot_dimension_numbers<[1], [0], [0], [1], [0, 0, 1, 1], [], []>} : vector<128x128xbf16>, vector<128x128xbf16>, vector<128x128xf32> -> vector<128x128xf32>
    %38 = arith.addf %27, %37 : vector<128x128xf32>
    %c22_i32_14 = arith.constant 22 : i32
    %39 = tpu.dynamic_rotate %32 by %c22_i32_14 dim 1 : vector<8x24x128xf32>, i32 -> vector<8x24x128xf32>
    %40 = vector.extract_strided_slice %39 {offsets = [0, 0, 0], sizes = [8, 16, 128], strides = [1, 1, 1]} : vector<8x24x128xf32> to vector<8x16x128xf32>
    %41 = vector.shape_cast %40 : vector<8x16x128xf32> to vector<128x128xf32>
    %42 = arith.truncf %41 : vector<128x128xf32> to vector<128x128xbf16>
    %c512 = arith.constant 512 : index
    %c0_15 = arith.constant 0 : index
    %43 = vector.load %arg4[%c512, %c0_15] : memref<1152x128xbf16, #tpu.memory_space<vmem>>, vector<128x128xbf16>
    %cst_16 = arith.constant dense<0.000000e+00> : vector<128x128xf32>
    %44 = tpu.matmul %42, %43, %cst_16 {dimension_numbers = #tpu.dot_dimension_numbers<[1], [0], [0], [1], [0, 0, 1, 1], [], []>} : vector<128x128xbf16>, vector<128x128xbf16>, vector<128x128xf32> -> vector<128x128xf32>
    %45 = arith.addf %38, %44 : vector<128x128xf32>
    %c20_i32_17 = arith.constant 20 : i32
    %46 = tpu.dynamic_rotate %32 by %c20_i32_17 dim 1 : vector<8x24x128xf32>, i32 -> vector<8x24x128xf32>
    %47 = vector.extract_strided_slice %46 {offsets = [0, 0, 0], sizes = [8, 16, 128], strides = [1, 1, 1]} : vector<8x24x128xf32> to vector<8x16x128xf32>
    %48 = vector.shape_cast %47 : vector<8x16x128xf32> to vector<128x128xf32>
    %49 = arith.truncf %48 : vector<128x128xf32> to vector<128x128xbf16>
    %c640 = arith.constant 640 : index
    %c0_18 = arith.constant 0 : index
    %50 = vector.load %arg4[%c640, %c0_18] : memref<1152x128xbf16, #tpu.memory_space<vmem>>, vector<128x128xbf16>
    %cst_19 = arith.constant dense<0.000000e+00> : vector<128x128xf32>
    %51 = tpu.matmul %49, %50, %cst_19 {dimension_numbers = #tpu.dot_dimension_numbers<[1], [0], [0], [1], [0, 0, 1, 1], [], []>} : vector<128x128xbf16>, vector<128x128xbf16>, vector<128x128xf32> -> vector<128x128xf32>
    %52 = arith.addf %45, %51 : vector<128x128xf32>
    %c4_i32 = arith.constant 4 : i32
    %53 = arith.addi %1, %c4_i32 : i32
    %c0_20 = arith.constant 0 : index
    %54 = arith.index_cast %53 : i32 to index
    %c0_21 = arith.constant 0 : index
    %c0_22 = arith.constant 0 : index
    %55 = vector.load %arg3[%c0_20, %54, %c0_21, %c0_22] : memref<1x20x24x128xbf16, #tpu.memory_space<vmem>>, vector<1x8x24x128xbf16>
    %56 = vector.shape_cast %55 : vector<1x8x24x128xbf16> to vector<8x24x128xbf16>
    %57 = arith.extf %56 : vector<8x24x128xbf16> to vector<8x24x128xf32>
    %58 = vector.extract_strided_slice %57 {offsets = [0, 0, 0], sizes = [8, 16, 128], strides = [1, 1, 1]} : vector<8x24x128xf32> to vector<8x16x128xf32>
    %59 = vector.shape_cast %58 : vector<8x16x128xf32> to vector<128x128xf32>
    %60 = arith.truncf %59 : vector<128x128xf32> to vector<128x128xbf16>
    %c768 = arith.constant 768 : index
    %c0_23 = arith.constant 0 : index
    %61 = vector.load %arg4[%c768, %c0_23] : memref<1152x128xbf16, #tpu.memory_space<vmem>>, vector<128x128xbf16>
    %cst_24 = arith.constant dense<0.000000e+00> : vector<128x128xf32>
    %62 = tpu.matmul %60, %61, %cst_24 {dimension_numbers = #tpu.dot_dimension_numbers<[1], [0], [0], [1], [0, 0, 1, 1], [], []>} : vector<128x128xbf16>, vector<128x128xbf16>, vector<128x128xf32> -> vector<128x128xf32>
    %63 = arith.addf %52, %62 : vector<128x128xf32>
    %c22_i32_25 = arith.constant 22 : i32
    %64 = tpu.dynamic_rotate %57 by %c22_i32_25 dim 1 : vector<8x24x128xf32>, i32 -> vector<8x24x128xf32>
    %65 = vector.extract_strided_slice %64 {offsets = [0, 0, 0], sizes = [8, 16, 128], strides = [1, 1, 1]} : vector<8x24x128xf32> to vector<8x16x128xf32>
    %66 = vector.shape_cast %65 : vector<8x16x128xf32> to vector<128x128xf32>
    %67 = arith.truncf %66 : vector<128x128xf32> to vector<128x128xbf16>
    %c896 = arith.constant 896 : index
    %c0_26 = arith.constant 0 : index
    %68 = vector.load %arg4[%c896, %c0_26] : memref<1152x128xbf16, #tpu.memory_space<vmem>>, vector<128x128xbf16>
    %cst_27 = arith.constant dense<0.000000e+00> : vector<128x128xf32>
    %69 = tpu.matmul %67, %68, %cst_27 {dimension_numbers = #tpu.dot_dimension_numbers<[1], [0], [0], [1], [0, 0, 1, 1], [], []>} : vector<128x128xbf16>, vector<128x128xbf16>, vector<128x128xf32> -> vector<128x128xf32>
    %70 = arith.addf %63, %69 : vector<128x128xf32>
    %c20_i32_28 = arith.constant 20 : i32
    %71 = tpu.dynamic_rotate %57 by %c20_i32_28 dim 1 : vector<8x24x128xf32>, i32 -> vector<8x24x128xf32>
    %72 = vector.extract_strided_slice %71 {offsets = [0, 0, 0], sizes = [8, 16, 128], strides = [1, 1, 1]} : vector<8x24x128xf32> to vector<8x16x128xf32>
    %73 = vector.shape_cast %72 : vector<8x16x128xf32> to vector<128x128xf32>
    %74 = arith.truncf %73 : vector<128x128xf32> to vector<128x128xbf16>
    %c1024 = arith.constant 1024 : index
    %c0_29 = arith.constant 0 : index
    %75 = vector.load %arg4[%c1024, %c0_29] : memref<1152x128xbf16, #tpu.memory_space<vmem>>, vector<128x128xbf16>
    %cst_30 = arith.constant dense<0.000000e+00> : vector<128x128xf32>
    %76 = tpu.matmul %74, %75, %cst_30 {dimension_numbers = #tpu.dot_dimension_numbers<[1], [0], [0], [1], [0, 0, 1, 1], [], []>} : vector<128x128xbf16>, vector<128x128xbf16>, vector<128x128xf32> -> vector<128x128xf32>
    %77 = arith.addf %70, %76 : vector<128x128xf32>
    %c0_31 = arith.constant 0 : index
    %c0_32 = arith.constant 0 : index
    %78 = vector.load %arg5[%c0_31, %c0_32] : memref<1x128xf32, #tpu.memory_space<vmem>>, vector<1x128xf32>
    %79 = vector.broadcast %78 : vector<1x128xf32> to vector<128x128xf32>
    %80 = arith.addf %77, %79 : vector<128x128xf32>
    %cst_33 = arith.constant 0.000000e+00 : f32
    %81 = vector.broadcast %cst_33 : f32 to vector<128x128xf32>
    %82 = arith.maximumf %80, %81 : vector<128x128xf32>
    %83 = vector.shape_cast %82 : vector<128x128xf32> to vector<1x8x16x128xf32>
    %c0_34 = arith.constant 0 : index
    %c0_35 = arith.constant 0 : index
    %c0_36 = arith.constant 0 : index
    %c0_37 = arith.constant 0 : index
    %84 = vector.load %arg6[%c0_34, %c0_35, %c0_36, %c0_37] : memref<1x8x16x128xf32, #tpu.memory_space<vmem>>, vector<1x8x16x128xf32>
    tpu.vector_store %arg6[%c0_34, %c0_35, %c0_36, %c0_37], %83 {strides = array<i32>} : memref<1x8x16x128xf32, #tpu.memory_space<vmem>>, vector<1x8x16x128xf32>,
    return
  }
  func.func @transform_0(%arg0: i32, %arg1: i32, %arg2: i32) -> (i32, i32, i32, i32) {
    %c0_i32 = arith.constant 0 : i32
    %c0_i32_0 = arith.constant 0 : i32
    %c0_i32_1 = arith.constant 0 : i32
    %c0_i32_2 = arith.constant 0 : i32
    return %arg0, %c0_i32, %c0_i32_0, %c0_i32_1 : i32, i32, i32, i32
  }
  func.func @transform_1(%arg0: i32, %arg1: i32, %arg2: i32) -> (i32, i32) {
    %c0_i32 = arith.constant 0 : i32
    %c0_i32_0 = arith.constant 0 : i32
    return %c0_i32, %arg1 : i32, i32
  }
  func.func @transform_2(%arg0: i32, %arg1: i32, %arg2: i32) -> (i32, i32) {
    %c0_i32 = arith.constant 0 : i32
    %c0_i32_0 = arith.constant 0 : i32
    return %c0_i32, %arg1 : i32, i32
  }
  func.func @transform_3(%arg0: i32, %arg1: i32, %arg2: i32) -> (i32, i32, i32, i32) {
    %c0_i32 = arith.constant 0 : i32
    %c0_i32_0 = arith.constant 0 : i32
    return %arg0, %arg2, %c0_i32, %arg1 : i32, i32, i32, i32
  }
}

module attributes {stable_mosaic.version = 11 : i64} {
  func.func @_aspp_kernel(%arg0: i32, %arg1: i32, %arg2: i32, %arg3: memref<1x20x24x128xbf16, #tpu.memory_space<vmem>>, %arg4: memref<1152x128xbf16, #tpu.memory_space<vmem>>, %arg5: memref<1x128xf32, #tpu.memory_space<vmem>>, %arg6: memref<1x8x16x128xf32, #tpu.memory_space<vmem>>) attributes {dimension_semantics = [#tpu.dimension_semantics<parallel>, #tpu.dimension_semantics<parallel>, #tpu.dimension_semantics<parallel>], iteration_bounds = array<i64: 2, 1, 2>, scalar_prefetch = 0 : i64, scratch_operands = 0 : i64, tpu.core_type = #tpu.core_type<tc>, window_params = [{transform_indices = @transform_0, window_bounds = array<i64: 1, 20, 24, 128>}, {transform_indices = @transform_1, window_bounds = array<i64: 1152, 128>}, {transform_indices = @transform_2, window_bounds = array<i64: 1, 128>}, {transform_indices = @transform_3, window_bounds = array<i64: 1, 8, 16, 128>}]} {
    %c8_i32 = arith.constant 8 : i32
    %0 = arith.muli %arg2, %c8_i32 : i32
    %1 = tpu.assume_multiple %0, 8 : i32
    %cst = arith.constant 0.000000e+00 : f32
    %2 = vector.broadcast %cst : f32 to vector<128x128xf32>
    %c0_i32 = arith.constant 0 : i32
    %3 = arith.addi %1, %c0_i32 : i32
    %c0 = arith.constant 0 : index
    %4 = arith.index_cast %3 : i32 to index
    %c0_0 = arith.constant 0 : index
    %c0_1 = arith.constant 0 : index
    %5 = vector.load %arg3[%c0, %4, %c0_0, %c0_1] : memref<1x20x24x128xbf16, #tpu.memory_space<vmem>>, vector<1x8x24x128xbf16>
    %6 = vector.shape_cast %5 : vector<1x8x24x128xbf16> to vector<8x24x128xbf16>
    %7 = arith.extf %6 : vector<8x24x128xbf16> to vector<8x24x128xf32>
    %8 = vector.extract_strided_slice %7 {offsets = [0, 0, 0], sizes = [8, 16, 128], strides = [1, 1, 1]} : vector<8x24x128xf32> to vector<8x16x128xf32>
    %9 = vector.shape_cast %8 : vector<8x16x128xf32> to vector<128x128xf32>
    %10 = arith.truncf %9 : vector<128x128xf32> to vector<128x128xbf16>
    %c0_2 = arith.constant 0 : index
    %c0_3 = arith.constant 0 : index
    %11 = vector.load %arg4[%c0_2, %c0_3] : memref<1152x128xbf16, #tpu.memory_space<vmem>>, vector<128x128xbf16>
    %cst_4 = arith.constant dense<0.000000e+00> : vector<128x128xf32>
    %12 = tpu.matmul %10, %11, %cst_4 {dimension_numbers = #tpu.dot_dimension_numbers<[1], [0], [0], [1], [0, 0, 1, 1], [], []>} : vector<128x128xbf16>, vector<128x128xbf16>, vector<128x128xf32> -> vector<128x128xf32>
    %13 = arith.addf %2, %12 : vector<128x128xf32>
    %14 = vector.extract_strided_slice %7 {offsets = [0, 2, 0], sizes = [8, 16, 128], strides = [1, 1, 1]} : vector<8x24x128xf32> to vector<8x16x128xf32>
    %15 = vector.shape_cast %14 : vector<8x16x128xf32> to vector<128x128xf32>
    %16 = arith.truncf %15 : vector<128x128xf32> to vector<128x128xbf16>
    %c128 = arith.constant 128 : index
    %c0_5 = arith.constant 0 : index
    %17 = vector.load %arg4[%c128, %c0_5] : memref<1152x128xbf16, #tpu.memory_space<vmem>>, vector<128x128xbf16>
    %cst_6 = arith.constant dense<0.000000e+00> : vector<128x128xf32>
    %18 = tpu.matmul %16, %17, %cst_6 {dimension_numbers = #tpu.dot_dimension_numbers<[1], [0], [0], [1], [0, 0, 1, 1], [], []>} : vector<128x128xbf16>, vector<128x128xbf16>, vector<128x128xf32> -> vector<128x128xf32>
    %19 = arith.addf %13, %18 : vector<128x128xf32>
    %20 = vector.extract_strided_slice %7 {offsets = [0, 4, 0], sizes = [8, 16, 128], strides = [1, 1, 1]} : vector<8x24x128xf32> to vector<8x16x128xf32>
    %21 = vector.shape_cast %20 : vector<8x16x128xf32> to vector<128x128xf32>
    %22 = arith.truncf %21 : vector<128x128xf32> to vector<128x128xbf16>
    %c256 = arith.constant 256 : index
    %c0_7 = arith.constant 0 : index
    %23 = vector.load %arg4[%c256, %c0_7] : memref<1152x128xbf16, #tpu.memory_space<vmem>>, vector<128x128xbf16>
    %cst_8 = arith.constant dense<0.000000e+00> : vector<128x128xf32>
    %24 = tpu.matmul %22, %23, %cst_8 {dimension_numbers = #tpu.dot_dimension_numbers<[1], [0], [0], [1], [0, 0, 1, 1], [], []>} : vector<128x128xbf16>, vector<128x128xbf16>, vector<128x128xf32> -> vector<128x128xf32>
    %25 = arith.addf %19, %24 : vector<128x128xf32>
    %c2_i32 = arith.constant 2 : i32
    %26 = arith.addi %1, %c2_i32 : i32
    %c0_9 = arith.constant 0 : index
    %27 = arith.index_cast %26 : i32 to index
    %c0_10 = arith.constant 0 : index
    %c0_11 = arith.constant 0 : index
    %28 = vector.load %arg3[%c0_9, %27, %c0_10, %c0_11] : memref<1x20x24x128xbf16, #tpu.memory_space<vmem>>, vector<1x8x24x128xbf16>
    %29 = vector.shape_cast %28 : vector<1x8x24x128xbf16> to vector<8x24x128xbf16>
    %30 = arith.extf %29 : vector<8x24x128xbf16> to vector<8x24x128xf32>
    %31 = vector.extract_strided_slice %30 {offsets = [0, 0, 0], sizes = [8, 16, 128], strides = [1, 1, 1]} : vector<8x24x128xf32> to vector<8x16x128xf32>
    %32 = vector.shape_cast %31 : vector<8x16x128xf32> to vector<128x128xf32>
    %33 = arith.truncf %32 : vector<128x128xf32> to vector<128x128xbf16>
    %c384 = arith.constant 384 : index
    %c0_12 = arith.constant 0 : index
    %34 = vector.load %arg4[%c384, %c0_12] : memref<1152x128xbf16, #tpu.memory_space<vmem>>, vector<128x128xbf16>
    %cst_13 = arith.constant dense<0.000000e+00> : vector<128x128xf32>
    %35 = tpu.matmul %33, %34, %cst_13 {dimension_numbers = #tpu.dot_dimension_numbers<[1], [0], [0], [1], [0, 0, 1, 1], [], []>} : vector<128x128xbf16>, vector<128x128xbf16>, vector<128x128xf32> -> vector<128x128xf32>
    %36 = arith.addf %25, %35 : vector<128x128xf32>
    %37 = vector.extract_strided_slice %30 {offsets = [0, 2, 0], sizes = [8, 16, 128], strides = [1, 1, 1]} : vector<8x24x128xf32> to vector<8x16x128xf32>
    %38 = vector.shape_cast %37 : vector<8x16x128xf32> to vector<128x128xf32>
    %39 = arith.truncf %38 : vector<128x128xf32> to vector<128x128xbf16>
    %c512 = arith.constant 512 : index
    %c0_14 = arith.constant 0 : index
    %40 = vector.load %arg4[%c512, %c0_14] : memref<1152x128xbf16, #tpu.memory_space<vmem>>, vector<128x128xbf16>
    %cst_15 = arith.constant dense<0.000000e+00> : vector<128x128xf32>
    %41 = tpu.matmul %39, %40, %cst_15 {dimension_numbers = #tpu.dot_dimension_numbers<[1], [0], [0], [1], [0, 0, 1, 1], [], []>} : vector<128x128xbf16>, vector<128x128xbf16>, vector<128x128xf32> -> vector<128x128xf32>
    %42 = arith.addf %36, %41 : vector<128x128xf32>
    %43 = vector.extract_strided_slice %30 {offsets = [0, 4, 0], sizes = [8, 16, 128], strides = [1, 1, 1]} : vector<8x24x128xf32> to vector<8x16x128xf32>
    %44 = vector.shape_cast %43 : vector<8x16x128xf32> to vector<128x128xf32>
    %45 = arith.truncf %44 : vector<128x128xf32> to vector<128x128xbf16>
    %c640 = arith.constant 640 : index
    %c0_16 = arith.constant 0 : index
    %46 = vector.load %arg4[%c640, %c0_16] : memref<1152x128xbf16, #tpu.memory_space<vmem>>, vector<128x128xbf16>
    %cst_17 = arith.constant dense<0.000000e+00> : vector<128x128xf32>
    %47 = tpu.matmul %45, %46, %cst_17 {dimension_numbers = #tpu.dot_dimension_numbers<[1], [0], [0], [1], [0, 0, 1, 1], [], []>} : vector<128x128xbf16>, vector<128x128xbf16>, vector<128x128xf32> -> vector<128x128xf32>
    %48 = arith.addf %42, %47 : vector<128x128xf32>
    %c4_i32 = arith.constant 4 : i32
    %49 = arith.addi %1, %c4_i32 : i32
    %c0_18 = arith.constant 0 : index
    %50 = arith.index_cast %49 : i32 to index
    %c0_19 = arith.constant 0 : index
    %c0_20 = arith.constant 0 : index
    %51 = vector.load %arg3[%c0_18, %50, %c0_19, %c0_20] : memref<1x20x24x128xbf16, #tpu.memory_space<vmem>>, vector<1x8x24x128xbf16>
    %52 = vector.shape_cast %51 : vector<1x8x24x128xbf16> to vector<8x24x128xbf16>
    %53 = arith.extf %52 : vector<8x24x128xbf16> to vector<8x24x128xf32>
    %54 = vector.extract_strided_slice %53 {offsets = [0, 0, 0], sizes = [8, 16, 128], strides = [1, 1, 1]} : vector<8x24x128xf32> to vector<8x16x128xf32>
    %55 = vector.shape_cast %54 : vector<8x16x128xf32> to vector<128x128xf32>
    %56 = arith.truncf %55 : vector<128x128xf32> to vector<128x128xbf16>
    %c768 = arith.constant 768 : index
    %c0_21 = arith.constant 0 : index
    %57 = vector.load %arg4[%c768, %c0_21] : memref<1152x128xbf16, #tpu.memory_space<vmem>>, vector<128x128xbf16>
    %cst_22 = arith.constant dense<0.000000e+00> : vector<128x128xf32>
    %58 = tpu.matmul %56, %57, %cst_22 {dimension_numbers = #tpu.dot_dimension_numbers<[1], [0], [0], [1], [0, 0, 1, 1], [], []>} : vector<128x128xbf16>, vector<128x128xbf16>, vector<128x128xf32> -> vector<128x128xf32>
    %59 = arith.addf %48, %58 : vector<128x128xf32>
    %60 = vector.extract_strided_slice %53 {offsets = [0, 2, 0], sizes = [8, 16, 128], strides = [1, 1, 1]} : vector<8x24x128xf32> to vector<8x16x128xf32>
    %61 = vector.shape_cast %60 : vector<8x16x128xf32> to vector<128x128xf32>
    %62 = arith.truncf %61 : vector<128x128xf32> to vector<128x128xbf16>
    %c896 = arith.constant 896 : index
    %c0_23 = arith.constant 0 : index
    %63 = vector.load %arg4[%c896, %c0_23] : memref<1152x128xbf16, #tpu.memory_space<vmem>>, vector<128x128xbf16>
    %cst_24 = arith.constant dense<0.000000e+00> : vector<128x128xf32>
    %64 = tpu.matmul %62, %63, %cst_24 {dimension_numbers = #tpu.dot_dimension_numbers<[1], [0], [0], [1], [0, 0, 1, 1], [], []>} : vector<128x128xbf16>, vector<128x128xbf16>, vector<128x128xf32> -> vector<128x128xf32>
    %65 = arith.addf %59, %64 : vector<128x128xf32>
    %66 = vector.extract_strided_slice %53 {offsets = [0, 4, 0], sizes = [8, 16, 128], strides = [1, 1, 1]} : vector<8x24x128xf32> to vector<8x16x128xf32>
    %67 = vector.shape_cast %66 : vector<8x16x128xf32> to vector<128x128xf32>
    %68 = arith.truncf %67 : vector<128x128xf32> to vector<128x128xbf16>
    %c1024 = arith.constant 1024 : index
    %c0_25 = arith.constant 0 : index
    %69 = vector.load %arg4[%c1024, %c0_25] : memref<1152x128xbf16, #tpu.memory_space<vmem>>, vector<128x128xbf16>
    %cst_26 = arith.constant dense<0.000000e+00> : vector<128x128xf32>
    %70 = tpu.matmul %68, %69, %cst_26 {dimension_numbers = #tpu.dot_dimension_numbers<[1], [0], [0], [1], [0, 0, 1, 1], [], []>} : vector<128x128xbf16>, vector<128x128xbf16>, vector<128x128xf32> -> vector<128x128xf32>
    %71 = arith.addf %65, %70 : vector<128x128xf32>
    %c0_27 = arith.constant 0 : index
    %c0_28 = arith.constant 0 : index
    %72 = vector.load %arg5[%c0_27, %c0_28] : memref<1x128xf32, #tpu.memory_space<vmem>>, vector<1x128xf32>
    %73 = vector.broadcast %72 : vector<1x128xf32> to vector<128x128xf32>
    %74 = arith.addf %71, %73 : vector<128x128xf32>
    %cst_29 = arith.constant 0.000000e+00 : f32
    %75 = vector.broadcast %cst_29 : f32 to vector<128x128xf32>
    %76 = arith.maximumf %74, %75 : vector<128x128xf32>
    %77 = vector.shape_cast %76 : vector<128x128xf32> to vector<1x8x16x128xf32>
    %c0_30 = arith.constant 0 : index
    %c0_31 = arith.constant 0 : index
    %c0_32 = arith.constant 0 : index
    %c0_33 = arith.constant 0 : index
    %78 = vector.load %arg6[%c0_30, %c0_31, %c0_32, %c0_33] : memref<1x8x16x128xf32, #tpu.memory_space<vmem>>, vector<1x8x16x128xf32>
    tpu.vector_store %arg6[%c0_30, %c0_31, %c0_32, %c0_33], %77 {strides = array<i32>} : memref<1x8x16x128xf32, #tpu.memory_space<vmem>>, vector<1x8x16x128xf32>,
    return
  }
  func.func @transform_0(%arg0: i32, %arg1: i32, %arg2: i32) -> (i32, i32, i32, i32) {
    %c0_i32 = arith.constant 0 : i32
    %c0_i32_0 = arith.constant 0 : i32
    %c0_i32_1 = arith.constant 0 : i32
    %c0_i32_2 = arith.constant 0 : i32
    return %arg0, %c0_i32, %c0_i32_0, %c0_i32_1 : i32, i32, i32, i32
  }
  func.func @transform_1(%arg0: i32, %arg1: i32, %arg2: i32) -> (i32, i32) {
    %c0_i32 = arith.constant 0 : i32
    %c0_i32_0 = arith.constant 0 : i32
    return %c0_i32, %arg1 : i32, i32
  }
  func.func @transform_2(%arg0: i32, %arg1: i32, %arg2: i32) -> (i32, i32) {
    %c0_i32 = arith.constant 0 : i32
    %c0_i32_0 = arith.constant 0 : i32
    return %c0_i32, %arg1 : i32, i32
  }
  func.func @transform_3(%arg0: i32, %arg1: i32, %arg2: i32) -> (i32, i32, i32, i32) {
    %c0_i32 = arith.constant 0 : i32
    %c0_i32_0 = arith.constant 0 : i32
    return %arg0, %arg2, %c0_i32, %arg1 : i32, i32, i32, i32
  }
}

</mosaic_0001>

<llo_original>
// kernel: tpu_custom_call.1
$region0: #{tpu_custom_call.1}
  #allocation0 [shape = 'u32[]', space=smem, size = 0x4, offset = 0x4, fixed_abs, tag = 'smem constant byte address 0x4 - core index']
  #allocation1 [shape = 'u32[144,128]{1,0:T(1,128)}', space=vmem, size = 0x12000, scoped, tag = 'internal scratch']
  %s0 = inlined_call_operand.hbm [shape: bf16[2,20,24,128], index: 0, kind: input, shape index: {}]
  %s1 = inlined_call_operand.hbm [shape: bf16[1152,128], index: 1, kind: input, shape index: {}]
  %s2 = inlined_call_operand.vmem [shape: f32[1,128], index: 2, kind: input, shape index: {}]
  %s3 = inlined_call_operand.hbm [shape: f32[2,16,16,128], index: 3, kind: output, shape index: {}]
  %s4 = sld [smem:[#allocation0]]
  $region53: #{tpu_custom_call.1} parent=0
    _
  %s6 = ssub.s32 1, %s4
  %s7 = scalar_select 0, %s6, %s4
  $region1: #{tpu_custom_call.1} parent=0
    #allocation2 [shape = 'u8[122880]{0}', space=vmem, size = 0x1e000, scoped, tag = 'input window, operand 0, single buffered']
    #allocation3 [shape = 's32[2]{0}', space=sflag, size = 0x8, scoped, tag = 'scoped memory for tpu_custom_call.1']
    #allocation4 [shape = 's32[2]{0}', space=sflag, size = 0x8, scoped, tag = 'scoped memory for tpu_custom_call.1']
    #allocation5 [shape = 'u8[294912]{0}', space=vmem, size = 0x48000, scoped, tag = 'input window, operand 1, single buffered']
    #allocation6 [shape = 's32[1]{0}', space=sflag, size = 0x4, scoped, tag = 'scoped memory for tpu_custom_call.1']
    #allocation7 [shape = 'u8[131072]{0}', space=vmem, size = 0x20000, scoped, tag = 'output window, operand 0']
    %8 = vsyncpa [#allocation3], 0
    %9 = vsyncpa [#allocation6], 0
    %10 = vsyncpa [#allocation4], 0
    %s11 = scalar_lea.sflag [#allocation4], 1
    %12 = vsyncpa %s11, 0
    loop: start=0, step=1, limit=6
    $region2: #{tpu_custom_call.1} parent=1 // loop_pre_header
      _
    $region3: #{tpu_custom_call.1} parent=1 // loop_header
      %s14 = sphi 0, %s18
      %p15 = scmp.ge.s32.totalorder %s14, 6
      %s21 = sphi 0, %s40
      %s22 = sphi 0, %s36
      %s23 = sphi 0, %s32
      %s24 = sphi 0, %s21
      %s25 = sphi 0, %s22
      %s26 = sphi 0, %s23
      %s27 = sphi 0, %s24
      %s28 = sphi 0, %s25
      %s29 = sphi 0, %s26
      %s43 = sphi 0, %s45
      %s46 = sphi 0, %s43
      %s47 = sphi 0, %s46
      %s63 = sphi 0, %s47
      %s69 = sphi 0, %s71
      %s72 = sphi 0, %s69
      %s73 = sphi 0, %s72
      %s89 = sphi 0, %s73
      %s95 = sphi 0, %s97
      %s98 = sphi 0, %s95
      %s99 = sphi 0, %s98
      %s115 = sphi 0, %s99
      %s125 = sphi 0, %s127
      %s128 = sphi 0, %s125
      %s129 = sphi 0, %s128
      %s145 = sphi 0, %s129
    $region4: #{tpu_custom_call.1} parent=1 // loop_header_branch
      %17 = sbr.rel (%p15) target = $region8
    $region5: #{tpu_custom_call.1} parent=1 // loop_body
      %s19 = ssub.s32 %s14, 1
      %s20 = ssub.s32 %s14, 2
      %s30 = sadd.s32 1, %s23
      %p31 = scmp.ge.s32.totalorder %s30, 2
      %s32 = scalar_select %p31, 0, %s30
      %s33 = sadd.s32 1, %s22
      %s34 = scalar_select %p31, %s33, %s22
      %p35 = scmp.ge.s32.totalorder %s34, 1
      %s36 = scalar_select %p35, 0, %s34
      %s37 = sadd.s32 1, %s21
      %s38 = scalar_select %p35, %s37, %s21
      %p39 = scmp.ge.s32.totalorder %s38, 2
      %s40 = scalar_select %p39, 0, %s38
      %s41 = ssub.s32 %s21, %s40
      %p42 = scmp.eq.s32.totalorder %s41, 0
      %s44 = sadd.s32 %s43, 1
      %s45 = scalar_select %p42, %s43, %s44
      %p48 = pneg %p42
      %p49 = scmp.eq.s32.totalorder %s14, 3
      %p50 = por %p48, %p49
      %p51 = scmp.ne.s32.totalorder %s43, %s46
      %p52 = scmp.eq.s32.totalorder %s14, 0
      %p53 = por %p51, %p52
      %p54 = scmp.ne.s32.totalorder %s43, %s46
      %p55 = scmp.eq.s32.totalorder %s19, 3
      %p56 = por %p54, %p55
      %p57 = scmp.ne.s32.totalorder %s46, %s47
      %p58 = scmp.eq.s32.totalorder %s19, 0
      %p59 = por %p57, %p58
      %p60 = scmp.ne.s32.totalorder %s46, %s47
      %p61 = scmp.eq.s32.totalorder %s20, 3
      %p62 = por %p60, %p61
      %p64 = scmp.ne.s32.totalorder %s47, %s63
      %p65 = scmp.eq.s32.totalorder %s20, 0
      %p66 = por %p64, %p65
      %s67 = ssub.s32 %s22, %s36
      %p68 = scmp.eq.s32.totalorder %s67, 0
      %s70 = sadd.s32 %s69, 1
      %s71 = scalar_select %p68, %s69, %s70
      %p74 = pneg %p68
      %p75 = scmp.eq.s32.totalorder %s14, 3
      %p76 = por %p74, %p75
      %p77 = scmp.ne.s32.totalorder %s69, %s72
      %p78 = scmp.eq.s32.totalorder %s14, 0
      %p79 = por %p77, %p78
      %p80 = scmp.ne.s32.totalorder %s69, %s72
      %p81 = scmp.eq.s32.totalorder %s19, 3
      %p82 = por %p80, %p81
      %p83 = scmp.ne.s32.totalorder %s72, %s73
      %p84 = scmp.eq.s32.totalorder %s19, 0
      %p85 = por %p83, %p84
      %p86 = scmp.ne.s32.totalorder %s72, %s73
      %p87 = scmp.eq.s32.totalorder %s20, 3
      %p88 = por %p86, %p87
      %p90 = scmp.ne.s32.totalorder %s73, %s89
      %p91 = scmp.eq.s32.totalorder %s20, 0
      %p92 = por %p90, %p91
      %s93 = ssub.s32 %s22, %s36
      %p94 = scmp.eq.s32.totalorder %s93, 0
      %s96 = sadd.s32 %s95, 1
      %s97 = scalar_select %p94, %s95, %s96
      %p100 = pneg %p94
      %p101 = scmp.eq.s32.totalorder %s14, 3
      %p102 = por %p100, %p101
      %p103 = scmp.ne.s32.totalorder %s95, %s98
      %p104 = scmp.eq.s32.totalorder %s14, 0
      %p105 = por %p103, %p104
      %p106 = scmp.ne.s32.totalorder %s95, %s98
      %p107 = scmp.eq.s32.totalorder %s19, 3
      %p108 = por %p106, %p107
      %p109 = scmp.ne.s32.totalorder %s98, %s99
      %p110 = scmp.eq.s32.totalorder %s19, 0
      %p111 = por %p109, %p110
      %p112 = scmp.ne.s32.totalorder %s98, %s99
      %p113 = scmp.eq.s32.totalorder %s20, 3
      %p114 = por %p112, %p113
      %p116 = scmp.ne.s32.totalorder %s99, %s115
      %p117 = scmp.eq.s32.totalorder %s20, 0
      %p118 = por %p116, %p117
      %s119 = ssub.s32 %s21, %s40
      %s120 = ssub.s32 %s23, %s32
      %s121 = sor.u32 %s119, %s120
      %s122 = ssub.s32 %s22, %s36
      %s123 = sor.u32 %s121, %s122
      %p124 = scmp.eq.s32.totalorder %s123, 0
      %s126 = sadd.s32 %s125, 1
      %s127 = scalar_select %p124, %s125, %s126
      %p130 = pneg %p124
      %p131 = scmp.eq.s32.totalorder %s14, 3
      %p132 = por %p130, %p131
      %p133 = scmp.ne.s32.totalorder %s125, %s128
      %p134 = scmp.eq.s32.totalorder %s14, 0
      %p135 = por %p133, %p134
      %p136 = scmp.ne.s32.totalorder %s125, %s128
      %p137 = scmp.eq.s32.totalorder %s19, 3
      %p138 = por %p136, %p137
      %p139 = scmp.ne.s32.totalorder %s128, %s129
      %p140 = scmp.eq.s32.totalorder %s19, 0
      %p141 = por %p139, %p140
      %p142 = scmp.ne.s32.totalorder %s128, %s129
      %p143 = scmp.eq.s32.totalorder %s20, 3
      %p144 = por %p142, %p143
      %p146 = scmp.ne.s32.totalorder %s129, %s145
      %p147 = scmp.eq.s32.totalorder %s20, 0
      %p148 = por %p146, %p147
      %p149 = scmp.le.s32.totalorder 1, %s14
      %p150 = scmp.lt.s32.totalorder %s14, 5
      %p151 = pnand %p149, %p150
      %p152 = pneg %p151
      // Predicated region
      $region9: #{tpu_custom_call.1} parent=5 // pred_check
        _
      $region10: #{tpu_custom_call.1} parent=5 // pred_check_branch
        %154 = sbr.rel (%p151) target = $region12
      $region11: #{tpu_custom_call.1} parent=5 // pred_region
        %s155 = ssub.s32 %s14, 1
        // Predicated region
        $region13: #{tpu_custom_call.1} parent=11 // pred_check
          %p156 = pneg %p59
        $region14: #{tpu_custom_call.1} parent=11 // pred_check_branch
          %158 = sbr.rel (%p156) target = $region16
        $region15: #{tpu_custom_call.1} parent=11 // pred_region
          %s160 = ssub.s32 3840, 3840
          %161 = vsyncadd [#allocation3], %s160
          %s162 = smul.addr %s24, 60
          %s163 = smul.addr %s162, 64
          %s164 = scalar_lea.hbm %s0, %s163
          %s165 = sshll.u32 [#allocation2], 4
          %s166 = int_to_ptr.vmem [resolvable:$true] %s165
          %171 = dma.hbm_to_vmem [thread:$0]  %s164, 3840, %s166, [#allocation3], 64, 64, 4
        $region16: #{tpu_custom_call.1} parent=11 // pred_fallthru
          _
        // Predicated region
        $region17: #{tpu_custom_call.1} parent=11 // pred_check
          %p172 = pneg %p85
        $region18: #{tpu_custom_call.1} parent=11 // pred_check_branch
          %174 = sbr.rel (%p172) target = $region20
        $region19: #{tpu_custom_call.1} parent=11 // pred_region
          %s176 = ssub.s32 9216, 9216
          %177 = vsyncadd [#allocation6], %s176
          %s178 = smul.addr %s25, 64
          %s179 = scalar_lea.hbm %s1, %s178
          %s180 = sshll.u32 [#allocation5], 4
          %s181 = int_to_ptr.vmem [resolvable:$true] %s180
          %186 = dma.hbm_to_vmem [thread:$0]  %s179, 9216, %s181, [#allocation6], 64, 64, 4
        $region20: #{tpu_custom_call.1} parent=11 // pred_fallthru
          _
        // Predicated region
        $region21: #{tpu_custom_call.1} parent=11 // pred_check
          %p187 = pneg %p111
        $region22: #{tpu_custom_call.1} parent=11 // pred_check_branch
          %189 = sbr.rel (%p187) target = $region24
        $region23: #{tpu_custom_call.1} parent=11 // pred_region
          %p190 = scmp.lt.s32.totalorder %s25, 0
          %s191 = scalar_select %p190, %s25, 0
          %s192 = scalar_lea.vmem %s2, %s191
        $region24: #{tpu_custom_call.1} parent=11 // pred_fallthru
          _
      $region12: #{tpu_custom_call.1} parent=5 // pred_fallthru
        _
      %p193 = scmp.lt.s32.totalorder %s14, 4
      // Predicated region
      $region25: #{tpu_custom_call.1} parent=5 // pred_check
        %p194 = pneg %p193
      $region26: #{tpu_custom_call.1} parent=5 // pred_check_branch
        %196 = sbr.rel (%p194) target = $region28
      $region27: #{tpu_custom_call.1} parent=5 // pred_region
        _
      $region28: #{tpu_custom_call.1} parent=5 // pred_fallthru
        _
      %p197 = scmp.le.s32.totalorder 1, %s14
      %p198 = scmp.lt.s32.totalorder %s14, 5
      %p199 = pnand %p197, %p198
      %p200 = pneg %p199
      // Predicated region
      $region29: #{tpu_custom_call.1} parent=5 // pred_check
        _
      $region30: #{tpu_custom_call.1} parent=5 // pred_check_branch
        %202 = sbr.rel (%p199) target = $region32
      $region31: #{tpu_custom_call.1} parent=5 // pred_region
        %s203 = ssub.s32 %s14, 1
        // Predicated region
        $region33: #{tpu_custom_call.1} parent=31 // pred_check
          %p204 = pneg %p59
        $region34: #{tpu_custom_call.1} parent=31 // pred_check_branch
          %206 = sbr.rel (%p204) target = $region36
        $region35: #{tpu_custom_call.1} parent=31 // pred_region
          %207 = dma.done [#allocation3], 3840
        $region36: #{tpu_custom_call.1} parent=31 // pred_fallthru
          _
        // Predicated region
        $region37: #{tpu_custom_call.1} parent=31 // pred_check
          %p208 = pneg %p85
        $region38: #{tpu_custom_call.1} parent=31 // pred_check_branch
          %210 = sbr.rel (%p208) target = $region40
        $region39: #{tpu_custom_call.1} parent=31 // pred_region
          %211 = dma.done [#allocation6], 9216
        $region40: #{tpu_custom_call.1} parent=31 // pred_fallthru
          _
        %p212 = pneg %p59
        %p213 = pneg %p56
        %p214 = pneg %p85
        %p215 = pneg %p82
        %p216 = scmp.lt.s32.totalorder %s25, 0
        %s217 = scalar_select %p216, %s25, 0
        %s218 = scalar_lea.vmem %s2, %s217
        %p219 = pneg %p111
        %p220 = pneg %p108
        %p221 = pneg %p141
        %p222 = pneg %p138
        %s223 = sand.u32 %s128, 1
        %s224 = scalar_lea.sflag [#allocation4], %s223
        %s225 = sand.u32 %s128, 1
        %s226 = smul.addr %s225, 128
        %s227 = scalar_lea.vmem [#allocation7], %s226
        %p228 = scmp.lt.s32.totalorder %s25, 0
        %s229 = scalar_select %p228, %s25, 0
        %s230 = scalar_lea.vmem %s2, %s229
        %s231 = smul.u32 8, %s26
        %s233 = smul.u32 %s26, 8
        %s234 = smul.u32 %s233, 3
        %s235 = smul.addr %s234, 4
        %s236 = scalar_lea.vmem [#allocation2], %s235
        %v237 = vld [vmem:[%s236] sm:$0xf]
        %v238 = vld [vmem:[%s236 + $0x4] sm:$0xf]
        %v239 = vld [vmem:[%s236 + $0x8] sm:$0xf]
        %v240 = vld [vmem:[%s236 + $0xc] sm:$0xf]
        %v241 = vld [vmem:[%s236 + $0x10] sm:$0xf]
        %v242 = vld [vmem:[%s236 + $0x14] sm:$0xf]
        %v243 = vld [vmem:[%s236 + $0x18] sm:$0xf]
        %v244 = vld [vmem:[%s236 + $0x1c] sm:$0xf]
        %v245 = vld [vmem:[%s236 + $0x20] sm:$0xf]
        %v246 = vld [vmem:[%s236 + $0x24] sm:$0xf]
        %v247 = vld [vmem:[%s236 + $0x28] sm:$0xf]
        %v248 = vld [vmem:[%s236 + $0x2c] sm:$0xf]
        %v249 = vld [vmem:[%s236 + $0x30] sm:$0xf]
        %v250 = vld [vmem:[%s236 + $0x34] sm:$0xf]
        %v251 = vld [vmem:[%s236 + $0x38] sm:$0xf]
        %v252 = vld [vmem:[%s236 + $0x3c] sm:$0xf]
        %v253 = vld [vmem:[%s236 + $0x40] sm:$0xf]
        %v254 = vld [vmem:[%s236 + $0x44] sm:$0xf]
        %v255 = vld [vmem:[%s236 + $0x48] sm:$0xf]
        %v256 = vld [vmem:[%s236 + $0x4c] sm:$0xf]
        %v257 = vld [vmem:[%s236 + $0x50] sm:$0xf]
        %v258 = vld [vmem:[%s236 + $0x54] sm:$0xf]
        %v259 = vld [vmem:[%s236 + $0x58] sm:$0xf]
        %v260 = vld [vmem:[%s236 + $0x5c] sm:$0xf]
        %v261 = vunpack.c.l.bf16 %v237
        %v262 = vunpack.c.l.bf16 %v238
        %v263 = vunpack.c.l.bf16 %v239
        %v264 = vunpack.c.l.bf16 %v240
        %v265 = vunpack.c.l.bf16 %v241
        %v266 = vunpack.c.l.bf16 %v242
        %v267 = vunpack.c.l.bf16 %v243
        %v268 = vunpack.c.l.bf16 %v244
        %v269 = vunpack.c.l.bf16 %v245
        %v270 = vunpack.c.l.bf16 %v246
        %v271 = vunpack.c.l.bf16 %v247
        %v272 = vunpack.c.l.bf16 %v248
        %v273 = vunpack.c.l.bf16 %v249
        %v274 = vunpack.c.l.bf16 %v250
        %v275 = vunpack.c.l.bf16 %v251
        %v276 = vunpack.c.l.bf16 %v252
        %v277 = vunpack.c.l.bf16 %v253
        %v278 = vunpack.c.l.bf16 %v254
        %v279 = vunpack.c.l.bf16 %v255
        %v280 = vunpack.c.l.bf16 %v256
        %v281 = vunpack.c.l.bf16 %v257
        %v282 = vunpack.c.l.bf16 %v258
        %v283 = vunpack.c.l.bf16 %v259
        %v284 = vunpack.c.l.bf16 %v260
        %v285 = vpack.c.bf16 %v262, %v261
        %v286 = vpack.c.bf16 %v265, %v264
        %v287 = vpack.c.bf16 %v268, %v267
        %v288 = vpack.c.bf16 %v271, %v270
        %v289 = vpack.c.bf16 %v274, %v273
        %v290 = vpack.c.bf16 %v277, %v276
        %v291 = vpack.c.bf16 %v280, %v279
        %v292 = vpack.c.bf16 %v283, %v282
        %v293 = vld [vmem:[#allocation5] sm:$0xf]
        %v294 = vld [vmem:[#allocation5 + $0x4] sm:$0xf]
        %v295 = vld [vmem:[#allocation5 + $0x8] sm:$0xf]
        %v296 = vld [vmem:[#allocation5 + $0xc] sm:$0xf]
        %v297 = vld [vmem:[#allocation5 + $0x10] sm:$0xf]
        %v298 = vld [vmem:[#allocation5 + $0x14] sm:$0xf]
        %v299 = vld [vmem:[#allocation5 + $0x18] sm:$0xf]
        %v300 = vld [vmem:[#allocation5 + $0x1c] sm:$0xf]
        %v301 = vld [vmem:[#allocation5 + $0x20] sm:$0xf]
        %v302 = vld [vmem:[#allocation5 + $0x24] sm:$0xf]
        %v303 = vld [vmem:[#allocation5 + $0x28] sm:$0xf]
        %v304 = vld [vmem:[#allocation5 + $0x2c] sm:$0xf]
        %v305 = vld [vmem:[#allocation5 + $0x30] sm:$0xf]
        %v306 = vld [vmem:[#allocation5 + $0x34] sm:$0xf]
        %v307 = vld [vmem:[#allocation5 + $0x38] sm:$0xf]
        %v308 = vld [vmem:[#allocation5 + $0x3c] sm:$0xf]
        %v309 = vrot.slane %v261, 2
        %v310 = vrot.slane %v264, 2
        %v311 = vrot.slane %v267, 2
        %v312 = vrot.slane %v270, 2
        %v313 = vrot.slane %v273, 2
        %v314 = vrot.slane %v276, 2
        %v315 = vrot.slane %v279, 2
        %v316 = vrot.slane %v282, 2
        %v317 = vrot.slane %v262, 2
        %v318 = vrot.slane %v265, 2
        %v319 = vrot.slane %v268, 2
        %v320 = vrot.slane %v271, 2
        %v321 = vrot.slane %v274, 2
        %v322 = vrot.slane %v277, 2
        %v323 = vrot.slane %v280, 2
        %v324 = vrot.slane %v283, 2
        %v325 = vrot.slane %v263, 2
        %v326 = vrot.slane %v266, 2
        %v327 = vrot.slane %v269, 2
        %v328 = vrot.slane %v272, 2
        %v329 = vrot.slane %v275, 2
        %v330 = vrot.slane %v278, 2
        %v331 = vrot.slane %v281, 2
        %v332 = vrot.slane %v284, 2
        %v333 = vlaneseq
        %v334 = vshrl.u32 %v333, 7
        %vm335 = vcmp.lt.s32.totalorder %v334, 6
        %v336 = vsel %vm335, %v317, %v325
        %v337 = vsel %vm335, %v318, %v326
        %v338 = vsel %vm335, %v319, %v327
        %v339 = vsel %vm335, %v320, %v328
        %v340 = vsel %vm335, %v321, %v329
        %v341 = vsel %vm335, %v322, %v330
        %v342 = vsel %vm335, %v323, %v331
        %v343 = vsel %vm335, %v324, %v332
        %v344 = vsel %vm335, %v309, %v317
        %v345 = vsel %vm335, %v310, %v318
        %v346 = vsel %vm335, %v311, %v319
        %v347 = vsel %vm335, %v312, %v320
        %v348 = vsel %vm335, %v313, %v321
        %v349 = vsel %vm335, %v314, %v322
        %v350 = vsel %vm335, %v315, %v323
        %v351 = vsel %vm335, %v316, %v324
        %v352 = vpack.c.bf16 %v336, %v344
        %v353 = vpack.c.bf16 %v337, %v345
        %v354 = vpack.c.bf16 %v338, %v346
        %v355 = vpack.c.bf16 %v339, %v347
        %v356 = vpack.c.bf16 %v340, %v348
        %v357 = vpack.c.bf16 %v341, %v349
        %v358 = vpack.c.bf16 %v342, %v350
        %v359 = vpack.c.bf16 %v343, %v351
        %v360 = vld [vmem:[#allocation5 + $0x40] sm:$0xf]
        %v361 = vld [vmem:[#allocation5 + $0x44] sm:$0xf]
        %v362 = vld [vmem:[#allocation5 + $0x48] sm:$0xf]
        %v363 = vld [vmem:[#allocation5 + $0x4c] sm:$0xf]
        %v364 = vld [vmem:[#allocation5 + $0x50] sm:$0xf]
        %v365 = vld [vmem:[#allocation5 + $0x54] sm:$0xf]
        %v366 = vld [vmem:[#allocation5 + $0x58] sm:$0xf]
        %v367 = vld [vmem:[#allocation5 + $0x5c] sm:$0xf]
        %v368 = vld [vmem:[#allocation5 + $0x60] sm:$0xf]
        %v369 = vld [vmem:[#allocation5 + $0x64] sm:$0xf]
        %v370 = vld [vmem:[#allocation5 + $0x68] sm:$0xf]
        %v371 = vld [vmem:[#allocation5 + $0x6c] sm:$0xf]
        %v372 = vld [vmem:[#allocation5 + $0x70] sm:$0xf]
        %v373 = vld [vmem:[#allocation5 + $0x74] sm:$0xf]
        %v374 = vld [vmem:[#allocation5 + $0x78] sm:$0xf]
        %v375 = vld [vmem:[#allocation5 + $0x7c] sm:$0xf]
        %v392 = vunpack.c.l.b16 %v360
        %v393 = vunpack.c.l.b16 %v361
        %v394 = vunpack.c.l.b16 %v362
        %v395 = vunpack.c.l.b16 %v363
        %v396 = vunpack.c.l.b16 %v364
        %v397 = vunpack.c.l.b16 %v365
        %v398 = vunpack.c.l.b16 %v366
        %v399 = vunpack.c.l.b16 %v367
        %v400 = vunpack.c.l.b16 %v368
        %v401 = vunpack.c.l.b16 %v369
        %v402 = vunpack.c.l.b16 %v370
        %v403 = vunpack.c.l.b16 %v371
        %v404 = vunpack.c.l.b16 %v372
        %v405 = vunpack.c.l.b16 %v373
        %v406 = vunpack.c.l.b16 %v374
        %v407 = vunpack.c.l.b16 %v375
        %v408 = vpack.c.b16 %v393, %v392
        %v409 = vpack.c.b16 %v395, %v394
        %v410 = vpack.c.b16 %v397, %v396
        %v411 = vpack.c.b16 %v399, %v398
        %v412 = vpack.c.b16 %v401, %v400
        %v413 = vpack.c.b16 %v403, %v402
        %v414 = vpack.c.b16 %v405, %v404
        %v415 = vpack.c.b16 %v407, %v406
        %424 = vmatprep.subr.bf16.mxu0 0
        %425 = vmatpush1.bf16.msra.mxu0 %v415
        %426 = vmatprep.subr.bf16.mxu0 0
        %427 = vmatpush1.bf16.msra.mxu0 %v414
        %428 = vmatprep.subr.bf16.mxu0 0
        %429 = vmatpush1.bf16.msra.mxu0 %v413
        %430 = vmatprep.subr.bf16.mxu0 0
        %431 = vmatpush1.bf16.msra.mxu0 %v412
        %432 = vmatprep.subr.bf16.mxu0 0
        %433 = vmatpush1.bf16.msra.mxu0 %v411
        %434 = vmatprep.subr.bf16.mxu0 0
        %435 = vmatpush1.bf16.msra.mxu0 %v410
        %436 = vmatprep.subr.bf16.mxu0 0
        %437 = vmatpush1.bf16.msra.mxu0 %v409
        %438 = vmatprep.subr.bf16.mxu0 0
        %439 = vmatpush1.bf16.msra.mxu0 %v408
        %440 = vmatprep.subr.bf16.mxu0 0
        %441 = vmatpush2.bf16.msra.mxu0 0
        %442 = vmatprep.subr.bf16.mxu0 0
        %443 = vmatpush2.bf16.msra.mxu0 0
        %444 = vmatprep.subr.bf16.mxu0 0
        %445 = vmatpush2.bf16.msra.mxu0 0
        %446 = vmatprep.subr.bf16.mxu0 0
        %447 = vmatpush2.bf16.msra.mxu0 0
        %448 = vmatprep.subr.bf16.mxu0 0
        %449 = vmatpush2.bf16.msra.mxu0 0
        %450 = vmatprep.subr.bf16.mxu0 0
        %451 = vmatpush2.bf16.msra.mxu0 0
        %452 = vmatprep.subr.bf16.mxu0 0
        %453 = vmatpush2.bf16.msra.mxu0 0
        %454 = vmatprep.subr.bf16.mxu0 0
        %455 = vmatpush2.bf16.msra.mxu0 0
        %456 = vmatprep.mubr.bf16.mxu0 0
        %457 = vmatmul.mubr.bf16.gmra.mxu0 %v352
        %v458 = vpop.f32.mrf.mxu0
        %v459 = vadd.f32 0.0, %v458
        %v460 = vpop.f32.mrf.mxu0
        %v461 = vpop.f32.mrf.mxu0
        %v462 = vadd.f32 0.0, %v461
        %v463 = vpop.f32.mrf.mxu0
        %464 = vmatprep.mubr.bf16.mxu0 0
        %465 = vmatmul.mubr.bf16.gmra.mxu0 %v353
        %v466 = vpop.f32.mrf.mxu0
        %v467 = vadd.f32 0.0, %v466
        %v468 = vpop.f32.mrf.mxu0
        %v469 = vpop.f32.mrf.mxu0
        %v470 = vadd.f32 0.0, %v469
        %v471 = vpop.f32.mrf.mxu0
        %472 = vmatprep.mubr.bf16.mxu0 0
        %473 = vmatmul.mubr.bf16.gmra.mxu0 %v354
        %v474 = vpop.f32.mrf.mxu0
        %v475 = vadd.f32 0.0, %v474
        %v476 = vpop.f32.mrf.mxu0
        %v477 = vpop.f32.mrf.mxu0
        %v478 = vadd.f32 0.0, %v477
        %v479 = vpop.f32.mrf.mxu0
        %480 = vmatprep.mubr.bf16.mxu0 0
        %481 = vmatmul.mubr.bf16.gmra.mxu0 %v355
        %v482 = vpop.f32.mrf.mxu0
        %v483 = vadd.f32 0.0, %v482
        %v484 = vpop.f32.mrf.mxu0
        %v485 = vpop.f32.mrf.mxu0
        %v486 = vadd.f32 0.0, %v485
        %v487 = vpop.f32.mrf.mxu0
        %488 = vmatprep.mubr.bf16.mxu0 0
        %489 = vmatmul.mubr.bf16.gmra.mxu0 %v356
        %v490 = vpop.f32.mrf.mxu0
        %v491 = vadd.f32 0.0, %v490
        %v492 = vpop.f32.mrf.mxu0
        %v493 = vpop.f32.mrf.mxu0
        %v494 = vadd.f32 0.0, %v493
        %v495 = vpop.f32.mrf.mxu0
        %496 = vmatprep.mubr.bf16.mxu0 0
        %497 = vmatmul.mubr.bf16.gmra.mxu0 %v357
        %v498 = vpop.f32.mrf.mxu0
        %v499 = vadd.f32 0.0, %v498
        %v500 = vpop.f32.mrf.mxu0
        %v501 = vpop.f32.mrf.mxu0
        %v502 = vadd.f32 0.0, %v501
        %v503 = vpop.f32.mrf.mxu0
        %504 = vmatprep.mubr.bf16.mxu0 0
        %505 = vmatmul.mubr.bf16.gmra.mxu0 %v358
        %v506 = vpop.f32.mrf.mxu0
        %v507 = vadd.f32 0.0, %v506
        %v508 = vpop.f32.mrf.mxu0
        %v509 = vpop.f32.mrf.mxu0
        %v510 = vadd.f32 0.0, %v509
        %v511 = vpop.f32.mrf.mxu0
        %512 = vmatprep.mubr.bf16.mxu0 0
        %513 = vmatmul.mubr.bf16.gmra.mxu0 %v359
        %v514 = vpop.f32.mrf.mxu0
        %v515 = vadd.f32 0.0, %v514
        %v516 = vpop.f32.mrf.mxu0
        %v517 = vpop.f32.mrf.mxu0
        %v518 = vadd.f32 0.0, %v517
        %v519 = vpop.f32.mrf.mxu0
        %520 = vdwg.mxu0
        %v537 = vunpack.c.l.b16 %v293
        %v538 = vunpack.c.l.b16 %v294
        %v539 = vunpack.c.l.b16 %v295
        %v540 = vunpack.c.l.b16 %v296
        %v541 = vunpack.c.l.b16 %v297
        %v542 = vunpack.c.l.b16 %v298
        %v543 = vunpack.c.l.b16 %v299
        %v544 = vunpack.c.l.b16 %v300
        %v545 = vunpack.c.l.b16 %v301
        %v546 = vunpack.c.l.b16 %v302
        %v547 = vunpack.c.l.b16 %v303
        %v548 = vunpack.c.l.b16 %v304
        %v549 = vunpack.c.l.b16 %v305
        %v550 = vunpack.c.l.b16 %v306
        %v551 = vunpack.c.l.b16 %v307
        %v552 = vunpack.c.l.b16 %v308
        %v553 = vpack.c.b16 %v538, %v537
        %v554 = vpack.c.b16 %v540, %v539
        %v555 = vpack.c.b16 %v542, %v541
        %v556 = vpack.c.b16 %v544, %v543
        %v557 = vpack.c.b16 %v546, %v545
        %v558 = vpack.c.b16 %v548, %v547
        %v559 = vpack.c.b16 %v550, %v549
        %v560 = vpack.c.b16 %v552, %v551
        %569 = vmatprep.subr.bf16.mxu0 0
        %570 = vmatpush1.bf16.msra.mxu0 %v560
        %571 = vmatprep.subr.bf16.mxu0 0
        %572 = vmatpush1.bf16.msra.mxu0 %v559
        %573 = vmatprep.subr.bf16.mxu0 0
        %574 = vmatpush1.bf16.msra.mxu0 %v558
        %575 = vmatprep.subr.bf16.mxu0 0
        %576 = vmatpush1.bf16.msra.mxu0 %v557
        %577 = vmatprep.subr.bf16.mxu0 0
        %578 = vmatpush1.bf16.msra.mxu0 %v556
        %579 = vmatprep.subr.bf16.mxu0 0
        %580 = vmatpush1.bf16.msra.mxu0 %v555
        %581 = vmatprep.subr.bf16.mxu0 0
        %582 = vmatpush1.bf16.msra.mxu0 %v554
        %583 = vmatprep.subr.bf16.mxu0 0
        %584 = vmatpush1.bf16.msra.mxu0 %v553
        %585 = vmatprep.subr.bf16.mxu0 0
        %586 = vmatpush2.bf16.msra.mxu0 0
        %587 = vmatprep.subr.bf16.mxu0 0
        %588 = vmatpush2.bf16.msra.mxu0 0
        %589 = vmatprep.subr.bf16.mxu0 0
        %590 = vmatpush2.bf16.msra.mxu0 0
        %591 = vmatprep.subr.bf16.mxu0 0
        %592 = vmatpush2.bf16.msra.mxu0 0
        %593 = vmatprep.subr.bf16.mxu0 0
        %594 = vmatpush2.bf16.msra.mxu0 0
        %595 = vmatprep.subr.bf16.mxu0 0
        %596 = vmatpush2.bf16.msra.mxu0 0
        %597 = vmatprep.subr.bf16.mxu0 0
        %598 = vmatpush2.bf16.msra.mxu0 0
        %599 = vmatprep.subr.bf16.mxu0 0
        %600 = vmatpush2.bf16.msra.mxu0 0
        %601 = vmatprep.mubr.bf16.mxu0 0
        %602 = vmatmul.mubr.bf16.gmra.mxu0 %v285
        %v603 = vpop.f32.mrf.mxu0
        %v604 = vadd.f32 %v459, %v603
        %v605 = vpop.f32.mrf.mxu0
        %v606 = vpop.f32.mrf.mxu0
        %v607 = vadd.f32 %v462, %v606
        %v608 = vpop.f32.mrf.mxu0
        %609 = vmatprep.mubr.bf16.mxu0 0
        %610 = vmatmul.mubr.bf16.gmra.mxu0 %v286
        %v611 = vpop.f32.mrf.mxu0
        %v612 = vadd.f32 %v467, %v611
        %v613 = vpop.f32.mrf.mxu0
        %v614 = vpop.f32.mrf.mxu0
        %v615 = vadd.f32 %v470, %v614
        %v616 = vpop.f32.mrf.mxu0
        %617 = vmatprep.mubr.bf16.mxu0 0
        %618 = vmatmul.mubr.bf16.gmra.mxu0 %v287
        %v619 = vpop.f32.mrf.mxu0
        %v620 = vadd.f32 %v475, %v619
        %v621 = vpop.f32.mrf.mxu0
        %v622 = vpop.f32.mrf.mxu0
        %v623 = vadd.f32 %v478, %v622
        %v624 = vpop.f32.mrf.mxu0
        %625 = vmatprep.mubr.bf16.mxu0 0
        %626 = vmatmul.mubr.bf16.gmra.mxu0 %v288
        %v627 = vpop.f32.mrf.mxu0
        %v628 = vadd.f32 %v483, %v627
        %v629 = vpop.f32.mrf.mxu0
        %v630 = vpop.f32.mrf.mxu0
        %v631 = vadd.f32 %v486, %v630
        %v632 = vpop.f32.mrf.mxu0
        %633 = vmatprep.mubr.bf16.mxu0 0
        %634 = vmatmul.mubr.bf16.gmra.mxu0 %v289
        %v635 = vpop.f32.mrf.mxu0
        %v636 = vadd.f32 %v491, %v635
        %v637 = vpop.f32.mrf.mxu0
        %v638 = vpop.f32.mrf.mxu0
        %v639 = vadd.f32 %v494, %v638
        %v640 = vpop.f32.mrf.mxu0
        %641 = vmatprep.mubr.bf16.mxu0 0
        %642 = vmatmul.mubr.bf16.gmra.mxu0 %v290
        %v643 = vpop.f32.mrf.mxu0
        %v644 = vadd.f32 %v499, %v643
        %v645 = vpop.f32.mrf.mxu0
        %v646 = vpop.f32.mrf.mxu0
        %v647 = vadd.f32 %v502, %v646
        %v648 = vpop.f32.mrf.mxu0
        %649 = vmatprep.mubr.bf16.mxu0 0
        %650 = vmatmul.mubr.bf16.gmra.mxu0 %v291
        %v651 = vpop.f32.mrf.mxu0
        %v652 = vadd.f32 %v507, %v651
        %v653 = vpop.f32.mrf.mxu0
        %v654 = vpop.f32.mrf.mxu0
        %v655 = vadd.f32 %v510, %v654
        %v656 = vpop.f32.mrf.mxu0
        %657 = vmatprep.mubr.bf16.mxu0 0
        %658 = vmatmul.mubr.bf16.gmra.mxu0 %v292
        %v659 = vpop.f32.mrf.mxu0
        %v660 = vadd.f32 %v515, %v659
        %v661 = vpop.f32.mrf.mxu0
        %v662 = vpop.f32.mrf.mxu0
        %v663 = vadd.f32 %v518, %v662
        %v664 = vpop.f32.mrf.mxu0
        %665 = vdwg.mxu0
        %v666 = vrot.slane %v261, 4
        %v667 = vrot.slane %v264, 4
        %v668 = vrot.slane %v267, 4
        %v669 = vrot.slane %v270, 4
        %v670 = vrot.slane %v273, 4
        %v671 = vrot.slane %v276, 4
        %v672 = vrot.slane %v279, 4
        %v673 = vrot.slane %v282, 4
        %v674 = vrot.slane %v262, 4
        %v675 = vrot.slane %v265, 4
        %v676 = vrot.slane %v268, 4
        %v677 = vrot.slane %v271, 4
        %v678 = vrot.slane %v274, 4
        %v679 = vrot.slane %v277, 4
        %v680 = vrot.slane %v280, 4
        %v681 = vrot.slane %v283, 4
        %v682 = vrot.slane %v263, 4
        %v683 = vrot.slane %v266, 4
        %v684 = vrot.slane %v269, 4
        %v685 = vrot.slane %v272, 4
        %v686 = vrot.slane %v275, 4
        %v687 = vrot.slane %v278, 4
        %v688 = vrot.slane %v281, 4
        %v689 = vrot.slane %v284, 4
        %vm690 = vcmp.lt.s32.totalorder %v334, 4
        %v691 = vsel %vm690, %v674, %v682
        %v692 = vsel %vm690, %v675, %v683
        %v693 = vsel %vm690, %v676, %v684
        %v694 = vsel %vm690, %v677, %v685
        %v695 = vsel %vm690, %v678, %v686
        %v696 = vsel %vm690, %v679, %v687
        %v697 = vsel %vm690, %v680, %v688
        %v698 = vsel %vm690, %v681, %v689
        %v699 = vsel %vm690, %v666, %v674
        %v700 = vsel %vm690, %v667, %v675
        %v701 = vsel %vm690, %v668, %v676
        %v702 = vsel %vm690, %v669, %v677
        %v703 = vsel %vm690, %v670, %v678
        %v704 = vsel %vm690, %v671, %v679
        %v705 = vsel %vm690, %v672, %v680
        %v706 = vsel %vm690, %v673, %v681
        %v707 = vpack.c.bf16 %v691, %v699
        %v708 = vpack.c.bf16 %v692, %v700
        %v709 = vpack.c.bf16 %v693, %v701
        %v710 = vpack.c.bf16 %v694, %v702
        %v711 = vpack.c.bf16 %v695, %v703
        %v712 = vpack.c.bf16 %v696, %v704
        %v713 = vpack.c.bf16 %v697, %v705
        %v714 = vpack.c.bf16 %v698, %v706
        %v715 = vld [vmem:[#allocation5 + $0x80] sm:$0xf]
        %v716 = vld [vmem:[#allocation5 + $0x84] sm:$0xf]
        %v717 = vld [vmem:[#allocation5 + $0x88] sm:$0xf]
        %v718 = vld [vmem:[#allocation5 + $0x8c] sm:$0xf]
        %v719 = vld [vmem:[#allocation5 + $0x90] sm:$0xf]
        %v720 = vld [vmem:[#allocation5 + $0x94] sm:$0xf]
        %v721 = vld [vmem:[#allocation5 + $0x98] sm:$0xf]
        %v722 = vld [vmem:[#allocation5 + $0x9c] sm:$0xf]
        %v723 = vld [vmem:[#allocation5 + $0xa0] sm:$0xf]
        %v724 = vld [vmem:[#allocation5 + $0xa4] sm:$0xf]
        %v725 = vld [vmem:[#allocation5 + $0xa8] sm:$0xf]
        %v726 = vld [vmem:[#allocation5 + $0xac] sm:$0xf]
        %v727 = vld [vmem:[#allocation5 + $0xb0] sm:$0xf]
        %v728 = vld [vmem:[#allocation5 + $0xb4] sm:$0xf]
        %v729 = vld [vmem:[#allocation5 + $0xb8] sm:$0xf]
        %v730 = vld [vmem:[#allocation5 + $0xbc] sm:$0xf]
        %v747 = vunpack.c.l.b16 %v715
        %v748 = vunpack.c.l.b16 %v716
        %v749 = vunpack.c.l.b16 %v717
        %v750 = vunpack.c.l.b16 %v718
        %v751 = vunpack.c.l.b16 %v719
        %v752 = vunpack.c.l.b16 %v720
        %v753 = vunpack.c.l.b16 %v721
        %v754 = vunpack.c.l.b16 %v722
        %v755 = vunpack.c.l.b16 %v723
        %v756 = vunpack.c.l.b16 %v724
        %v757 = vunpack.c.l.b16 %v725
        %v758 = vunpack.c.l.b16 %v726
        %v759 = vunpack.c.l.b16 %v727
        %v760 = vunpack.c.l.b16 %v728
        %v761 = vunpack.c.l.b16 %v729
        %v762 = vunpack.c.l.b16 %v730
        %v763 = vpack.c.b16 %v748, %v747
        %v764 = vpack.c.b16 %v750, %v749
        %v765 = vpack.c.b16 %v752, %v751
        %v766 = vpack.c.b16 %v754, %v753
        %v767 = vpack.c.b16 %v756, %v755
        %v768 = vpack.c.b16 %v758, %v757
        %v769 = vpack.c.b16 %v760, %v759
        %v770 = vpack.c.b16 %v762, %v761
        %779 = vmatprep.subr.bf16.mxu0 0
        %780 = vmatpush1.bf16.msra.mxu0 %v770
        %781 = vmatprep.subr.bf16.mxu0 0
        %782 = vmatpush1.bf16.msra.mxu0 %v769
        %783 = vmatprep.subr.bf16.mxu0 0
        %784 = vmatpush1.bf16.msra.mxu0 %v768
        %785 = vmatprep.subr.bf16.mxu0 0
        %786 = vmatpush1.bf16.msra.mxu0 %v767
        %787 = vmatprep.subr.bf16.mxu0 0
        %788 = vmatpush1.bf16.msra.mxu0 %v766
        %789 = vmatprep.subr.bf16.mxu0 0
        %790 = vmatpush1.bf16.msra.mxu0 %v765
        %791 = vmatprep.subr.bf16.mxu0 0
        %792 = vmatpush1.bf16.msra.mxu0 %v764
        %793 = vmatprep.subr.bf16.mxu0 0
        %794 = vmatpush1.bf16.msra.mxu0 %v763
        %795 = vmatprep.subr.bf16.mxu0 0
        %796 = vmatpush2.bf16.msra.mxu0 0
        %797 = vmatprep.subr.bf16.mxu0 0
        %798 = vmatpush2.bf16.msra.mxu0 0
        %799 = vmatprep.subr.bf16.mxu0 0
        %800 = vmatpush2.bf16.msra.mxu0 0
        %801 = vmatprep.subr.bf16.mxu0 0
        %802 = vmatpush2.bf16.msra.mxu0 0
        %803 = vmatprep.subr.bf16.mxu0 0
        %804 = vmatpush2.bf16.msra.mxu0 0
        %805 = vmatprep.subr.bf16.mxu0 0
        %806 = vmatpush2.bf16.msra.mxu0 0
        %807 = vmatprep.subr.bf16.mxu0 0
        %808 = vmatpush2.bf16.msra.mxu0 0
        %809 = vmatprep.subr.bf16.mxu0 0
        %810 = vmatpush2.bf16.msra.mxu0 0
        %811 = vmatprep.mubr.bf16.mxu0 0
        %812 = vmatmul.mubr.bf16.gmra.mxu0 %v707
        %v813 = vpop.f32.mrf.mxu0
        %v814 = vadd.f32 0.0, %v813
        %v815 = vpop.f32.mrf.mxu0
        %v816 = vpop.f32.mrf.mxu0
        %v817 = vadd.f32 0.0, %v816
        %v818 = vpop.f32.mrf.mxu0
        %819 = vmatprep.mubr.bf16.mxu0 0
        %820 = vmatmul.mubr.bf16.gmra.mxu0 %v708
        %v821 = vpop.f32.mrf.mxu0
        %v822 = vadd.f32 0.0, %v821
        %v823 = vpop.f32.mrf.mxu0
        %v824 = vpop.f32.mrf.mxu0
        %v825 = vadd.f32 0.0, %v824
        %v826 = vpop.f32.mrf.mxu0
        %827 = vmatprep.mubr.bf16.mxu0 0
        %828 = vmatmul.mubr.bf16.gmra.mxu0 %v709
        %v829 = vpop.f32.mrf.mxu0
        %v830 = vadd.f32 0.0, %v829
        %v831 = vpop.f32.mrf.mxu0
        %v832 = vpop.f32.mrf.mxu0
        %v833 = vadd.f32 0.0, %v832
        %v834 = vpop.f32.mrf.mxu0
        %835 = vmatprep.mubr.bf16.mxu0 0
        %836 = vmatmul.mubr.bf16.gmra.mxu0 %v710
        %v837 = vpop.f32.mrf.mxu0
        %v838 = vadd.f32 0.0, %v837
        %v839 = vpop.f32.mrf.mxu0
        %v840 = vpop.f32.mrf.mxu0
        %v841 = vadd.f32 0.0, %v840
        %v842 = vpop.f32.mrf.mxu0
        %843 = vmatprep.mubr.bf16.mxu0 0
        %844 = vmatmul.mubr.bf16.gmra.mxu0 %v711
        %v845 = vpop.f32.mrf.mxu0
        %v846 = vadd.f32 0.0, %v845
        %v847 = vpop.f32.mrf.mxu0
        %v848 = vpop.f32.mrf.mxu0
        %v849 = vadd.f32 0.0, %v848
        %v850 = vpop.f32.mrf.mxu0
        %851 = vmatprep.mubr.bf16.mxu0 0
        %852 = vmatmul.mubr.bf16.gmra.mxu0 %v712
        %v853 = vpop.f32.mrf.mxu0
        %v854 = vadd.f32 0.0, %v853
        %v855 = vpop.f32.mrf.mxu0
        %v856 = vpop.f32.mrf.mxu0
        %v857 = vadd.f32 0.0, %v856
        %v858 = vpop.f32.mrf.mxu0
        %859 = vmatprep.mubr.bf16.mxu0 0
        %860 = vmatmul.mubr.bf16.gmra.mxu0 %v713
        %v861 = vpop.f32.mrf.mxu0
        %v862 = vadd.f32 0.0, %v861
        %v863 = vpop.f32.mrf.mxu0
        %v864 = vpop.f32.mrf.mxu0
        %v865 = vadd.f32 0.0, %v864
        %v866 = vpop.f32.mrf.mxu0
        %867 = vmatprep.mubr.bf16.mxu0 0
        %868 = vmatmul.mubr.bf16.gmra.mxu0 %v714
        %v869 = vpop.f32.mrf.mxu0
        %v870 = vadd.f32 0.0, %v869
        %v871 = vpop.f32.mrf.mxu0
        %v872 = vpop.f32.mrf.mxu0
        %v873 = vadd.f32 0.0, %v872
        %v874 = vpop.f32.mrf.mxu0
        %875 = vdwg.mxu0
        %v876 = vadd.f32 %v604, %v814
        %v877 = vadd.f32 %v607, %v817
        %v878 = vadd.f32 %v612, %v822
        %v879 = vadd.f32 %v615, %v825
        %v880 = vadd.f32 %v620, %v830
        %v881 = vadd.f32 %v623, %v833
        %v882 = vadd.f32 %v628, %v838
        %v883 = vadd.f32 %v631, %v841
        %v884 = vadd.f32 %v636, %v846
        %v885 = vadd.f32 %v639, %v849
        %v886 = vadd.f32 %v644, %v854
        %v887 = vadd.f32 %v647, %v857
        %v888 = vadd.f32 %v652, %v862
        %v889 = vadd.f32 %v655, %v865
        %v890 = vadd.f32 %v660, %v870
        %v891 = vadd.f32 %v663, %v873
        %s892 = sadd.s32 %s233, 2
        %s893 = smul.u32 %s892, 3
        %s894 = smul.addr %s893, 4
        %s895 = scalar_lea.vmem [#allocation2], %s894
        %v896 = vld [vmem:[%s895] sm:$0xf]
        %v897 = vld [vmem:[%s895 + $0x4] sm:$0xf]
        %v898 = vld [vmem:[%s895 + $0x8] sm:$0xf]
        %v899 = vld [vmem:[%s895 + $0xc] sm:$0xf]
        %v900 = vld [vmem:[%s895 + $0x10] sm:$0xf]
        %v901 = vld [vmem:[%s895 + $0x14] sm:$0xf]
        %v902 = vld [vmem:[%s895 + $0x18] sm:$0xf]
        %v903 = vld [vmem:[%s895 + $0x1c] sm:$0xf]
        %v904 = vld [vmem:[%s895 + $0x20] sm:$0xf]
        %v905 = vld [vmem:[%s895 + $0x24] sm:$0xf]
        %v906 = vld [vmem:[%s895 + $0x28] sm:$0xf]
        %v907 = vld [vmem:[%s895 + $0x2c] sm:$0xf]
        %v908 = vld [vmem:[%s895 + $0x30] sm:$0xf]
        %v909 = vld [vmem:[%s895 + $0x34] sm:$0xf]
        %v910 = vld [vmem:[%s895 + $0x38] sm:$0xf]
        %v911 = vld [vmem:[%s895 + $0x3c] sm:$0xf]
        %v912 = vld [vmem:[%s895 + $0x40] sm:$0xf]
        %v913 = vld [vmem:[%s895 + $0x44] sm:$0xf]
        %v914 = vld [vmem:[%s895 + $0x48] sm:$0xf]
        %v915 = vld [vmem:[%s895 + $0x4c] sm:$0xf]
        %v916 = vld [vmem:[%s895 + $0x50] sm:$0xf]
        %v917 = vld [vmem:[%s895 + $0x54] sm:$0xf]
        %v918 = vld [vmem:[%s895 + $0x58] sm:$0xf]
        %v919 = vld [vmem:[%s895 + $0x5c] sm:$0xf]
        %v920 = vunpack.c.l.bf16 %v896
        %v921 = vunpack.c.l.bf16 %v897
        %v922 = vunpack.c.l.bf16 %v898
        %v923 = vunpack.c.l.bf16 %v899
        %v924 = vunpack.c.l.bf16 %v900
        %v925 = vunpack.c.l.bf16 %v901
        %v926 = vunpack.c.l.bf16 %v902
        %v927 = vunpack.c.l.bf16 %v903
        %v928 = vunpack.c.l.bf16 %v904
        %v929 = vunpack.c.l.bf16 %v905
        %v930 = vunpack.c.l.bf16 %v906
        %v931 = vunpack.c.l.bf16 %v907
        %v932 = vunpack.c.l.bf16 %v908
        %v933 = vunpack.c.l.bf16 %v909
        %v934 = vunpack.c.l.bf16 %v910
        %v935 = vunpack.c.l.bf16 %v911
        %v936 = vunpack.c.l.bf16 %v912
        %v937 = vunpack.c.l.bf16 %v913
        %v938 = vunpack.c.l.bf16 %v914
        %v939 = vunpack.c.l.bf16 %v915
        %v940 = vunpack.c.l.bf16 %v916
        %v941 = vunpack.c.l.bf16 %v917
        %v942 = vunpack.c.l.bf16 %v918
        %v943 = vunpack.c.l.bf16 %v919
        %v944 = vpack.c.bf16 %v921, %v920
        %v945 = vpack.c.bf16 %v924, %v923
        %v946 = vpack.c.bf16 %v927, %v926
        %v947 = vpack.c.bf16 %v930, %v929
        %v948 = vpack.c.bf16 %v933, %v932
        %v949 = vpack.c.bf16 %v936, %v935
        %v950 = vpack.c.bf16 %v939, %v938
        %v951 = vpack.c.bf16 %v942, %v941
        %v952 = vld [vmem:[#allocation5 + $0xc0] sm:$0xf]
        %v953 = vld [vmem:[#allocation5 + $0xc4] sm:$0xf]
        %v954 = vld [vmem:[#allocation5 + $0xc8] sm:$0xf]
        %v955 = vld [vmem:[#allocation5 + $0xcc] sm:$0xf]
        %v956 = vld [vmem:[#allocation5 + $0xd0] sm:$0xf]
        %v957 = vld [vmem:[#allocation5 + $0xd4] sm:$0xf]
        %v958 = vld [vmem:[#allocation5 + $0xd8] sm:$0xf]
        %v959 = vld [vmem:[#allocation5 + $0xdc] sm:$0xf]
        %v960 = vld [vmem:[#allocation5 + $0xe0] sm:$0xf]
        %v961 = vld [vmem:[#allocation5 + $0xe4] sm:$0xf]
        %v962 = vld [vmem:[#allocation5 + $0xe8] sm:$0xf]
        %v963 = vld [vmem:[#allocation5 + $0xec] sm:$0xf]
        %v964 = vld [vmem:[#allocation5 + $0xf0] sm:$0xf]
        %v965 = vld [vmem:[#allocation5 + $0xf4] sm:$0xf]
        %v966 = vld [vmem:[#allocation5 + $0xf8] sm:$0xf]
        %v967 = vld [vmem:[#allocation5 + $0xfc] sm:$0xf]
        %v984 = vunpack.c.l.b16 %v952
        %v985 = vunpack.c.l.b16 %v953
        %v986 = vunpack.c.l.b16 %v954
        %v987 = vunpack.c.l.b16 %v955
        %v988 = vunpack.c.l.b16 %v956
        %v989 = vunpack.c.l.b16 %v957
        %v990 = vunpack.c.l.b16 %v958
        %v991 = vunpack.c.l.b16 %v959
        %v992 = vunpack.c.l.b16 %v960
        %v993 = vunpack.c.l.b16 %v961
        %v994 = vunpack.c.l.b16 %v962
        %v995 = vunpack.c.l.b16 %v963
        %v996 = vunpack.c.l.b16 %v964
        %v997 = vunpack.c.l.b16 %v965
        %v998 = vunpack.c.l.b16 %v966
        %v999 = vunpack.c.l.b16 %v967
        %v1000 = vpack.c.b16 %v985, %v984
        %v1001 = vpack.c.b16 %v987, %v986
        %v1002 = vpack.c.b16 %v989, %v988
        %v1003 = vpack.c.b16 %v991, %v990
        %v1004 = vpack.c.b16 %v993, %v992
        %v1005 = vpack.c.b16 %v995, %v994
        %v1006 = vpack.c.b16 %v997, %v996
        %v1007 = vpack.c.b16 %v999, %v998
        %1016 = vmatprep.subr.bf16.mxu0 0
        %1017 = vmatpush1.bf16.msra.mxu0 %v1007
        %1018 = vmatprep.subr.bf16.mxu0 0
        %1019 = vmatpush1.bf16.msra.mxu0 %v1006
        %1020 = vmatprep.subr.bf16.mxu0 0
        %1021 = vmatpush1.bf16.msra.mxu0 %v1005
        %1022 = vmatprep.subr.bf16.mxu0 0
        %1023 = vmatpush1.bf16.msra.mxu0 %v1004
        %1024 = vmatprep.subr.bf16.mxu0 0
        %1025 = vmatpush1.bf16.msra.mxu0 %v1003
        %1026 = vmatprep.subr.bf16.mxu0 0
        %1027 = vmatpush1.bf16.msra.mxu0 %v1002
        %1028 = vmatprep.subr.bf16.mxu0 0
        %1029 = vmatpush1.bf16.msra.mxu0 %v1001
        %1030 = vmatprep.subr.bf16.mxu0 0
        %1031 = vmatpush1.bf16.msra.mxu0 %v1000
        %1032 = vmatprep.subr.bf16.mxu0 0
        %1033 = vmatpush2.bf16.msra.mxu0 0
        %1034 = vmatprep.subr.bf16.mxu0 0
        %1035 = vmatpush2.bf16.msra.mxu0 0
        %1036 = vmatprep.subr.bf16.mxu0 0
        %1037 = vmatpush2.bf16.msra.mxu0 0
        %1038 = vmatprep.subr.bf16.mxu0 0
        %1039 = vmatpush2.bf16.msra.mxu0 0
        %1040 = vmatprep.subr.bf16.mxu0 0
        %1041 = vmatpush2.bf16.msra.mxu0 0
        %1042 = vmatprep.subr.bf16.mxu0 0
        %1043 = vmatpush2.bf16.msra.mxu0 0
        %1044 = vmatprep.subr.bf16.mxu0 0
        %1045 = vmatpush2.bf16.msra.mxu0 0
        %1046 = vmatprep.subr.bf16.mxu0 0
        %1047 = vmatpush2.bf16.msra.mxu0 0
        %1048 = vmatprep.mubr.bf16.mxu0 0
        %1049 = vmatmul.mubr.bf16.gmra.mxu0 %v944
        %v1050 = vpop.f32.mrf.mxu0
        %v1051 = vadd.f32 0.0, %v1050
        %v1052 = vpop.f32.mrf.mxu0
        %v1053 = vpop.f32.mrf.mxu0
        %v1054 = vadd.f32 0.0, %v1053
        %v1055 = vpop.f32.mrf.mxu0
        %1056 = vmatprep.mubr.bf16.mxu0 0
        %1057 = vmatmul.mubr.bf16.gmra.mxu0 %v945
        %v1058 = vpop.f32.mrf.mxu0
        %v1059 = vadd.f32 0.0, %v1058
        %v1060 = vpop.f32.mrf.mxu0
        %v1061 = vpop.f32.mrf.mxu0
        %v1062 = vadd.f32 0.0, %v1061
        %v1063 = vpop.f32.mrf.mxu0
        %1064 = vmatprep.mubr.bf16.mxu0 0
        %1065 = vmatmul.mubr.bf16.gmra.mxu0 %v946
        %v1066 = vpop.f32.mrf.mxu0
        %v1067 = vadd.f32 0.0, %v1066
        %v1068 = vpop.f32.mrf.mxu0
        %v1069 = vpop.f32.mrf.mxu0
        %v1070 = vadd.f32 0.0, %v1069
        %v1071 = vpop.f32.mrf.mxu0
        %1072 = vmatprep.mubr.bf16.mxu0 0
        %1073 = vmatmul.mubr.bf16.gmra.mxu0 %v947
        %v1074 = vpop.f32.mrf.mxu0
        %v1075 = vadd.f32 0.0, %v1074
        %v1076 = vpop.f32.mrf.mxu0
        %v1077 = vpop.f32.mrf.mxu0
        %v1078 = vadd.f32 0.0, %v1077
        %v1079 = vpop.f32.mrf.mxu0
        %1080 = vmatprep.mubr.bf16.mxu0 0
        %1081 = vmatmul.mubr.bf16.gmra.mxu0 %v948
        %v1082 = vpop.f32.mrf.mxu0
        %v1083 = vadd.f32 0.0, %v1082
        %v1084 = vpop.f32.mrf.mxu0
        %v1085 = vpop.f32.mrf.mxu0
        %v1086 = vadd.f32 0.0, %v1085
        %v1087 = vpop.f32.mrf.mxu0
        %1088 = vmatprep.mubr.bf16.mxu0 0
        %1089 = vmatmul.mubr.bf16.gmra.mxu0 %v949
        %v1090 = vpop.f32.mrf.mxu0
        %v1091 = vadd.f32 0.0, %v1090
        %v1092 = vpop.f32.mrf.mxu0
        %v1093 = vpop.f32.mrf.mxu0
        %v1094 = vadd.f32 0.0, %v1093
        %v1095 = vpop.f32.mrf.mxu0
        %1096 = vmatprep.mubr.bf16.mxu0 0
        %1097 = vmatmul.mubr.bf16.gmra.mxu0 %v950
        %v1098 = vpop.f32.mrf.mxu0
        %v1099 = vadd.f32 0.0, %v1098
        %v1100 = vpop.f32.mrf.mxu0
        %v1101 = vpop.f32.mrf.mxu0
        %v1102 = vadd.f32 0.0, %v1101
        %v1103 = vpop.f32.mrf.mxu0
        %1104 = vmatprep.mubr.bf16.mxu0 0
        %1105 = vmatmul.mubr.bf16.gmra.mxu0 %v951
        %v1106 = vpop.f32.mrf.mxu0
        %v1107 = vadd.f32 0.0, %v1106
        %v1108 = vpop.f32.mrf.mxu0
        %v1109 = vpop.f32.mrf.mxu0
        %v1110 = vadd.f32 0.0, %v1109
        %v1111 = vpop.f32.mrf.mxu0
        %1112 = vdwg.mxu0
        %v1113 = vadd.f32 %v876, %v1051
        %v1114 = vadd.f32 %v877, %v1054
        %v1115 = vadd.f32 %v878, %v1059
        %v1116 = vadd.f32 %v879, %v1062
        %v1117 = vadd.f32 %v880, %v1067
        %v1118 = vadd.f32 %v881, %v1070
        %v1119 = vadd.f32 %v882, %v1075
        %v1120 = vadd.f32 %v883, %v1078
        %v1121 = vadd.f32 %v884, %v1083
        %v1122 = vadd.f32 %v885, %v1086
        %v1123 = vadd.f32 %v886, %v1091
        %v1124 = vadd.f32 %v887, %v1094
        %v1125 = vadd.f32 %v888, %v1099
        %v1126 = vadd.f32 %v889, %v1102
        %v1127 = vadd.f32 %v890, %v1107
        %v1128 = vadd.f32 %v891, %v1110
        %v1129 = vrot.slane %v920, 2
        %v1130 = vrot.slane %v923, 2
        %v1131 = vrot.slane %v926, 2
        %v1132 = vrot.slane %v929, 2
        %v1133 = vrot.slane %v932, 2
        %v1134 = vrot.slane %v935, 2
        %v1135 = vrot.slane %v938, 2
        %v1136 = vrot.slane %v941, 2
        %v1137 = vrot.slane %v921, 2
        %v1138 = vrot.slane %v924, 2
        %v1139 = vrot.slane %v927, 2
        %v1140 = vrot.slane %v930, 2
        %v1141 = vrot.slane %v933, 2
        %v1142 = vrot.slane %v936, 2
        %v1143 = vrot.slane %v939, 2
        %v1144 = vrot.slane %v942, 2
        %v1145 = vrot.slane %v922, 2
        %v1146 = vrot.slane %v925, 2
        %v1147 = vrot.slane %v928, 2
        %v1148 = vrot.slane %v931, 2
        %v1149 = vrot.slane %v934, 2
        %v1150 = vrot.slane %v937, 2
        %v1151 = vrot.slane %v940, 2
        %v1152 = vrot.slane %v943, 2
        %v1153 = vsel %vm335, %v1137, %v1145
        %v1154 = vsel %vm335, %v1138, %v1146
        %v1155 = vsel %vm335, %v1139, %v1147
        %v1156 = vsel %vm335, %v1140, %v1148
        %v1157 = vsel %vm335, %v1141, %v1149
        %v1158 = vsel %vm335, %v1142, %v1150
        %v1159 = vsel %vm335, %v1143, %v1151
        %v1160 = vsel %vm335, %v1144, %v1152
        %v1161 = vsel %vm335, %v1129, %v1137
        %v1162 = vsel %vm335, %v1130, %v1138
        %v1163 = vsel %vm335, %v1131, %v1139
        %v1164 = vsel %vm335, %v1132, %v1140
        %v1165 = vsel %vm335, %v1133, %v1141
        %v1166 = vsel %vm335, %v1134, %v1142
        %v1167 = vsel %vm335, %v1135, %v1143
        %v1168 = vsel %vm335, %v1136, %v1144
        %v1169 = vpack.c.bf16 %v1153, %v1161
        %v1170 = vpack.c.bf16 %v1154, %v1162
        %v1171 = vpack.c.bf16 %v1155, %v1163
        %v1172 = vpack.c.bf16 %v1156, %v1164
        %v1173 = vpack.c.bf16 %v1157, %v1165
        %v1174 = vpack.c.bf16 %v1158, %v1166
        %v1175 = vpack.c.bf16 %v1159, %v1167
        %v1176 = vpack.c.bf16 %v1160, %v1168
        %v1177 = vld [vmem:[#allocation5 + $0x100] sm:$0xf]
        %v1178 = vld [vmem:[#allocation5 + $0x104] sm:$0xf]
        %v1179 = vld [vmem:[#allocation5 + $0x108] sm:$0xf]
        %v1180 = vld [vmem:[#allocation5 + $0x10c] sm:$0xf]
        %v1181 = vld [vmem:[#allocation5 + $0x110] sm:$0xf]
        %v1182 = vld [vmem:[#allocation5 + $0x114] sm:$0xf]
        %v1183 = vld [vmem:[#allocation5 + $0x118] sm:$0xf]
        %v1184 = vld [vmem:[#allocation5 + $0x11c] sm:$0xf]
        %v1185 = vld [vmem:[#allocation5 + $0x120] sm:$0xf]
        %v1186 = vld [vmem:[#allocation5 + $0x124] sm:$0xf]
        %v1187 = vld [vmem:[#allocation5 + $0x128] sm:$0xf]
        %v1188 = vld [vmem:[#allocation5 + $0x12c] sm:$0xf]
        %v1189 = vld [vmem:[#allocation5 + $0x130] sm:$0xf]
        %v1190 = vld [vmem:[#allocation5 + $0x134] sm:$0xf]
        %v1191 = vld [vmem:[#allocation5 + $0x138] sm:$0xf]
        %v1192 = vld [vmem:[#allocation5 + $0x13c] sm:$0xf]
        %v1209 = vunpack.c.l.b16 %v1177
        %v1210 = vunpack.c.l.b16 %v1178
        %v1211 = vunpack.c.l.b16 %v1179
        %v1212 = vunpack.c.l.b16 %v1180
        %v1213 = vunpack.c.l.b16 %v1181
        %v1214 = vunpack.c.l.b16 %v1182
        %v1215 = vunpack.c.l.b16 %v1183
        %v1216 = vunpack.c.l.b16 %v1184
        %v1217 = vunpack.c.l.b16 %v1185
        %v1218 = vunpack.c.l.b16 %v1186
        %v1219 = vunpack.c.l.b16 %v1187
        %v1220 = vunpack.c.l.b16 %v1188
        %v1221 = vunpack.c.l.b16 %v1189
        %v1222 = vunpack.c.l.b16 %v1190
        %v1223 = vunpack.c.l.b16 %v1191
        %v1224 = vunpack.c.l.b16 %v1192
        %v1225 = vpack.c.b16 %v1210, %v1209
        %v1226 = vpack.c.b16 %v1212, %v1211
        %v1227 = vpack.c.b16 %v1214, %v1213
        %v1228 = vpack.c.b16 %v1216, %v1215
        %v1229 = vpack.c.b16 %v1218, %v1217
        %v1230 = vpack.c.b16 %v1220, %v1219
        %v1231 = vpack.c.b16 %v1222, %v1221
        %v1232 = vpack.c.b16 %v1224, %v1223
        %1241 = vmatprep.subr.bf16.mxu0 0
        %1242 = vmatpush1.bf16.msra.mxu0 %v1232
        %1243 = vmatprep.subr.bf16.mxu0 0
        %1244 = vmatpush1.bf16.msra.mxu0 %v1231
        %1245 = vmatprep.subr.bf16.mxu0 0
        %1246 = vmatpush1.bf16.msra.mxu0 %v1230
        %1247 = vmatprep.subr.bf16.mxu0 0
        %1248 = vmatpush1.bf16.msra.mxu0 %v1229
        %1249 = vmatprep.subr.bf16.mxu0 0
        %1250 = vmatpush1.bf16.msra.mxu0 %v1228
        %1251 = vmatprep.subr.bf16.mxu0 0
        %1252 = vmatpush1.bf16.msra.mxu0 %v1227
        %1253 = vmatprep.subr.bf16.mxu0 0
        %1254 = vmatpush1.bf16.msra.mxu0 %v1226
        %1255 = vmatprep.subr.bf16.mxu0 0
        %1256 = vmatpush1.bf16.msra.mxu0 %v1225
        %1257 = vmatprep.subr.bf16.mxu0 0
        %1258 = vmatpush2.bf16.msra.mxu0 0
        %1259 = vmatprep.subr.bf16.mxu0 0
        %1260 = vmatpush2.bf16.msra.mxu0 0
        %1261 = vmatprep.subr.bf16.mxu0 0
        %1262 = vmatpush2.bf16.msra.mxu0 0
        %1263 = vmatprep.subr.bf16.mxu0 0
        %1264 = vmatpush2.bf16.msra.mxu0 0
        %1265 = vmatprep.subr.bf16.mxu0 0
        %1266 = vmatpush2.bf16.msra.mxu0 0
        %1267 = vmatprep.subr.bf16.mxu0 0
        %1268 = vmatpush2.bf16.msra.mxu0 0
        %1269 = vmatprep.subr.bf16.mxu0 0
        %1270 = vmatpush2.bf16.msra.mxu0 0
        %1271 = vmatprep.subr.bf16.mxu0 0
        %1272 = vmatpush2.bf16.msra.mxu0 0
        %1273 = vmatprep.mubr.bf16.mxu0 0
        %1274 = vmatmul.mubr.bf16.gmra.mxu0 %v1169
        %v1275 = vpop.f32.mrf.mxu0
        %v1276 = vadd.f32 0.0, %v1275
        %v1277 = vpop.f32.mrf.mxu0
        %v1278 = vpop.f32.mrf.mxu0
        %v1279 = vadd.f32 0.0, %v1278
        %v1280 = vpop.f32.mrf.mxu0
        %1281 = vmatprep.mubr.bf16.mxu0 0
        %1282 = vmatmul.mubr.bf16.gmra.mxu0 %v1170
        %v1283 = vpop.f32.mrf.mxu0
        %v1284 = vadd.f32 0.0, %v1283
        %v1285 = vpop.f32.mrf.mxu0
        %v1286 = vpop.f32.mrf.mxu0
        %v1287 = vadd.f32 0.0, %v1286
        %v1288 = vpop.f32.mrf.mxu0
        %1289 = vmatprep.mubr.bf16.mxu0 0
        %1290 = vmatmul.mubr.bf16.gmra.mxu0 %v1171
        %v1291 = vpop.f32.mrf.mxu0
        %v1292 = vadd.f32 0.0, %v1291
        %v1293 = vpop.f32.mrf.mxu0
        %v1294 = vpop.f32.mrf.mxu0
        %v1295 = vadd.f32 0.0, %v1294
        %v1296 = vpop.f32.mrf.mxu0
        %1297 = vmatprep.mubr.bf16.mxu0 0
        %1298 = vmatmul.mubr.bf16.gmra.mxu0 %v1172
        %v1299 = vpop.f32.mrf.mxu0
        %v1300 = vadd.f32 0.0, %v1299
        %v1301 = vpop.f32.mrf.mxu0
        %v1302 = vpop.f32.mrf.mxu0
        %v1303 = vadd.f32 0.0, %v1302
        %v1304 = vpop.f32.mrf.mxu0
        %1305 = vmatprep.mubr.bf16.mxu0 0
        %1306 = vmatmul.mubr.bf16.gmra.mxu0 %v1173
        %v1307 = vpop.f32.mrf.mxu0
        %v1308 = vadd.f32 0.0, %v1307
        %v1309 = vpop.f32.mrf.mxu0
        %v1310 = vpop.f32.mrf.mxu0
        %v1311 = vadd.f32 0.0, %v1310
        %v1312 = vpop.f32.mrf.mxu0
        %1313 = vmatprep.mubr.bf16.mxu0 0
        %1314 = vmatmul.mubr.bf16.gmra.mxu0 %v1174
        %v1315 = vpop.f32.mrf.mxu0
        %v1316 = vadd.f32 0.0, %v1315
        %v1317 = vpop.f32.mrf.mxu0
        %v1318 = vpop.f32.mrf.mxu0
        %v1319 = vadd.f32 0.0, %v1318
        %v1320 = vpop.f32.mrf.mxu0
        %1321 = vmatprep.mubr.bf16.mxu0 0
        %1322 = vmatmul.mubr.bf16.gmra.mxu0 %v1175
        %v1323 = vpop.f32.mrf.mxu0
        %v1324 = vadd.f32 0.0, %v1323
        %v1325 = vpop.f32.mrf.mxu0
        %v1326 = vpop.f32.mrf.mxu0
        %v1327 = vadd.f32 0.0, %v1326
        %v1328 = vpop.f32.mrf.mxu0
        %1329 = vmatprep.mubr.bf16.mxu0 0
        %1330 = vmatmul.mubr.bf16.gmra.mxu0 %v1176
        %v1331 = vpop.f32.mrf.mxu0
        %v1332 = vadd.f32 0.0, %v1331
        %v1333 = vpop.f32.mrf.mxu0
        %v1334 = vpop.f32.mrf.mxu0
        %v1335 = vadd.f32 0.0, %v1334
        %v1336 = vpop.f32.mrf.mxu0
        %1337 = vdwg.mxu0
        %v1338 = vadd.f32 %v1113, %v1276
        %v1339 = vadd.f32 %v1114, %v1279
        %v1340 = vadd.f32 %v1115, %v1284
        %v1341 = vadd.f32 %v1116, %v1287
        %v1342 = vadd.f32 %v1117, %v1292
        %v1343 = vadd.f32 %v1118, %v1295
        %v1344 = vadd.f32 %v1119, %v1300
        %v1345 = vadd.f32 %v1120, %v1303
        %v1346 = vadd.f32 %v1121, %v1308
        %v1347 = vadd.f32 %v1122, %v1311
        %v1348 = vadd.f32 %v1123, %v1316
        %v1349 = vadd.f32 %v1124, %v1319
        %v1350 = vadd.f32 %v1125, %v1324
        %v1351 = vadd.f32 %v1126, %v1327
        %v1352 = vadd.f32 %v1127, %v1332
        %v1353 = vadd.f32 %v1128, %v1335
        %v1354 = vrot.slane %v920, 4
        %v1355 = vrot.slane %v923, 4
        %v1356 = vrot.slane %v926, 4
        %v1357 = vrot.slane %v929, 4
        %v1358 = vrot.slane %v932, 4
        %v1359 = vrot.slane %v935, 4
        %v1360 = vrot.slane %v938, 4
        %v1361 = vrot.slane %v941, 4
        %v1362 = vrot.slane %v921, 4
        %v1363 = vrot.slane %v924, 4
        %v1364 = vrot.slane %v927, 4
        %v1365 = vrot.slane %v930, 4
        %v1366 = vrot.slane %v933, 4
        %v1367 = vrot.slane %v936, 4
        %v1368 = vrot.slane %v939, 4
        %v1369 = vrot.slane %v942, 4
        %v1370 = vrot.slane %v922, 4
        %v1371 = vrot.slane %v925, 4
        %v1372 = vrot.slane %v928, 4
        %v1373 = vrot.slane %v931, 4
        %v1374 = vrot.slane %v934, 4
        %v1375 = vrot.slane %v937, 4
        %v1376 = vrot.slane %v940, 4
        %v1377 = vrot.slane %v943, 4
        %v1378 = vsel %vm690, %v1362, %v1370
        %v1379 = vsel %vm690, %v1363, %v1371
        %v1380 = vsel %vm690, %v1364, %v1372
        %v1381 = vsel %vm690, %v1365, %v1373
        %v1382 = vsel %vm690, %v1366, %v1374
        %v1383 = vsel %vm690, %v1367, %v1375
        %v1384 = vsel %vm690, %v1368, %v1376
        %v1385 = vsel %vm690, %v1369, %v1377
        %v1386 = vsel %vm690, %v1354, %v1362
        %v1387 = vsel %vm690, %v1355, %v1363
        %v1388 = vsel %vm690, %v1356, %v1364
        %v1389 = vsel %vm690, %v1357, %v1365
        %v1390 = vsel %vm690, %v1358, %v1366
        %v1391 = vsel %vm690, %v1359, %v1367
        %v1392 = vsel %vm690, %v1360, %v1368
        %v1393 = vsel %vm690, %v1361, %v1369
        %v1394 = vpack.c.bf16 %v1378, %v1386
        %v1395 = vpack.c.bf16 %v1379, %v1387
        %v1396 = vpack.c.bf16 %v1380, %v1388
        %v1397 = vpack.c.bf16 %v1381, %v1389
        %v1398 = vpack.c.bf16 %v1382, %v1390
        %v1399 = vpack.c.bf16 %v1383, %v1391
        %v1400 = vpack.c.bf16 %v1384, %v1392
        %v1401 = vpack.c.bf16 %v1385, %v1393
        %v1402 = vld [vmem:[#allocation5 + $0x140] sm:$0xf]
        %v1403 = vld [vmem:[#allocation5 + $0x144] sm:$0xf]
        %v1404 = vld [vmem:[#allocation5 + $0x148] sm:$0xf]
        %v1405 = vld [vmem:[#allocation5 + $0x14c] sm:$0xf]
        %v1406 = vld [vmem:[#allocation5 + $0x150] sm:$0xf]
        %v1407 = vld [vmem:[#allocation5 + $0x154] sm:$0xf]
        %v1408 = vld [vmem:[#allocation5 + $0x158] sm:$0xf]
        %v1409 = vld [vmem:[#allocation5 + $0x15c] sm:$0xf]
        %v1410 = vld [vmem:[#allocation5 + $0x160] sm:$0xf]
        %v1411 = vld [vmem:[#allocation5 + $0x164] sm:$0xf]
        %v1412 = vld [vmem:[#allocation5 + $0x168] sm:$0xf]
        %v1413 = vld [vmem:[#allocation5 + $0x16c] sm:$0xf]
        %v1414 = vld [vmem:[#allocation5 + $0x170] sm:$0xf]
        %v1415 = vld [vmem:[#allocation5 + $0x174] sm:$0xf]
        %v1416 = vld [vmem:[#allocation5 + $0x178] sm:$0xf]
        %v1417 = vld [vmem:[#allocation5 + $0x17c] sm:$0xf]
        %v1434 = vunpack.c.l.b16 %v1402
        %v1435 = vunpack.c.l.b16 %v1403
        %v1436 = vunpack.c.l.b16 %v1404
        %v1437 = vunpack.c.l.b16 %v1405
        %v1438 = vunpack.c.l.b16 %v1406
        %v1439 = vunpack.c.l.b16 %v1407
        %v1440 = vunpack.c.l.b16 %v1408
        %v1441 = vunpack.c.l.b16 %v1409
        %v1442 = vunpack.c.l.b16 %v1410
        %v1443 = vunpack.c.l.b16 %v1411
        %v1444 = vunpack.c.l.b16 %v1412
        %v1445 = vunpack.c.l.b16 %v1413
        %v1446 = vunpack.c.l.b16 %v1414
        %v1447 = vunpack.c.l.b16 %v1415
        %v1448 = vunpack.c.l.b16 %v1416
        %v1449 = vunpack.c.l.b16 %v1417
        %v1450 = vpack.c.b16 %v1435, %v1434
        %v1451 = vpack.c.b16 %v1437, %v1436
        %v1452 = vpack.c.b16 %v1439, %v1438
        %v1453 = vpack.c.b16 %v1441, %v1440
        %v1454 = vpack.c.b16 %v1443, %v1442
        %v1455 = vpack.c.b16 %v1445, %v1444
        %v1456 = vpack.c.b16 %v1447, %v1446
        %v1457 = vpack.c.b16 %v1449, %v1448
        %1466 = vmatprep.subr.bf16.mxu0 0
        %1467 = vmatpush1.bf16.msra.mxu0 %v1457
        %1468 = vmatprep.subr.bf16.mxu0 0
        %1469 = vmatpush1.bf16.msra.mxu0 %v1456
        %1470 = vmatprep.subr.bf16.mxu0 0
        %1471 = vmatpush1.bf16.msra.mxu0 %v1455
        %1472 = vmatprep.subr.bf16.mxu0 0
        %1473 = vmatpush1.bf16.msra.mxu0 %v1454
        %1474 = vmatprep.subr.bf16.mxu0 0
        %1475 = vmatpush1.bf16.msra.mxu0 %v1453
        %1476 = vmatprep.subr.bf16.mxu0 0
        %1477 = vmatpush1.bf16.msra.mxu0 %v1452
        %1478 = vmatprep.subr.bf16.mxu0 0
        %1479 = vmatpush1.bf16.msra.mxu0 %v1451
        %1480 = vmatprep.subr.bf16.mxu0 0
        %1481 = vmatpush1.bf16.msra.mxu0 %v1450
        %1482 = vmatprep.subr.bf16.mxu0 0
        %1483 = vmatpush2.bf16.msra.mxu0 0
        %1484 = vmatprep.subr.bf16.mxu0 0
        %1485 = vmatpush2.bf16.msra.mxu0 0
        %1486 = vmatprep.subr.bf16.mxu0 0
        %1487 = vmatpush2.bf16.msra.mxu0 0
        %1488 = vmatprep.subr.bf16.mxu0 0
        %1489 = vmatpush2.bf16.msra.mxu0 0
        %1490 = vmatprep.subr.bf16.mxu0 0
        %1491 = vmatpush2.bf16.msra.mxu0 0
        %1492 = vmatprep.subr.bf16.mxu0 0
        %1493 = vmatpush2.bf16.msra.mxu0 0
        %1494 = vmatprep.subr.bf16.mxu0 0
        %1495 = vmatpush2.bf16.msra.mxu0 0
        %1496 = vmatprep.subr.bf16.mxu0 0
        %1497 = vmatpush2.bf16.msra.mxu0 0
        %1498 = vmatprep.mubr.bf16.mxu0 0
        %1499 = vmatmul.mubr.bf16.gmra.mxu0 %v1394
        %v1500 = vpop.f32.mrf.mxu0
        %v1501 = vadd.f32 0.0, %v1500
        %v1502 = vpop.f32.mrf.mxu0
        %v1503 = vpop.f32.mrf.mxu0
        %v1504 = vadd.f32 0.0, %v1503
        %v1505 = vpop.f32.mrf.mxu0
        %1506 = vmatprep.mubr.bf16.mxu0 0
        %1507 = vmatmul.mubr.bf16.gmra.mxu0 %v1395
        %v1508 = vpop.f32.mrf.mxu0
        %v1509 = vadd.f32 0.0, %v1508
        %v1510 = vpop.f32.mrf.mxu0
        %v1511 = vpop.f32.mrf.mxu0
        %v1512 = vadd.f32 0.0, %v1511
        %v1513 = vpop.f32.mrf.mxu0
        %1514 = vmatprep.mubr.bf16.mxu0 0
        %1515 = vmatmul.mubr.bf16.gmra.mxu0 %v1396
        %v1516 = vpop.f32.mrf.mxu0
        %v1517 = vadd.f32 0.0, %v1516
        %v1518 = vpop.f32.mrf.mxu0
        %v1519 = vpop.f32.mrf.mxu0
        %v1520 = vadd.f32 0.0, %v1519
        %v1521 = vpop.f32.mrf.mxu0
        %1522 = vmatprep.mubr.bf16.mxu0 0
        %1523 = vmatmul.mubr.bf16.gmra.mxu0 %v1397
        %v1524 = vpop.f32.mrf.mxu0
        %v1525 = vadd.f32 0.0, %v1524
        %v1526 = vpop.f32.mrf.mxu0
        %v1527 = vpop.f32.mrf.mxu0
        %v1528 = vadd.f32 0.0, %v1527
        %v1529 = vpop.f32.mrf.mxu0
        %1530 = vmatprep.mubr.bf16.mxu0 0
        %1531 = vmatmul.mubr.bf16.gmra.mxu0 %v1398
        %v1532 = vpop.f32.mrf.mxu0
        %v1533 = vadd.f32 0.0, %v1532
        %v1534 = vpop.f32.mrf.mxu0
        %v1535 = vpop.f32.mrf.mxu0
        %v1536 = vadd.f32 0.0, %v1535
        %v1537 = vpop.f32.mrf.mxu0
        %1538 = vmatprep.mubr.bf16.mxu0 0
        %1539 = vmatmul.mubr.bf16.gmra.mxu0 %v1399
        %v1540 = vpop.f32.mrf.mxu0
        %v1541 = vadd.f32 0.0, %v1540
        %v1542 = vpop.f32.mrf.mxu0
        %v1543 = vpop.f32.mrf.mxu0
        %v1544 = vadd.f32 0.0, %v1543
        %v1545 = vpop.f32.mrf.mxu0
        %1546 = vmatprep.mubr.bf16.mxu0 0
        %1547 = vmatmul.mubr.bf16.gmra.mxu0 %v1400
        %v1548 = vpop.f32.mrf.mxu0
        %v1549 = vadd.f32 0.0, %v1548
        %v1550 = vpop.f32.mrf.mxu0
        %v1551 = vpop.f32.mrf.mxu0
        %v1552 = vadd.f32 0.0, %v1551
        %v1553 = vpop.f32.mrf.mxu0
        %1554 = vmatprep.mubr.bf16.mxu0 0
        %1555 = vmatmul.mubr.bf16.gmra.mxu0 %v1401
        %v1556 = vpop.f32.mrf.mxu0
        %v1557 = vadd.f32 0.0, %v1556
        %v1558 = vpop.f32.mrf.mxu0
        %v1559 = vpop.f32.mrf.mxu0
        %v1560 = vadd.f32 0.0, %v1559
        %v1561 = vpop.f32.mrf.mxu0
        %1562 = vdwg.mxu0
        %v1563 = vadd.f32 %v1338, %v1501
        %v1564 = vadd.f32 %v1339, %v1504
        %v1565 = vadd.f32 %v1340, %v1509
        %v1566 = vadd.f32 %v1341, %v1512
        %v1567 = vadd.f32 %v1342, %v1517
        %v1568 = vadd.f32 %v1343, %v1520
        %v1569 = vadd.f32 %v1344, %v1525
        %v1570 = vadd.f32 %v1345, %v1528
        %v1571 = vadd.f32 %v1346, %v1533
        %v1572 = vadd.f32 %v1347, %v1536
        %v1573 = vadd.f32 %v1348, %v1541
        %v1574 = vadd.f32 %v1349, %v1544
        %v1575 = vadd.f32 %v1350, %v1549
        %v1576 = vadd.f32 %v1351, %v1552
        %v1577 = vadd.f32 %v1352, %v1557
        %v1578 = vadd.f32 %v1353, %v1560
        %s1579 = sadd.s32 %s233, 4
        %s1580 = smul.u32 %s1579, 3
        %s1581 = smul.addr %s1580, 4
        %s1582 = scalar_lea.vmem [#allocation2], %s1581
        %v1583 = vld [vmem:[%s1582] sm:$0xf]
        %v1584 = vld [vmem:[%s1582 + $0x4] sm:$0xf]
        %v1585 = vld [vmem:[%s1582 + $0x8] sm:$0xf]
        %v1586 = vld [vmem:[%s1582 + $0xc] sm:$0xf]
        %v1587 = vld [vmem:[%s1582 + $0x10] sm:$0xf]
        %v1588 = vld [vmem:[%s1582 + $0x14] sm:$0xf]
        %v1589 = vld [vmem:[%s1582 + $0x18] sm:$0xf]
        %v1590 = vld [vmem:[%s1582 + $0x1c] sm:$0xf]
        %v1591 = vld [vmem:[%s1582 + $0x20] sm:$0xf]
        %v1592 = vld [vmem:[%s1582 + $0x24] sm:$0xf]
        %v1593 = vld [vmem:[%s1582 + $0x28] sm:$0xf]
        %v1594 = vld [vmem:[%s1582 + $0x2c] sm:$0xf]
        %v1595 = vld [vmem:[%s1582 + $0x30] sm:$0xf]
        %v1596 = vld [vmem:[%s1582 + $0x34] sm:$0xf]
        %v1597 = vld [vmem:[%s1582 + $0x38] sm:$0xf]
        %v1598 = vld [vmem:[%s1582 + $0x3c] sm:$0xf]
        %v1599 = vld [vmem:[%s1582 + $0x40] sm:$0xf]
        %v1600 = vld [vmem:[%s1582 + $0x44] sm:$0xf]
        %v1601 = vld [vmem:[%s1582 + $0x48] sm:$0xf]
        %v1602 = vld [vmem:[%s1582 + $0x4c] sm:$0xf]
        %v1603 = vld [vmem:[%s1582 + $0x50] sm:$0xf]
        %v1604 = vld [vmem:[%s1582 + $0x54] sm:$0xf]
        %v1605 = vld [vmem:[%s1582 + $0x58] sm:$0xf]
        %v1606 = vld [vmem:[%s1582 + $0x5c] sm:$0xf]
        %v1607 = vunpack.c.l.bf16 %v1583
        %v1608 = vunpack.c.l.bf16 %v1584
        %v1609 = vunpack.c.l.bf16 %v1585
        %v1610 = vunpack.c.l.bf16 %v1586
        %v1611 = vunpack.c.l.bf16 %v1587
        %v1612 = vunpack.c.l.bf16 %v1588
        %v1613 = vunpack.c.l.bf16 %v1589
        %v1614 = vunpack.c.l.bf16 %v1590
        %v1615 = vunpack.c.l.bf16 %v1591
        %v1616 = vunpack.c.l.bf16 %v1592
        %v1617 = vunpack.c.l.bf16 %v1593
        %v1618 = vunpack.c.l.bf16 %v1594
        %v1619 = vunpack.c.l.bf16 %v1595
        %v1620 = vunpack.c.l.bf16 %v1596
        %v1621 = vunpack.c.l.bf16 %v1597
        %v1622 = vunpack.c.l.bf16 %v1598
        %v1623 = vunpack.c.l.bf16 %v1599
        %v1624 = vunpack.c.l.bf16 %v1600
        %v1625 = vunpack.c.l.bf16 %v1601
        %v1626 = vunpack.c.l.bf16 %v1602
        %v1627 = vunpack.c.l.bf16 %v1603
        %v1628 = vunpack.c.l.bf16 %v1604
        %v1629 = vunpack.c.l.bf16 %v1605
        %v1630 = vunpack.c.l.bf16 %v1606
        %v1631 = vpack.c.bf16 %v1608, %v1607
        %v1632 = vpack.c.bf16 %v1611, %v1610
        %v1633 = vpack.c.bf16 %v1614, %v1613
        %v1634 = vpack.c.bf16 %v1617, %v1616
        %v1635 = vpack.c.bf16 %v1620, %v1619
        %v1636 = vpack.c.bf16 %v1623, %v1622
        %v1637 = vpack.c.bf16 %v1626, %v1625
        %v1638 = vpack.c.bf16 %v1629, %v1628
        %v1639 = vld [vmem:[#allocation5 + $0x180] sm:$0xf]
        %v1640 = vld [vmem:[#allocation5 + $0x184] sm:$0xf]
        %v1641 = vld [vmem:[#allocation5 + $0x188] sm:$0xf]
        %v1642 = vld [vmem:[#allocation5 + $0x18c] sm:$0xf]
        %v1643 = vld [vmem:[#allocation5 + $0x190] sm:$0xf]
        %v1644 = vld [vmem:[#allocation5 + $0x194] sm:$0xf]
        %v1645 = vld [vmem:[#allocation5 + $0x198] sm:$0xf]
        %v1646 = vld [vmem:[#allocation5 + $0x19c] sm:$0xf]
        %v1647 = vld [vmem:[#allocation5 + $0x1a0] sm:$0xf]
        %v1648 = vld [vmem:[#allocation5 + $0x1a4] sm:$0xf]
        %v1649 = vld [vmem:[#allocation5 + $0x1a8] sm:$0xf]
        %v1650 = vld [vmem:[#allocation5 + $0x1ac] sm:$0xf]
        %v1651 = vld [vmem:[#allocation5 + $0x1b0] sm:$0xf]
        %v1652 = vld [vmem:[#allocation5 + $0x1b4] sm:$0xf]
        %v1653 = vld [vmem:[#allocation5 + $0x1b8] sm:$0xf]
        %v1654 = vld [vmem:[#allocation5 + $0x1bc] sm:$0xf]
        %v1671 = vunpack.c.l.b16 %v1639
        %v1672 = vunpack.c.l.b16 %v1640
        %v1673 = vunpack.c.l.b16 %v1641
        %v1674 = vunpack.c.l.b16 %v1642
        %v1675 = vunpack.c.l.b16 %v1643
        %v1676 = vunpack.c.l.b16 %v1644
        %v1677 = vunpack.c.l.b16 %v1645
        %v1678 = vunpack.c.l.b16 %v1646
        %v1679 = vunpack.c.l.b16 %v1647
        %v1680 = vunpack.c.l.b16 %v1648
        %v1681 = vunpack.c.l.b16 %v1649
        %v1682 = vunpack.c.l.b16 %v1650
        %v1683 = vunpack.c.l.b16 %v1651
        %v1684 = vunpack.c.l.b16 %v1652
        %v1685 = vunpack.c.l.b16 %v1653
        %v1686 = vunpack.c.l.b16 %v1654
        %v1687 = vpack.c.b16 %v1672, %v1671
        %v1688 = vpack.c.b16 %v1674, %v1673
        %v1689 = vpack.c.b16 %v1676, %v1675
        %v1690 = vpack.c.b16 %v1678, %v1677
        %v1691 = vpack.c.b16 %v1680, %v1679
        %v1692 = vpack.c.b16 %v1682, %v1681
        %v1693 = vpack.c.b16 %v1684, %v1683
        %v1694 = vpack.c.b16 %v1686, %v1685
        %1703 = vmatprep.subr.bf16.mxu0 0
        %1704 = vmatpush1.bf16.msra.mxu0 %v1694
        %1705 = vmatprep.subr.bf16.mxu0 0
        %1706 = vmatpush1.bf16.msra.mxu0 %v1693
        %1707 = vmatprep.subr.bf16.mxu0 0
        %1708 = vmatpush1.bf16.msra.mxu0 %v1692
        %1709 = vmatprep.subr.bf16.mxu0 0
        %1710 = vmatpush1.bf16.msra.mxu0 %v1691
        %1711 = vmatprep.subr.bf16.mxu0 0
        %1712 = vmatpush1.bf16.msra.mxu0 %v1690
        %1713 = vmatprep.subr.bf16.mxu0 0
        %1714 = vmatpush1.bf16.msra.mxu0 %v1689
        %1715 = vmatprep.subr.bf16.mxu0 0
        %1716 = vmatpush1.bf16.msra.mxu0 %v1688
        %1717 = vmatprep.subr.bf16.mxu0 0
        %1718 = vmatpush1.bf16.msra.mxu0 %v1687
        %1719 = vmatprep.subr.bf16.mxu0 0
        %1720 = vmatpush2.bf16.msra.mxu0 0
        %1721 = vmatprep.subr.bf16.mxu0 0
        %1722 = vmatpush2.bf16.msra.mxu0 0
        %1723 = vmatprep.subr.bf16.mxu0 0
        %1724 = vmatpush2.bf16.msra.mxu0 0
        %1725 = vmatprep.subr.bf16.mxu0 0
        %1726 = vmatpush2.bf16.msra.mxu0 0
        %1727 = vmatprep.subr.bf16.mxu0 0
        %1728 = vmatpush2.bf16.msra.mxu0 0
        %1729 = vmatprep.subr.bf16.mxu0 0
        %1730 = vmatpush2.bf16.msra.mxu0 0
        %1731 = vmatprep.subr.bf16.mxu0 0
        %1732 = vmatpush2.bf16.msra.mxu0 0
        %1733 = vmatprep.subr.bf16.mxu0 0
        %1734 = vmatpush2.bf16.msra.mxu0 0
        %1735 = vmatprep.mubr.bf16.mxu0 0
        %1736 = vmatmul.mubr.bf16.gmra.mxu0 %v1631
        %v1737 = vpop.f32.mrf.mxu0
        %v1738 = vadd.f32 0.0, %v1737
        %v1739 = vpop.f32.mrf.mxu0
        %v1740 = vpop.f32.mrf.mxu0
        %v1741 = vadd.f32 0.0, %v1740
        %v1742 = vpop.f32.mrf.mxu0
        %1743 = vmatprep.mubr.bf16.mxu0 0
        %1744 = vmatmul.mubr.bf16.gmra.mxu0 %v1632
        %v1745 = vpop.f32.mrf.mxu0
        %v1746 = vadd.f32 0.0, %v1745
        %v1747 = vpop.f32.mrf.mxu0
        %v1748 = vpop.f32.mrf.mxu0
        %v1749 = vadd.f32 0.0, %v1748
        %v1750 = vpop.f32.mrf.mxu0
        %1751 = vmatprep.mubr.bf16.mxu0 0
        %1752 = vmatmul.mubr.bf16.gmra.mxu0 %v1633
        %v1753 = vpop.f32.mrf.mxu0
        %v1754 = vadd.f32 0.0, %v1753
        %v1755 = vpop.f32.mrf.mxu0
        %v1756 = vpop.f32.mrf.mxu0
        %v1757 = vadd.f32 0.0, %v1756
        %v1758 = vpop.f32.mrf.mxu0
        %1759 = vmatprep.mubr.bf16.mxu0 0
        %1760 = vmatmul.mubr.bf16.gmra.mxu0 %v1634
        %v1761 = vpop.f32.mrf.mxu0
        %v1762 = vadd.f32 0.0, %v1761
        %v1763 = vpop.f32.mrf.mxu0
        %v1764 = vpop.f32.mrf.mxu0
        %v1765 = vadd.f32 0.0, %v1764
        %v1766 = vpop.f32.mrf.mxu0
        %1767 = vmatprep.mubr.bf16.mxu0 0
        %1768 = vmatmul.mubr.bf16.gmra.mxu0 %v1635
        %v1769 = vpop.f32.mrf.mxu0
        %v1770 = vadd.f32 0.0, %v1769
        %v1771 = vpop.f32.mrf.mxu0
        %v1772 = vpop.f32.mrf.mxu0
        %v1773 = vadd.f32 0.0, %v1772
        %v1774 = vpop.f32.mrf.mxu0
        %1775 = vmatprep.mubr.bf16.mxu0 0
        %1776 = vmatmul.mubr.bf16.gmra.mxu0 %v1636
        %v1777 = vpop.f32.mrf.mxu0
        %v1778 = vadd.f32 0.0, %v1777
        %v1779 = vpop.f32.mrf.mxu0
        %v1780 = vpop.f32.mrf.mxu0
        %v1781 = vadd.f32 0.0, %v1780
        %v1782 = vpop.f32.mrf.mxu0
        %1783 = vmatprep.mubr.bf16.mxu0 0
        %1784 = vmatmul.mubr.bf16.gmra.mxu0 %v1637
        %v1785 = vpop.f32.mrf.mxu0
        %v1786 = vadd.f32 0.0, %v1785
        %v1787 = vpop.f32.mrf.mxu0
        %v1788 = vpop.f32.mrf.mxu0
        %v1789 = vadd.f32 0.0, %v1788
        %v1790 = vpop.f32.mrf.mxu0
        %1791 = vmatprep.mubr.bf16.mxu0 0
        %1792 = vmatmul.mubr.bf16.gmra.mxu0 %v1638
        %v1793 = vpop.f32.mrf.mxu0
        %v1794 = vadd.f32 0.0, %v1793
        %v1795 = vpop.f32.mrf.mxu0
        %v1796 = vpop.f32.mrf.mxu0
        %v1797 = vadd.f32 0.0, %v1796
        %v1798 = vpop.f32.mrf.mxu0
        %1799 = vdwg.mxu0
        %v1800 = vadd.f32 %v1563, %v1738
        %v1801 = vadd.f32 %v1564, %v1741
        %v1802 = vadd.f32 %v1565, %v1746
        %v1803 = vadd.f32 %v1566, %v1749
        %v1804 = vadd.f32 %v1567, %v1754
        %v1805 = vadd.f32 %v1568, %v1757
        %v1806 = vadd.f32 %v1569, %v1762
        %v1807 = vadd.f32 %v1570, %v1765
        %v1808 = vadd.f32 %v1571, %v1770
        %v1809 = vadd.f32 %v1572, %v1773
        %v1810 = vadd.f32 %v1573, %v1778
        %v1811 = vadd.f32 %v1574, %v1781
        %v1812 = vadd.f32 %v1575, %v1786
        %v1813 = vadd.f32 %v1576, %v1789
        %v1814 = vadd.f32 %v1577, %v1794
        %v1815 = vadd.f32 %v1578, %v1797
        %v1816 = vrot.slane %v1607, 2
        %v1817 = vrot.slane %v1610, 2
        %v1818 = vrot.slane %v1613, 2
        %v1819 = vrot.slane %v1616, 2
        %v1820 = vrot.slane %v1619, 2
        %v1821 = vrot.slane %v1622, 2
        %v1822 = vrot.slane %v1625, 2
        %v1823 = vrot.slane %v1628, 2
        %v1824 = vrot.slane %v1608, 2
        %v1825 = vrot.slane %v1611, 2
        %v1826 = vrot.slane %v1614, 2
        %v1827 = vrot.slane %v1617, 2
        %v1828 = vrot.slane %v1620, 2
        %v1829 = vrot.slane %v1623, 2
        %v1830 = vrot.slane %v1626, 2
        %v1831 = vrot.slane %v1629, 2
        %v1832 = vrot.slane %v1609, 2
        %v1833 = vrot.slane %v1612, 2
        %v1834 = vrot.slane %v1615, 2
        %v1835 = vrot.slane %v1618, 2
        %v1836 = vrot.slane %v1621, 2
        %v1837 = vrot.slane %v1624, 2
        %v1838 = vrot.slane %v1627, 2
        %v1839 = vrot.slane %v1630, 2
        %v1840 = vsel %vm335, %v1824, %v1832
        %v1841 = vsel %vm335, %v1825, %v1833
        %v1842 = vsel %vm335, %v1826, %v1834
        %v1843 = vsel %vm335, %v1827, %v1835
        %v1844 = vsel %vm335, %v1828, %v1836
        %v1845 = vsel %vm335, %v1829, %v1837
        %v1846 = vsel %vm335, %v1830, %v1838
        %v1847 = vsel %vm335, %v1831, %v1839
        %v1848 = vsel %vm335, %v1816, %v1824
        %v1849 = vsel %vm335, %v1817, %v1825
        %v1850 = vsel %vm335, %v1818, %v1826
        %v1851 = vsel %vm335, %v1819, %v1827
        %v1852 = vsel %vm335, %v1820, %v1828
        %v1853 = vsel %vm335, %v1821, %v1829
        %v1854 = vsel %vm335, %v1822, %v1830
        %v1855 = vsel %vm335, %v1823, %v1831
        %v1856 = vpack.c.bf16 %v1840, %v1848
        %v1857 = vpack.c.bf16 %v1841, %v1849
        %v1858 = vpack.c.bf16 %v1842, %v1850
        %v1859 = vpack.c.bf16 %v1843, %v1851
        %v1860 = vpack.c.bf16 %v1844, %v1852
        %v1861 = vpack.c.bf16 %v1845, %v1853
        %v1862 = vpack.c.bf16 %v1846, %v1854
        %v1863 = vpack.c.bf16 %v1847, %v1855
        %v1864 = vld [vmem:[#allocation5 + $0x1c0] sm:$0xf]
        %v1865 = vld [vmem:[#allocation5 + $0x1c4] sm:$0xf]
        %v1866 = vld [vmem:[#allocation5 + $0x1c8] sm:$0xf]
        %v1867 = vld [vmem:[#allocation5 + $0x1cc] sm:$0xf]
        %v1868 = vld [vmem:[#allocation5 + $0x1d0] sm:$0xf]
        %v1869 = vld [vmem:[#allocation5 + $0x1d4] sm:$0xf]
        %v1870 = vld [vmem:[#allocation5 + $0x1d8] sm:$0xf]
        %v1871 = vld [vmem:[#allocation5 + $0x1dc] sm:$0xf]
        %v1872 = vld [vmem:[#allocation5 + $0x1e0] sm:$0xf]
        %v1873 = vld [vmem:[#allocation5 + $0x1e4] sm:$0xf]
        %v1874 = vld [vmem:[#allocation5 + $0x1e8] sm:$0xf]
        %v1875 = vld [vmem:[#allocation5 + $0x1ec] sm:$0xf]
        %v1876 = vld [vmem:[#allocation5 + $0x1f0] sm:$0xf]
        %v1877 = vld [vmem:[#allocation5 + $0x1f4] sm:$0xf]
        %v1878 = vld [vmem:[#allocation5 + $0x1f8] sm:$0xf]
        %v1879 = vld [vmem:[#allocation5 + $0x1fc] sm:$0xf]
        %v1896 = vunpack.c.l.b16 %v1864
        %v1897 = vunpack.c.l.b16 %v1865
        %v1898 = vunpack.c.l.b16 %v1866
        %v1899 = vunpack.c.l.b16 %v1867
        %v1900 = vunpack.c.l.b16 %v1868
        %v1901 = vunpack.c.l.b16 %v1869
        %v1902 = vunpack.c.l.b16 %v1870
        %v1903 = vunpack.c.l.b16 %v1871
        %v1904 = vunpack.c.l.b16 %v1872
        %v1905 = vunpack.c.l.b16 %v1873
        %v1906 = vunpack.c.l.b16 %v1874
        %v1907 = vunpack.c.l.b16 %v1875
        %v1908 = vunpack.c.l.b16 %v1876
        %v1909 = vunpack.c.l.b16 %v1877
        %v1910 = vunpack.c.l.b16 %v1878
        %v1911 = vunpack.c.l.b16 %v1879
        %v1912 = vpack.c.b16 %v1897, %v1896
        %v1913 = vpack.c.b16 %v1899, %v1898
        %v1914 = vpack.c.b16 %v1901, %v1900
        %v1915 = vpack.c.b16 %v1903, %v1902
        %v1916 = vpack.c.b16 %v1905, %v1904
        %v1917 = vpack.c.b16 %v1907, %v1906
        %v1918 = vpack.c.b16 %v1909, %v1908
        %v1919 = vpack.c.b16 %v1911, %v1910
        %1928 = vmatprep.subr.bf16.mxu0 0
        %1929 = vmatpush1.bf16.msra.mxu0 %v1919
        %1930 = vmatprep.subr.bf16.mxu0 0
        %1931 = vmatpush1.bf16.msra.mxu0 %v1918
        %1932 = vmatprep.subr.bf16.mxu0 0
        %1933 = vmatpush1.bf16.msra.mxu0 %v1917
        %1934 = vmatprep.subr.bf16.mxu0 0
        %1935 = vmatpush1.bf16.msra.mxu0 %v1916
        %1936 = vmatprep.subr.bf16.mxu0 0
        %1937 = vmatpush1.bf16.msra.mxu0 %v1915
        %1938 = vmatprep.subr.bf16.mxu0 0
        %1939 = vmatpush1.bf16.msra.mxu0 %v1914
        %1940 = vmatprep.subr.bf16.mxu0 0
        %1941 = vmatpush1.bf16.msra.mxu0 %v1913
        %1942 = vmatprep.subr.bf16.mxu0 0
        %1943 = vmatpush1.bf16.msra.mxu0 %v1912
        %1944 = vmatprep.subr.bf16.mxu0 0
        %1945 = vmatpush2.bf16.msra.mxu0 0
        %1946 = vmatprep.subr.bf16.mxu0 0
        %1947 = vmatpush2.bf16.msra.mxu0 0
        %1948 = vmatprep.subr.bf16.mxu0 0
        %1949 = vmatpush2.bf16.msra.mxu0 0
        %1950 = vmatprep.subr.bf16.mxu0 0
        %1951 = vmatpush2.bf16.msra.mxu0 0
        %1952 = vmatprep.subr.bf16.mxu0 0
        %1953 = vmatpush2.bf16.msra.mxu0 0
        %1954 = vmatprep.subr.bf16.mxu0 0
        %1955 = vmatpush2.bf16.msra.mxu0 0
        %1956 = vmatprep.subr.bf16.mxu0 0
        %1957 = vmatpush2.bf16.msra.mxu0 0
        %1958 = vmatprep.subr.bf16.mxu0 0
        %1959 = vmatpush2.bf16.msra.mxu0 0
        %1960 = vmatprep.mubr.bf16.mxu0 0
        %1961 = vmatmul.mubr.bf16.gmra.mxu0 %v1856
        %v1962 = vpop.f32.mrf.mxu0
        %v1963 = vadd.f32 0.0, %v1962
        %v1964 = vpop.f32.mrf.mxu0
        %v1965 = vpop.f32.mrf.mxu0
        %v1966 = vadd.f32 0.0, %v1965
        %v1967 = vpop.f32.mrf.mxu0
        %1968 = vmatprep.mubr.bf16.mxu0 0
        %1969 = vmatmul.mubr.bf16.gmra.mxu0 %v1857
        %v1970 = vpop.f32.mrf.mxu0
        %v1971 = vadd.f32 0.0, %v1970
        %v1972 = vpop.f32.mrf.mxu0
        %v1973 = vpop.f32.mrf.mxu0
        %v1974 = vadd.f32 0.0, %v1973
        %v1975 = vpop.f32.mrf.mxu0
        %1976 = vmatprep.mubr.bf16.mxu0 0
        %1977 = vmatmul.mubr.bf16.gmra.mxu0 %v1858
        %v1978 = vpop.f32.mrf.mxu0
        %v1979 = vadd.f32 0.0, %v1978
        %v1980 = vpop.f32.mrf.mxu0
        %v1981 = vpop.f32.mrf.mxu0
        %v1982 = vadd.f32 0.0, %v1981
        %v1983 = vpop.f32.mrf.mxu0
        %1984 = vmatprep.mubr.bf16.mxu0 0
        %1985 = vmatmul.mubr.bf16.gmra.mxu0 %v1859
        %v1986 = vpop.f32.mrf.mxu0
        %v1987 = vadd.f32 0.0, %v1986
        %v1988 = vpop.f32.mrf.mxu0
        %v1989 = vpop.f32.mrf.mxu0
        %v1990 = vadd.f32 0.0, %v1989
        %v1991 = vpop.f32.mrf.mxu0
        %1992 = vmatprep.mubr.bf16.mxu0 0
        %1993 = vmatmul.mubr.bf16.gmra.mxu0 %v1860
        %v1994 = vpop.f32.mrf.mxu0
        %v1995 = vadd.f32 0.0, %v1994
        %v1996 = vpop.f32.mrf.mxu0
        %v1997 = vpop.f32.mrf.mxu0
        %v1998 = vadd.f32 0.0, %v1997
        %v1999 = vpop.f32.mrf.mxu0
        %2000 = vmatprep.mubr.bf16.mxu0 0
        %2001 = vmatmul.mubr.bf16.gmra.mxu0 %v1861
        %v2002 = vpop.f32.mrf.mxu0
        %v2003 = vadd.f32 0.0, %v2002
        %v2004 = vpop.f32.mrf.mxu0
        %v2005 = vpop.f32.mrf.mxu0
        %v2006 = vadd.f32 0.0, %v2005
        %v2007 = vpop.f32.mrf.mxu0
        %2008 = vmatprep.mubr.bf16.mxu0 0
        %2009 = vmatmul.mubr.bf16.gmra.mxu0 %v1862
        %v2010 = vpop.f32.mrf.mxu0
        %v2011 = vadd.f32 0.0, %v2010
        %v2012 = vpop.f32.mrf.mxu0
        %v2013 = vpop.f32.mrf.mxu0
        %v2014 = vadd.f32 0.0, %v2013
        %v2015 = vpop.f32.mrf.mxu0
        %2016 = vmatprep.mubr.bf16.mxu0 0
        %2017 = vmatmul.mubr.bf16.gmra.mxu0 %v1863
        %v2018 = vpop.f32.mrf.mxu0
        %v2019 = vadd.f32 0.0, %v2018
        %v2020 = vpop.f32.mrf.mxu0
        %v2021 = vpop.f32.mrf.mxu0
        %v2022 = vadd.f32 0.0, %v2021
        %v2023 = vpop.f32.mrf.mxu0
        %2024 = vdwg.mxu0
        %v2025 = vadd.f32 %v1800, %v1963
        %v2026 = vadd.f32 %v1801, %v1966
        %v2027 = vadd.f32 %v1802, %v1971
        %v2028 = vadd.f32 %v1803, %v1974
        %v2029 = vadd.f32 %v1804, %v1979
        %v2030 = vadd.f32 %v1805, %v1982
        %v2031 = vadd.f32 %v1806, %v1987
        %v2032 = vadd.f32 %v1807, %v1990
        %v2033 = vadd.f32 %v1808, %v1995
        %v2034 = vadd.f32 %v1809, %v1998
        %v2035 = vadd.f32 %v1810, %v2003
        %v2036 = vadd.f32 %v1811, %v2006
        %v2037 = vadd.f32 %v1812, %v2011
        %v2038 = vadd.f32 %v1813, %v2014
        %v2039 = vadd.f32 %v1814, %v2019
        %v2040 = vadd.f32 %v1815, %v2022
        %v2041 = vrot.slane %v1607, 4
        %v2042 = vrot.slane %v1610, 4
        %v2043 = vrot.slane %v1613, 4
        %v2044 = vrot.slane %v1616, 4
        %v2045 = vrot.slane %v1619, 4
        %v2046 = vrot.slane %v1622, 4
        %v2047 = vrot.slane %v1625, 4
        %v2048 = vrot.slane %v1628, 4
        %v2049 = vrot.slane %v1608, 4
        %v2050 = vrot.slane %v1611, 4
        %v2051 = vrot.slane %v1614, 4
        %v2052 = vrot.slane %v1617, 4
        %v2053 = vrot.slane %v1620, 4
        %v2054 = vrot.slane %v1623, 4
        %v2055 = vrot.slane %v1626, 4
        %v2056 = vrot.slane %v1629, 4
        %v2057 = vrot.slane %v1609, 4
        %v2058 = vrot.slane %v1612, 4
        %v2059 = vrot.slane %v1615, 4
        %v2060 = vrot.slane %v1618, 4
        %v2061 = vrot.slane %v1621, 4
        %v2062 = vrot.slane %v1624, 4
        %v2063 = vrot.slane %v1627, 4
        %v2064 = vrot.slane %v1630, 4
        %v2065 = vsel %vm690, %v2049, %v2057
        %v2066 = vsel %vm690, %v2050, %v2058
        %v2067 = vsel %vm690, %v2051, %v2059
        %v2068 = vsel %vm690, %v2052, %v2060
        %v2069 = vsel %vm690, %v2053, %v2061
        %v2070 = vsel %vm690, %v2054, %v2062
        %v2071 = vsel %vm690, %v2055, %v2063
        %v2072 = vsel %vm690, %v2056, %v2064
        %v2073 = vsel %vm690, %v2041, %v2049
        %v2074 = vsel %vm690, %v2042, %v2050
        %v2075 = vsel %vm690, %v2043, %v2051
        %v2076 = vsel %vm690, %v2044, %v2052
        %v2077 = vsel %vm690, %v2045, %v2053
        %v2078 = vsel %vm690, %v2046, %v2054
        %v2079 = vsel %vm690, %v2047, %v2055
        %v2080 = vsel %vm690, %v2048, %v2056
        %v2081 = vpack.c.bf16 %v2065, %v2073
        %v2082 = vpack.c.bf16 %v2066, %v2074
        %v2083 = vpack.c.bf16 %v2067, %v2075
        %v2084 = vpack.c.bf16 %v2068, %v2076
        %v2085 = vpack.c.bf16 %v2069, %v2077
        %v2086 = vpack.c.bf16 %v2070, %v2078
        %v2087 = vpack.c.bf16 %v2071, %v2079
        %v2088 = vpack.c.bf16 %v2072, %v2080
        %v2089 = vld [vmem:[#allocation5 + $0x200] sm:$0xf]
        %v2090 = vld [vmem:[#allocation5 + $0x204] sm:$0xf]
        %v2091 = vld [vmem:[#allocation5 + $0x208] sm:$0xf]
        %v2092 = vld [vmem:[#allocation5 + $0x20c] sm:$0xf]
        %v2093 = vld [vmem:[#allocation5 + $0x210] sm:$0xf]
        %v2094 = vld [vmem:[#allocation5 + $0x214] sm:$0xf]
        %v2095 = vld [vmem:[#allocation5 + $0x218] sm:$0xf]
        %v2096 = vld [vmem:[#allocation5 + $0x21c] sm:$0xf]
        %v2097 = vld [vmem:[#allocation5 + $0x220] sm:$0xf]
        %v2098 = vld [vmem:[#allocation5 + $0x224] sm:$0xf]
        %v2099 = vld [vmem:[#allocation5 + $0x228] sm:$0xf]
        %v2100 = vld [vmem:[#allocation5 + $0x22c] sm:$0xf]
        %v2101 = vld [vmem:[#allocation5 + $0x230] sm:$0xf]
        %v2102 = vld [vmem:[#allocation5 + $0x234] sm:$0xf]
        %v2103 = vld [vmem:[#allocation5 + $0x238] sm:$0xf]
        %v2104 = vld [vmem:[#allocation5 + $0x23c] sm:$0xf]
        %v2121 = vunpack.c.l.b16 %v2089
        %v2122 = vunpack.c.l.b16 %v2090
        %v2123 = vunpack.c.l.b16 %v2091
        %v2124 = vunpack.c.l.b16 %v2092
        %v2125 = vunpack.c.l.b16 %v2093
        %v2126 = vunpack.c.l.b16 %v2094
        %v2127 = vunpack.c.l.b16 %v2095
        %v2128 = vunpack.c.l.b16 %v2096
        %v2129 = vunpack.c.l.b16 %v2097
        %v2130 = vunpack.c.l.b16 %v2098
        %v2131 = vunpack.c.l.b16 %v2099
        %v2132 = vunpack.c.l.b16 %v2100
        %v2133 = vunpack.c.l.b16 %v2101
        %v2134 = vunpack.c.l.b16 %v2102
        %v2135 = vunpack.c.l.b16 %v2103
        %v2136 = vunpack.c.l.b16 %v2104
        %v2137 = vpack.c.b16 %v2122, %v2121
        %v2138 = vpack.c.b16 %v2124, %v2123
        %v2139 = vpack.c.b16 %v2126, %v2125
        %v2140 = vpack.c.b16 %v2128, %v2127
        %v2141 = vpack.c.b16 %v2130, %v2129
        %v2142 = vpack.c.b16 %v2132, %v2131
        %v2143 = vpack.c.b16 %v2134, %v2133
        %v2144 = vpack.c.b16 %v2136, %v2135
        %2153 = vmatprep.subr.bf16.mxu0 0
        %2154 = vmatpush1.bf16.msra.mxu0 %v2144
        %2155 = vmatprep.subr.bf16.mxu0 0
        %2156 = vmatpush1.bf16.msra.mxu0 %v2143
        %2157 = vmatprep.subr.bf16.mxu0 0
        %2158 = vmatpush1.bf16.msra.mxu0 %v2142
        %2159 = vmatprep.subr.bf16.mxu0 0
        %2160 = vmatpush1.bf16.msra.mxu0 %v2141
        %2161 = vmatprep.subr.bf16.mxu0 0
        %2162 = vmatpush1.bf16.msra.mxu0 %v2140
        %2163 = vmatprep.subr.bf16.mxu0 0
        %2164 = vmatpush1.bf16.msra.mxu0 %v2139
        %2165 = vmatprep.subr.bf16.mxu0 0
        %2166 = vmatpush1.bf16.msra.mxu0 %v2138
        %2167 = vmatprep.subr.bf16.mxu0 0
        %2168 = vmatpush1.bf16.msra.mxu0 %v2137
        %2169 = vmatprep.subr.bf16.mxu0 0
        %2170 = vmatpush2.bf16.msra.mxu0 0
        %2171 = vmatprep.subr.bf16.mxu0 0
        %2172 = vmatpush2.bf16.msra.mxu0 0
        %2173 = vmatprep.subr.bf16.mxu0 0
        %2174 = vmatpush2.bf16.msra.mxu0 0
        %2175 = vmatprep.subr.bf16.mxu0 0
        %2176 = vmatpush2.bf16.msra.mxu0 0
        %2177 = vmatprep.subr.bf16.mxu0 0
        %2178 = vmatpush2.bf16.msra.mxu0 0
        %2179 = vmatprep.subr.bf16.mxu0 0
        %2180 = vmatpush2.bf16.msra.mxu0 0
        %2181 = vmatprep.subr.bf16.mxu0 0
        %2182 = vmatpush2.bf16.msra.mxu0 0
        %2183 = vmatprep.subr.bf16.mxu0 0
        %2184 = vmatpush2.bf16.msra.mxu0 0
        %2185 = vmatprep.mubr.bf16.mxu0 0
        %2186 = vmatmul.mubr.bf16.gmra.mxu0 %v2081
        %v2187 = vpop.f32.mrf.mxu0
        %v2188 = vadd.f32 0.0, %v2187
        %v2189 = vpop.f32.mrf.mxu0
        %v2190 = vpop.f32.mrf.mxu0
        %v2191 = vadd.f32 0.0, %v2190
        %v2192 = vpop.f32.mrf.mxu0
        %2193 = vmatprep.mubr.bf16.mxu0 0
        %2194 = vmatmul.mubr.bf16.gmra.mxu0 %v2082
        %v2195 = vpop.f32.mrf.mxu0
        %v2196 = vadd.f32 0.0, %v2195
        %v2197 = vpop.f32.mrf.mxu0
        %v2198 = vpop.f32.mrf.mxu0
        %v2199 = vadd.f32 0.0, %v2198
        %v2200 = vpop.f32.mrf.mxu0
        %2201 = vmatprep.mubr.bf16.mxu0 0
        %2202 = vmatmul.mubr.bf16.gmra.mxu0 %v2083
        %v2203 = vpop.f32.mrf.mxu0
        %v2204 = vadd.f32 0.0, %v2203
        %v2205 = vpop.f32.mrf.mxu0
        %v2206 = vpop.f32.mrf.mxu0
        %v2207 = vadd.f32 0.0, %v2206
        %v2208 = vpop.f32.mrf.mxu0
        %2209 = vmatprep.mubr.bf16.mxu0 0
        %2210 = vmatmul.mubr.bf16.gmra.mxu0 %v2084
        %v2211 = vpop.f32.mrf.mxu0
        %v2212 = vadd.f32 0.0, %v2211
        %v2213 = vpop.f32.mrf.mxu0
        %v2214 = vpop.f32.mrf.mxu0
        %v2215 = vadd.f32 0.0, %v2214
        %v2216 = vpop.f32.mrf.mxu0
        %2217 = vmatprep.mubr.bf16.mxu0 0
        %2218 = vmatmul.mubr.bf16.gmra.mxu0 %v2085
        %v2219 = vpop.f32.mrf.mxu0
        %v2220 = vadd.f32 0.0, %v2219
        %v2221 = vpop.f32.mrf.mxu0
        %v2222 = vpop.f32.mrf.mxu0
        %v2223 = vadd.f32 0.0, %v2222
        %v2224 = vpop.f32.mrf.mxu0
        %2225 = vmatprep.mubr.bf16.mxu0 0
        %2226 = vmatmul.mubr.bf16.gmra.mxu0 %v2086
        %v2227 = vpop.f32.mrf.mxu0
        %v2228 = vadd.f32 0.0, %v2227
        %v2229 = vpop.f32.mrf.mxu0
        %v2230 = vpop.f32.mrf.mxu0
        %v2231 = vadd.f32 0.0, %v2230
        %v2232 = vpop.f32.mrf.mxu0
        %2233 = vmatprep.mubr.bf16.mxu0 0
        %2234 = vmatmul.mubr.bf16.gmra.mxu0 %v2087
        %v2235 = vpop.f32.mrf.mxu0
        %v2236 = vadd.f32 0.0, %v2235
        %v2237 = vpop.f32.mrf.mxu0
        %v2238 = vpop.f32.mrf.mxu0
        %v2239 = vadd.f32 0.0, %v2238
        %v2240 = vpop.f32.mrf.mxu0
        %2241 = vmatprep.mubr.bf16.mxu0 0
        %2242 = vmatmul.mubr.bf16.gmra.mxu0 %v2088
        %v2243 = vpop.f32.mrf.mxu0
        %v2244 = vadd.f32 0.0, %v2243
        %v2245 = vpop.f32.mrf.mxu0
        %v2246 = vpop.f32.mrf.mxu0
        %v2247 = vadd.f32 0.0, %v2246
        %v2248 = vpop.f32.mrf.mxu0
        %2249 = vdwg.mxu0
        %v2250 = vadd.f32 %v2025, %v2188
        %v2251 = vadd.f32 %v2026, %v2191
        %v2252 = vadd.f32 %v2027, %v2196
        %v2253 = vadd.f32 %v2028, %v2199
        %v2254 = vadd.f32 %v2029, %v2204
        %v2255 = vadd.f32 %v2030, %v2207
        %v2256 = vadd.f32 %v2031, %v2212
        %v2257 = vadd.f32 %v2032, %v2215
        %v2258 = vadd.f32 %v2033, %v2220
        %v2259 = vadd.f32 %v2034, %v2223
        %v2260 = vadd.f32 %v2035, %v2228
        %v2261 = vadd.f32 %v2036, %v2231
        %v2262 = vadd.f32 %v2037, %v2236
        %v2263 = vadd.f32 %v2038, %v2239
        %v2264 = vadd.f32 %v2039, %v2244
        %v2265 = vadd.f32 %v2040, %v2247
        %v2266 = vld [vmem:[%s230] sm:$0x1]
        %v2268 = vlaneseq
        %v2269 = vshrl.u32 %v2268, 7
        %v2270 = vsub.s32 0, %v2269
        %v2271 = vrot.slane %v2266, %v2270
        %v2273 = vadd.f32 %v2250, %v2271
        %v2274 = vadd.f32 %v2251, %v2271
        %v2275 = vadd.f32 %v2252, %v2271
        %v2276 = vadd.f32 %v2253, %v2271
        %v2277 = vadd.f32 %v2254, %v2271
        %v2278 = vadd.f32 %v2255, %v2271
        %v2279 = vadd.f32 %v2256, %v2271
        %v2280 = vadd.f32 %v2257, %v2271
        %v2281 = vadd.f32 %v2258, %v2271
        %v2282 = vadd.f32 %v2259, %v2271
        %v2283 = vadd.f32 %v2260, %v2271
        %v2284 = vadd.f32 %v2261, %v2271
        %v2285 = vadd.f32 %v2262, %v2271
        %v2286 = vadd.f32 %v2263, %v2271
        %v2287 = vadd.f32 %v2264, %v2271
        %v2288 = vadd.f32 %v2265, %v2271
        %v2289 = vmax.f32 %v2273, 0.0
        %v2290 = vmax.f32 %v2274, 0.0
        %v2291 = vmax.f32 %v2275, 0.0
        %v2292 = vmax.f32 %v2276, 0.0
        %v2293 = vmax.f32 %v2277, 0.0
        %v2294 = vmax.f32 %v2278, 0.0
        %v2295 = vmax.f32 %v2279, 0.0
        %v2296 = vmax.f32 %v2280, 0.0
        %v2297 = vmax.f32 %v2281, 0.0
        %v2298 = vmax.f32 %v2282, 0.0
        %v2299 = vmax.f32 %v2283, 0.0
        %v2300 = vmax.f32 %v2284, 0.0
        %v2301 = vmax.f32 %v2285, 0.0
        %v2302 = vmax.f32 %v2286, 0.0
        %v2303 = vmax.f32 %v2287, 0.0
        %v2304 = vmax.f32 %v2288, 0.0
        %2305 = vst [vmem:[%s227] sm:$0xff] %v2289
        %2306 = vst [vmem:[%s227 + $0x8] sm:$0xff] %v2290
        %2307 = vst [vmem:[%s227 + $0x10] sm:$0xff] %v2291
        %2308 = vst [vmem:[%s227 + $0x18] sm:$0xff] %v2292
        %2309 = vst [vmem:[%s227 + $0x20] sm:$0xff] %v2293
        %2310 = vst [vmem:[%s227 + $0x28] sm:$0xff] %v2294
        %2311 = vst [vmem:[%s227 + $0x30] sm:$0xff] %v2295
        %2312 = vst [vmem:[%s227 + $0x38] sm:$0xff] %v2296
        %2313 = vst [vmem:[%s227 + $0x40] sm:$0xff] %v2297
        %2314 = vst [vmem:[%s227 + $0x48] sm:$0xff] %v2298
        %2315 = vst [vmem:[%s227 + $0x50] sm:$0xff] %v2299
        %2316 = vst [vmem:[%s227 + $0x58] sm:$0xff] %v2300
        %2317 = vst [vmem:[%s227 + $0x60] sm:$0xff] %v2301
        %2318 = vst [vmem:[%s227 + $0x68] sm:$0xff] %v2302
        %2319 = vst [vmem:[%s227 + $0x70] sm:$0xff] %v2303
        %2320 = vst [vmem:[%s227 + $0x78] sm:$0xff] %v2304
        %s2321 = sand.u32 %s128, 1
        %s2322 = scalar_lea.sflag [#allocation4], %s2321
        %s2323 = sand.u32 %s128, 1
        %s2324 = smul.addr %s2323, 128
        %s2325 = scalar_lea.vmem [#allocation7], %s2324
        // Predicated region
        $region41: #{tpu_custom_call.1} parent=31 // pred_check
          %p2326 = pneg %p138
        $region42: #{tpu_custom_call.1} parent=31 // pred_check_branch
          %2328 = sbr.rel (%p2326) target = $region44
        $region43: #{tpu_custom_call.1} parent=31 // pred_region
          %s2329 = smul.u32 8, %s26
          %s2331 = ssub.s32 2048, 2048
          %2332 = vsyncadd %s2322, %s2331
          %s2333 = smul.addr %s2329, 2
          %s2334 = sadd.s32 %s25, %s2333
          %s2335 = smul.addr %s24, 32
          %s2336 = sadd.s32 %s2334, %s2335
          %s2337 = smul.addr %s2336, 128
          %s2338 = scalar_lea.hbm %s3, %s2337
          %s2339 = sshll.u32 %s2325, 4
          %s2340 = int_to_ptr.vmem [resolvable:$true] %s2339
          %2345 = dma.vmem_to_hbm [thread:$0]  %s2340, 2048, %s2338, %s2322, 128, 128, 8
        $region44: #{tpu_custom_call.1} parent=31 // pred_fallthru
          _
      $region32: #{tpu_custom_call.1} parent=5 // pred_fallthru
        _
      %p2346 = scmp.le.s32.totalorder 2, %s14
      // Predicated region
      $region45: #{tpu_custom_call.1} parent=5 // pred_check
        %p2347 = pneg %p2346
      $region46: #{tpu_custom_call.1} parent=5 // pred_check_branch
        %2349 = sbr.rel (%p2347) target = $region48
      $region47: #{tpu_custom_call.1} parent=5 // pred_region
        %s2350 = ssub.s32 %s14, 2
        // Predicated region
        $region49: #{tpu_custom_call.1} parent=47 // pred_check
          %p2351 = pneg %p144
        $region50: #{tpu_custom_call.1} parent=47 // pred_check_branch
          %2353 = sbr.rel (%p2351) target = $region52
        $region51: #{tpu_custom_call.1} parent=47 // pred_region
          %s2354 = sand.u32 %s129, 1
          %s2355 = scalar_lea.sflag [#allocation4], %s2354
          %s2356 = sand.u32 %s129, 1
          %s2357 = smul.addr %s2356, 128
          %s2358 = scalar_lea.vmem [#allocation7], %s2357
          %2359 = dma.done %s2355, 2048
        $region52: #{tpu_custom_call.1} parent=47 // pred_fallthru
          _
      $region48: #{tpu_custom_call.1} parent=5 // pred_fallthru
        _
    $region6: #{tpu_custom_call.1} parent=1 // loop_footer
      %s18 = sadd.s32 1, %s14
    $region7: #{tpu_custom_call.1} parent=1 // loop_footer_branch
      %13 = sbr.rel target = $region3
    $region8: #{tpu_custom_call.1} parent=1 // loop_exit
      _
    %2360 = vsyncpa [#allocation3], 1
    %s2361 = scalar_lea.sflag [#allocation3], 1
    %2362 = vsyncpa %s2361, 1
    %2363 = vsyncpa [#allocation6], 1
    %2364 = vsyncpa [#allocation4], 1
    %s2365 = scalar_lea.sflag [#allocation4], 1
    %2366 = vsyncpa %s2365, 1

// kernel: tpu_custom_call.1
$region0: #{tpu_custom_call.1}
  #allocation0 [shape = 'u32[]', space=smem, size = 0x4, offset = 0x4, fixed_abs, tag = 'smem constant byte address 0x4 - core index']
  #allocation1 [shape = 'u32[144,128]{1,0:T(1,128)}', space=vmem, size = 0x12000, scoped, tag = 'internal scratch']
  %s0 = inlined_call_operand.hbm [shape: bf16[2,20,24,128], index: 0, kind: input, shape index: {}]
  %s1 = inlined_call_operand.hbm [shape: bf16[1152,128], index: 1, kind: input, shape index: {}]
  %s2 = inlined_call_operand.vmem [shape: f32[1,128], index: 2, kind: input, shape index: {}]
  %s3 = inlined_call_operand.hbm [shape: f32[2,16,16,128], index: 3, kind: output, shape index: {}]
  %s4 = sld [smem:[#allocation0]]
  $region53: #{tpu_custom_call.1} parent=0
    _
  %s6 = ssub.s32 1, %s4
  %s7 = scalar_select 0, %s6, %s4
  $region1: #{tpu_custom_call.1} parent=0
    #allocation2 [shape = 'u8[245760]{0}', space=vmem, size = 0x3c000, scoped, tag = 'input window, operand 0']
    #allocation3 [shape = 's32[2]{0}', space=sflag, size = 0x8, scoped, tag = 'scoped memory for tpu_custom_call.1']
    #allocation4 [shape = 's32[2]{0}', space=sflag, size = 0x8, scoped, tag = 'scoped memory for tpu_custom_call.1']
    #allocation5 [shape = 'u8[294912]{0}', space=vmem, size = 0x48000, scoped, tag = 'input window, operand 1, single buffered']
    #allocation6 [shape = 's32[1]{0}', space=sflag, size = 0x4, scoped, tag = 'scoped memory for tpu_custom_call.1']
    #allocation7 [shape = 'u8[131072]{0}', space=vmem, size = 0x20000, scoped, tag = 'output window, operand 0']
    %8 = vsyncpa [#allocation3], 0
    %s9 = scalar_lea.sflag [#allocation3], 1
    %10 = vsyncpa %s9, 0
    %11 = vsyncpa [#allocation6], 0
    %12 = vsyncpa [#allocation4], 0
    %s13 = scalar_lea.sflag [#allocation4], 1
    %14 = vsyncpa %s13, 0
    loop: start=0, step=1, limit=6
    $region2: #{tpu_custom_call.1} parent=1 // loop_pre_header
      _
    $region3: #{tpu_custom_call.1} parent=1 // loop_header
      %s16 = sphi 0, %s20
      %p17 = scmp.ge.s32.totalorder %s16, 6
      %s23 = sphi 0, %s42
      %s24 = sphi 0, %s38
      %s25 = sphi 0, %s34
      %s26 = sphi 0, %s23
      %s27 = sphi 0, %s24
      %s28 = sphi 0, %s25
      %s29 = sphi 0, %s26
      %s30 = sphi 0, %s27
      %s31 = sphi 0, %s28
      %s45 = sphi 0, %s47
      %s48 = sphi 0, %s45
      %s49 = sphi 0, %s48
      %s65 = sphi 0, %s49
      %s71 = sphi 0, %s73
      %s74 = sphi 0, %s71
      %s75 = sphi 0, %s74
      %s91 = sphi 0, %s75
      %s97 = sphi 0, %s99
      %s100 = sphi 0, %s97
      %s101 = sphi 0, %s100
      %s117 = sphi 0, %s101
      %s127 = sphi 0, %s129
      %s130 = sphi 0, %s127
      %s131 = sphi 0, %s130
      %s147 = sphi 0, %s131
    $region4: #{tpu_custom_call.1} parent=1 // loop_header_branch
      %19 = sbr.rel (%p17) target = $region8
    $region5: #{tpu_custom_call.1} parent=1 // loop_body
      %s21 = ssub.s32 %s16, 1
      %s22 = ssub.s32 %s16, 2
      %s32 = sadd.s32 1, %s25
      %p33 = scmp.ge.s32.totalorder %s32, 2
      %s34 = scalar_select %p33, 0, %s32
      %s35 = sadd.s32 1, %s24
      %s36 = scalar_select %p33, %s35, %s24
      %p37 = scmp.ge.s32.totalorder %s36, 1
      %s38 = scalar_select %p37, 0, %s36
      %s39 = sadd.s32 1, %s23
      %s40 = scalar_select %p37, %s39, %s23
      %p41 = scmp.ge.s32.totalorder %s40, 2
      %s42 = scalar_select %p41, 0, %s40
      %s43 = ssub.s32 %s23, %s42
      %p44 = scmp.eq.s32.totalorder %s43, 0
      %s46 = sadd.s32 %s45, 1
      %s47 = scalar_select %p44, %s45, %s46
      %p50 = pneg %p44
      %p51 = scmp.eq.s32.totalorder %s16, 3
      %p52 = por %p50, %p51
      %p53 = scmp.ne.s32.totalorder %s45, %s48
      %p54 = scmp.eq.s32.totalorder %s16, 0
      %p55 = por %p53, %p54
      %p56 = scmp.ne.s32.totalorder %s45, %s48
      %p57 = scmp.eq.s32.totalorder %s21, 3
      %p58 = por %p56, %p57
      %p59 = scmp.ne.s32.totalorder %s48, %s49
      %p60 = scmp.eq.s32.totalorder %s21, 0
      %p61 = por %p59, %p60
      %p62 = scmp.ne.s32.totalorder %s48, %s49
      %p63 = scmp.eq.s32.totalorder %s22, 3
      %p64 = por %p62, %p63
      %p66 = scmp.ne.s32.totalorder %s49, %s65
      %p67 = scmp.eq.s32.totalorder %s22, 0
      %p68 = por %p66, %p67
      %s69 = ssub.s32 %s24, %s38
      %p70 = scmp.eq.s32.totalorder %s69, 0
      %s72 = sadd.s32 %s71, 1
      %s73 = scalar_select %p70, %s71, %s72
      %p76 = pneg %p70
      %p77 = scmp.eq.s32.totalorder %s16, 3
      %p78 = por %p76, %p77
      %p79 = scmp.ne.s32.totalorder %s71, %s74
      %p80 = scmp.eq.s32.totalorder %s16, 0
      %p81 = por %p79, %p80
      %p82 = scmp.ne.s32.totalorder %s71, %s74
      %p83 = scmp.eq.s32.totalorder %s21, 3
      %p84 = por %p82, %p83
      %p85 = scmp.ne.s32.totalorder %s74, %s75
      %p86 = scmp.eq.s32.totalorder %s21, 0
      %p87 = por %p85, %p86
      %p88 = scmp.ne.s32.totalorder %s74, %s75
      %p89 = scmp.eq.s32.totalorder %s22, 3
      %p90 = por %p88, %p89
      %p92 = scmp.ne.s32.totalorder %s75, %s91
      %p93 = scmp.eq.s32.totalorder %s22, 0
      %p94 = por %p92, %p93
      %s95 = ssub.s32 %s24, %s38
      %p96 = scmp.eq.s32.totalorder %s95, 0
      %s98 = sadd.s32 %s97, 1
      %s99 = scalar_select %p96, %s97, %s98
      %p102 = pneg %p96
      %p103 = scmp.eq.s32.totalorder %s16, 3
      %p104 = por %p102, %p103
      %p105 = scmp.ne.s32.totalorder %s97, %s100
      %p106 = scmp.eq.s32.totalorder %s16, 0
      %p107 = por %p105, %p106
      %p108 = scmp.ne.s32.totalorder %s97, %s100
      %p109 = scmp.eq.s32.totalorder %s21, 3
      %p110 = por %p108, %p109
      %p111 = scmp.ne.s32.totalorder %s100, %s101
      %p112 = scmp.eq.s32.totalorder %s21, 0
      %p113 = por %p111, %p112
      %p114 = scmp.ne.s32.totalorder %s100, %s101
      %p115 = scmp.eq.s32.totalorder %s22, 3
      %p116 = por %p114, %p115
      %p118 = scmp.ne.s32.totalorder %s101, %s117
      %p119 = scmp.eq.s32.totalorder %s22, 0
      %p120 = por %p118, %p119
      %s121 = ssub.s32 %s23, %s42
      %s122 = ssub.s32 %s25, %s34
      %s123 = sor.u32 %s121, %s122
      %s124 = ssub.s32 %s24, %s38
      %s125 = sor.u32 %s123, %s124
      %p126 = scmp.eq.s32.totalorder %s125, 0
      %s128 = sadd.s32 %s127, 1
      %s129 = scalar_select %p126, %s127, %s128
      %p132 = pneg %p126
      %p133 = scmp.eq.s32.totalorder %s16, 3
      %p134 = por %p132, %p133
      %p135 = scmp.ne.s32.totalorder %s127, %s130
      %p136 = scmp.eq.s32.totalorder %s16, 0
      %p137 = por %p135, %p136
      %p138 = scmp.ne.s32.totalorder %s127, %s130
      %p139 = scmp.eq.s32.totalorder %s21, 3
      %p140 = por %p138, %p139
      %p141 = scmp.ne.s32.totalorder %s130, %s131
      %p142 = scmp.eq.s32.totalorder %s21, 0
      %p143 = por %p141, %p142
      %p144 = scmp.ne.s32.totalorder %s130, %s131
      %p145 = scmp.eq.s32.totalorder %s22, 3
      %p146 = por %p144, %p145
      %p148 = scmp.ne.s32.totalorder %s131, %s147
      %p149 = scmp.eq.s32.totalorder %s22, 0
      %p150 = por %p148, %p149
      %p151 = scmp.le.s32.totalorder 1, %s16
      %p152 = scmp.lt.s32.totalorder %s16, 5
      %p153 = pnand %p151, %p152
      %p154 = pneg %p153
      // Predicated region
      $region9: #{tpu_custom_call.1} parent=5 // pred_check
        _
      $region10: #{tpu_custom_call.1} parent=5 // pred_check_branch
        %156 = sbr.rel (%p153) target = $region12
      $region11: #{tpu_custom_call.1} parent=5 // pred_region
        %s157 = ssub.s32 %s16, 1
        // Predicated region
        $region13: #{tpu_custom_call.1} parent=11 // pred_check
          %p158 = pneg %p87
        $region14: #{tpu_custom_call.1} parent=11 // pred_check_branch
          %160 = sbr.rel (%p158) target = $region16
        $region15: #{tpu_custom_call.1} parent=11 // pred_region
          %s162 = ssub.s32 9216, 9216
          %163 = vsyncadd [#allocation6], %s162
          %s164 = smul.addr %s27, 64
          %s165 = scalar_lea.hbm %s1, %s164
          %s166 = sshll.u32 [#allocation5], 4
          %s167 = int_to_ptr.vmem [resolvable:$true] %s166
          %172 = dma.hbm_to_vmem [thread:$0]  %s165, 9216, %s167, [#allocation6], 64, 64, 4
        $region16: #{tpu_custom_call.1} parent=11 // pred_fallthru
          _
        // Predicated region
        $region17: #{tpu_custom_call.1} parent=11 // pred_check
          %p173 = pneg %p113
        $region18: #{tpu_custom_call.1} parent=11 // pred_check_branch
          %175 = sbr.rel (%p173) target = $region20
        $region19: #{tpu_custom_call.1} parent=11 // pred_region
          %p176 = scmp.lt.s32.totalorder %s27, 0
          %s177 = scalar_select %p176, %s27, 0
          %s178 = scalar_lea.vmem %s2, %s177
        $region20: #{tpu_custom_call.1} parent=11 // pred_fallthru
          _
      $region12: #{tpu_custom_call.1} parent=5 // pred_fallthru
        _
      %p179 = scmp.lt.s32.totalorder %s16, 4
      // Predicated region
      $region21: #{tpu_custom_call.1} parent=5 // pred_check
        %p180 = pneg %p179
      $region22: #{tpu_custom_call.1} parent=5 // pred_check_branch
        %182 = sbr.rel (%p180) target = $region24
      $region23: #{tpu_custom_call.1} parent=5 // pred_region
        // Predicated region
        $region25: #{tpu_custom_call.1} parent=23 // pred_check
          %p183 = pneg %p55
        $region26: #{tpu_custom_call.1} parent=23 // pred_check_branch
          %185 = sbr.rel (%p183) target = $region28
        $region27: #{tpu_custom_call.1} parent=23 // pred_region
          %s186 = sand.u32 %s45, 1
          %s187 = scalar_lea.sflag [#allocation3], %s186
          %s188 = sand.u32 %s45, 1
          %s189 = smul.addr %s188, 240
          %s190 = scalar_lea.vmem [#allocation2], %s189
          %s192 = ssub.s32 3840, 3840
          %193 = vsyncadd %s187, %s192
          %s194 = smul.addr %s23, 60
          %s195 = smul.addr %s194, 64
          %s196 = scalar_lea.hbm %s0, %s195
          %s197 = sshll.u32 %s190, 4
          %s198 = int_to_ptr.vmem [resolvable:$true] %s197
          %203 = dma.hbm_to_vmem [thread:$0]  %s196, 3840, %s198, %s187, 64, 64, 4
        $region28: #{tpu_custom_call.1} parent=23 // pred_fallthru
          _
      $region24: #{tpu_custom_call.1} parent=5 // pred_fallthru
        _
      %p204 = scmp.le.s32.totalorder 1, %s16
      %p205 = scmp.lt.s32.totalorder %s16, 5
      %p206 = pnand %p204, %p205
      %p207 = pneg %p206
      // Predicated region
      $region29: #{tpu_custom_call.1} parent=5 // pred_check
        _
      $region30: #{tpu_custom_call.1} parent=5 // pred_check_branch
        %209 = sbr.rel (%p206) target = $region32
      $region31: #{tpu_custom_call.1} parent=5 // pred_region
        %s210 = ssub.s32 %s16, 1
        %s211 = sand.u32 %s48, 1
        %s212 = scalar_lea.sflag [#allocation3], %s211
        %s213 = sand.u32 %s48, 1
        %s214 = smul.addr %s213, 240
        %s215 = scalar_lea.vmem [#allocation2], %s214
        // Predicated region
        $region33: #{tpu_custom_call.1} parent=31 // pred_check
          %p216 = pneg %p61
        $region34: #{tpu_custom_call.1} parent=31 // pred_check_branch
          %218 = sbr.rel (%p216) target = $region36
        $region35: #{tpu_custom_call.1} parent=31 // pred_region
          %219 = dma.done %s212, 3840
        $region36: #{tpu_custom_call.1} parent=31 // pred_fallthru
          _
        // Predicated region
        $region37: #{tpu_custom_call.1} parent=31 // pred_check
          %p220 = pneg %p87
        $region38: #{tpu_custom_call.1} parent=31 // pred_check_branch
          %222 = sbr.rel (%p220) target = $region40
        $region39: #{tpu_custom_call.1} parent=31 // pred_region
          %223 = dma.done [#allocation6], 9216
        $region40: #{tpu_custom_call.1} parent=31 // pred_fallthru
          _
        %s224 = sand.u32 %s48, 1
        %s225 = scalar_lea.sflag [#allocation3], %s224
        %s226 = sand.u32 %s48, 1
        %s227 = smul.addr %s226, 240
        %s228 = scalar_lea.vmem [#allocation2], %s227
        %p229 = pneg %p61
        %p230 = pneg %p58
        %p231 = pneg %p87
        %p232 = pneg %p84
        %p233 = scmp.lt.s32.totalorder %s27, 0
        %s234 = scalar_select %p233, %s27, 0
        %s235 = scalar_lea.vmem %s2, %s234
        %p236 = pneg %p113
        %p237 = pneg %p110
        %p238 = pneg %p143
        %p239 = pneg %p140
        %s240 = sand.u32 %s130, 1
        %s241 = scalar_lea.sflag [#allocation4], %s240
        %s242 = sand.u32 %s130, 1
        %s243 = smul.addr %s242, 128
        %s244 = scalar_lea.vmem [#allocation7], %s243
        %p245 = scmp.lt.s32.totalorder %s27, 0
        %s246 = scalar_select %p245, %s27, 0
        %s247 = scalar_lea.vmem %s2, %s246
        %s248 = smul.u32 8, %s28
        %s250 = smul.u32 %s28, 8
        %s251 = smul.u32 %s250, 3
        %s252 = smul.addr %s251, 4
        %s253 = scalar_lea.vmem %s215, %s252 [#allocation2]
        %v254 = vld [vmem:[%s253] sm:$0xf]
        %v255 = vld [vmem:[%s253 + $0x4] sm:$0xf]
        %v256 = vld [vmem:[%s253 + $0x8] sm:$0xf]
        %v257 = vld [vmem:[%s253 + $0xc] sm:$0xf]
        %v258 = vld [vmem:[%s253 + $0x10] sm:$0xf]
        %v259 = vld [vmem:[%s253 + $0x14] sm:$0xf]
        %v260 = vld [vmem:[%s253 + $0x18] sm:$0xf]
        %v261 = vld [vmem:[%s253 + $0x1c] sm:$0xf]
        %v262 = vld [vmem:[%s253 + $0x20] sm:$0xf]
        %v263 = vld [vmem:[%s253 + $0x24] sm:$0xf]
        %v264 = vld [vmem:[%s253 + $0x28] sm:$0xf]
        %v265 = vld [vmem:[%s253 + $0x2c] sm:$0xf]
        %v266 = vld [vmem:[%s253 + $0x30] sm:$0xf]
        %v267 = vld [vmem:[%s253 + $0x34] sm:$0xf]
        %v268 = vld [vmem:[%s253 + $0x38] sm:$0xf]
        %v269 = vld [vmem:[%s253 + $0x3c] sm:$0xf]
        %v270 = vld [vmem:[%s253 + $0x40] sm:$0xf]
        %v271 = vld [vmem:[%s253 + $0x44] sm:$0xf]
        %v272 = vld [vmem:[%s253 + $0x48] sm:$0xf]
        %v273 = vld [vmem:[%s253 + $0x4c] sm:$0xf]
        %v274 = vld [vmem:[%s253 + $0x50] sm:$0xf]
        %v275 = vld [vmem:[%s253 + $0x54] sm:$0xf]
        %v276 = vld [vmem:[%s253 + $0x58] sm:$0xf]
        %v277 = vld [vmem:[%s253 + $0x5c] sm:$0xf]
        %v278 = vunpack.c.l.bf16 %v254
        %v279 = vunpack.c.l.bf16 %v255
        %v280 = vunpack.c.l.bf16 %v256
        %v281 = vunpack.c.l.bf16 %v257
        %v282 = vunpack.c.l.bf16 %v258
        %v283 = vunpack.c.l.bf16 %v259
        %v284 = vunpack.c.l.bf16 %v260
        %v285 = vunpack.c.l.bf16 %v261
        %v286 = vunpack.c.l.bf16 %v262
        %v287 = vunpack.c.l.bf16 %v263
        %v288 = vunpack.c.l.bf16 %v264
        %v289 = vunpack.c.l.bf16 %v265
        %v290 = vunpack.c.l.bf16 %v266
        %v291 = vunpack.c.l.bf16 %v267
        %v292 = vunpack.c.l.bf16 %v268
        %v293 = vunpack.c.l.bf16 %v269
        %v294 = vunpack.c.l.bf16 %v270
        %v295 = vunpack.c.l.bf16 %v271
        %v296 = vunpack.c.l.bf16 %v272
        %v297 = vunpack.c.l.bf16 %v273
        %v298 = vunpack.c.l.bf16 %v274
        %v299 = vunpack.c.l.bf16 %v275
        %v300 = vunpack.c.l.bf16 %v276
        %v301 = vunpack.c.l.bf16 %v277
        %v302 = vpack.c.bf16 %v279, %v278
        %v303 = vpack.c.bf16 %v282, %v281
        %v304 = vpack.c.bf16 %v285, %v284
        %v305 = vpack.c.bf16 %v288, %v287
        %v306 = vpack.c.bf16 %v291, %v290
        %v307 = vpack.c.bf16 %v294, %v293
        %v308 = vpack.c.bf16 %v297, %v296
        %v309 = vpack.c.bf16 %v300, %v299
        %v310 = vld [vmem:[#allocation5] sm:$0xf]
        %v311 = vld [vmem:[#allocation5 + $0x4] sm:$0xf]
        %v312 = vld [vmem:[#allocation5 + $0x8] sm:$0xf]
        %v313 = vld [vmem:[#allocation5 + $0xc] sm:$0xf]
        %v314 = vld [vmem:[#allocation5 + $0x10] sm:$0xf]
        %v315 = vld [vmem:[#allocation5 + $0x14] sm:$0xf]
        %v316 = vld [vmem:[#allocation5 + $0x18] sm:$0xf]
        %v317 = vld [vmem:[#allocation5 + $0x1c] sm:$0xf]
        %v318 = vld [vmem:[#allocation5 + $0x20] sm:$0xf]
        %v319 = vld [vmem:[#allocation5 + $0x24] sm:$0xf]
        %v320 = vld [vmem:[#allocation5 + $0x28] sm:$0xf]
        %v321 = vld [vmem:[#allocation5 + $0x2c] sm:$0xf]
        %v322 = vld [vmem:[#allocation5 + $0x30] sm:$0xf]
        %v323 = vld [vmem:[#allocation5 + $0x34] sm:$0xf]
        %v324 = vld [vmem:[#allocation5 + $0x38] sm:$0xf]
        %v325 = vld [vmem:[#allocation5 + $0x3c] sm:$0xf]
        %vm350 = vcmask 1045504
        %v351 = vrot.slane %v278, 2
        %v352 = vrot.slane %v279, 2
        %v353 = vsel %vm350, %v351, %v352
        %v354 = vrot.slane %v280, 2
        %v355 = vsel %vm350, %v352, %v354
        %v356 = vrot.slane %v281, 2
        %v357 = vrot.slane %v282, 2
        %v358 = vsel %vm350, %v356, %v357
        %v359 = vrot.slane %v283, 2
        %v360 = vsel %vm350, %v357, %v359
        %v361 = vrot.slane %v284, 2
        %v362 = vrot.slane %v285, 2
        %v363 = vsel %vm350, %v361, %v362
        %v364 = vrot.slane %v286, 2
        %v365 = vsel %vm350, %v362, %v364
        %v366 = vrot.slane %v287, 2
        %v367 = vrot.slane %v288, 2
        %v368 = vsel %vm350, %v366, %v367
        %v369 = vrot.slane %v289, 2
        %v370 = vsel %vm350, %v367, %v369
        %v371 = vrot.slane %v290, 2
        %v372 = vrot.slane %v291, 2
        %v373 = vsel %vm350, %v371, %v372
        %v374 = vrot.slane %v292, 2
        %v375 = vsel %vm350, %v372, %v374
        %v376 = vrot.slane %v293, 2
        %v377 = vrot.slane %v294, 2
        %v378 = vsel %vm350, %v376, %v377
        %v379 = vrot.slane %v295, 2
        %v380 = vsel %vm350, %v377, %v379
        %v381 = vrot.slane %v296, 2
        %v382 = vrot.slane %v297, 2
        %v383 = vsel %vm350, %v381, %v382
        %v384 = vrot.slane %v298, 2
        %v385 = vsel %vm350, %v382, %v384
        %v386 = vrot.slane %v299, 2
        %v387 = vrot.slane %v300, 2
        %v388 = vsel %vm350, %v386, %v387
        %v389 = vrot.slane %v301, 2
        %v390 = vsel %vm350, %v387, %v389
        %v407 = vpack.c.bf16 %v355, %v353
        %v408 = vpack.c.bf16 %v360, %v358
        %v409 = vpack.c.bf16 %v365, %v363
        %v410 = vpack.c.bf16 %v370, %v368
        %v411 = vpack.c.bf16 %v375, %v373
        %v412 = vpack.c.bf16 %v380, %v378
        %v413 = vpack.c.bf16 %v385, %v383
        %v414 = vpack.c.bf16 %v390, %v388
        %v415 = vld [vmem:[#allocation5 + $0x40] sm:$0xf]
        %v416 = vld [vmem:[#allocation5 + $0x44] sm:$0xf]
        %v417 = vld [vmem:[#allocation5 + $0x48] sm:$0xf]
        %v418 = vld [vmem:[#allocation5 + $0x4c] sm:$0xf]
        %v419 = vld [vmem:[#allocation5 + $0x50] sm:$0xf]
        %v420 = vld [vmem:[#allocation5 + $0x54] sm:$0xf]
        %v421 = vld [vmem:[#allocation5 + $0x58] sm:$0xf]
        %v422 = vld [vmem:[#allocation5 + $0x5c] sm:$0xf]
        %v423 = vld [vmem:[#allocation5 + $0x60] sm:$0xf]
        %v424 = vld [vmem:[#allocation5 + $0x64] sm:$0xf]
        %v425 = vld [vmem:[#allocation5 + $0x68] sm:$0xf]
        %v426 = vld [vmem:[#allocation5 + $0x6c] sm:$0xf]
        %v427 = vld [vmem:[#allocation5 + $0x70] sm:$0xf]
        %v428 = vld [vmem:[#allocation5 + $0x74] sm:$0xf]
        %v429 = vld [vmem:[#allocation5 + $0x78] sm:$0xf]
        %v430 = vld [vmem:[#allocation5 + $0x7c] sm:$0xf]
        %v447 = vunpack.c.l.b16 %v415
        %v448 = vunpack.c.l.b16 %v416
        %v449 = vunpack.c.l.b16 %v417
        %v450 = vunpack.c.l.b16 %v418
        %v451 = vunpack.c.l.b16 %v419
        %v452 = vunpack.c.l.b16 %v420
        %v453 = vunpack.c.l.b16 %v421
        %v454 = vunpack.c.l.b16 %v422
        %v455 = vunpack.c.l.b16 %v423
        %v456 = vunpack.c.l.b16 %v424
        %v457 = vunpack.c.l.b16 %v425
        %v458 = vunpack.c.l.b16 %v426
        %v459 = vunpack.c.l.b16 %v427
        %v460 = vunpack.c.l.b16 %v428
        %v461 = vunpack.c.l.b16 %v429
        %v462 = vunpack.c.l.b16 %v430
        %v463 = vpack.c.b16 %v448, %v447
        %v464 = vpack.c.b16 %v450, %v449
        %v465 = vpack.c.b16 %v452, %v451
        %v466 = vpack.c.b16 %v454, %v453
        %v467 = vpack.c.b16 %v456, %v455
        %v468 = vpack.c.b16 %v458, %v457
        %v469 = vpack.c.b16 %v460, %v459
        %v470 = vpack.c.b16 %v462, %v461
        %479 = vmatprep.subr.bf16.mxu0 0
        %480 = vmatpush1.bf16.msra.mxu0 %v470
        %481 = vmatprep.subr.bf16.mxu0 0
        %482 = vmatpush1.bf16.msra.mxu0 %v469
        %483 = vmatprep.subr.bf16.mxu0 0
        %484 = vmatpush1.bf16.msra.mxu0 %v468
        %485 = vmatprep.subr.bf16.mxu0 0
        %486 = vmatpush1.bf16.msra.mxu0 %v467
        %487 = vmatprep.subr.bf16.mxu0 0
        %488 = vmatpush1.bf16.msra.mxu0 %v466
        %489 = vmatprep.subr.bf16.mxu0 0
        %490 = vmatpush1.bf16.msra.mxu0 %v465
        %491 = vmatprep.subr.bf16.mxu0 0
        %492 = vmatpush1.bf16.msra.mxu0 %v464
        %493 = vmatprep.subr.bf16.mxu0 0
        %494 = vmatpush1.bf16.msra.mxu0 %v463
        %495 = vmatprep.subr.bf16.mxu0 0
        %496 = vmatpush2.bf16.msra.mxu0 0
        %497 = vmatprep.subr.bf16.mxu0 0
        %498 = vmatpush2.bf16.msra.mxu0 0
        %499 = vmatprep.subr.bf16.mxu0 0
        %500 = vmatpush2.bf16.msra.mxu0 0
        %501 = vmatprep.subr.bf16.mxu0 0
        %502 = vmatpush2.bf16.msra.mxu0 0
        %503 = vmatprep.subr.bf16.mxu0 0
        %504 = vmatpush2.bf16.msra.mxu0 0
        %505 = vmatprep.subr.bf16.mxu0 0
        %506 = vmatpush2.bf16.msra.mxu0 0
        %507 = vmatprep.subr.bf16.mxu0 0
        %508 = vmatpush2.bf16.msra.mxu0 0
        %509 = vmatprep.subr.bf16.mxu0 0
        %510 = vmatpush2.bf16.msra.mxu0 0
        %511 = vmatprep.mubr.bf16.mxu0 0
        %512 = vmatmul.mubr.bf16.gmra.mxu0 %v407
        %v513 = vpop.f32.mrf.mxu0
        %v514 = vadd.f32 0.0, %v513
        %v515 = vpop.f32.mrf.mxu0
        %v516 = vpop.f32.mrf.mxu0
        %v517 = vadd.f32 0.0, %v516
        %v518 = vpop.f32.mrf.mxu0
        %519 = vmatprep.mubr.bf16.mxu0 0
        %520 = vmatmul.mubr.bf16.gmra.mxu0 %v408
        %v521 = vpop.f32.mrf.mxu0
        %v522 = vadd.f32 0.0, %v521
        %v523 = vpop.f32.mrf.mxu0
        %v524 = vpop.f32.mrf.mxu0
        %v525 = vadd.f32 0.0, %v524
        %v526 = vpop.f32.mrf.mxu0
        %527 = vmatprep.mubr.bf16.mxu0 0
        %528 = vmatmul.mubr.bf16.gmra.mxu0 %v409
        %v529 = vpop.f32.mrf.mxu0
        %v530 = vadd.f32 0.0, %v529
        %v531 = vpop.f32.mrf.mxu0
        %v532 = vpop.f32.mrf.mxu0
        %v533 = vadd.f32 0.0, %v532
        %v534 = vpop.f32.mrf.mxu0
        %535 = vmatprep.mubr.bf16.mxu0 0
        %536 = vmatmul.mubr.bf16.gmra.mxu0 %v410
        %v537 = vpop.f32.mrf.mxu0
        %v538 = vadd.f32 0.0, %v537
        %v539 = vpop.f32.mrf.mxu0
        %v540 = vpop.f32.mrf.mxu0
        %v541 = vadd.f32 0.0, %v540
        %v542 = vpop.f32.mrf.mxu0
        %543 = vmatprep.mubr.bf16.mxu0 0
        %544 = vmatmul.mubr.bf16.gmra.mxu0 %v411
        %v545 = vpop.f32.mrf.mxu0
        %v546 = vadd.f32 0.0, %v545
        %v547 = vpop.f32.mrf.mxu0
        %v548 = vpop.f32.mrf.mxu0
        %v549 = vadd.f32 0.0, %v548
        %v550 = vpop.f32.mrf.mxu0
        %551 = vmatprep.mubr.bf16.mxu0 0
        %552 = vmatmul.mubr.bf16.gmra.mxu0 %v412
        %v553 = vpop.f32.mrf.mxu0
        %v554 = vadd.f32 0.0, %v553
        %v555 = vpop.f32.mrf.mxu0
        %v556 = vpop.f32.mrf.mxu0
        %v557 = vadd.f32 0.0, %v556
        %v558 = vpop.f32.mrf.mxu0
        %559 = vmatprep.mubr.bf16.mxu0 0
        %560 = vmatmul.mubr.bf16.gmra.mxu0 %v413
        %v561 = vpop.f32.mrf.mxu0
        %v562 = vadd.f32 0.0, %v561
        %v563 = vpop.f32.mrf.mxu0
        %v564 = vpop.f32.mrf.mxu0
        %v565 = vadd.f32 0.0, %v564
        %v566 = vpop.f32.mrf.mxu0
        %567 = vmatprep.mubr.bf16.mxu0 0
        %568 = vmatmul.mubr.bf16.gmra.mxu0 %v414
        %v569 = vpop.f32.mrf.mxu0
        %v570 = vadd.f32 0.0, %v569
        %v571 = vpop.f32.mrf.mxu0
        %v572 = vpop.f32.mrf.mxu0
        %v573 = vadd.f32 0.0, %v572
        %v574 = vpop.f32.mrf.mxu0
        %575 = vdwg.mxu0
        %v592 = vunpack.c.l.b16 %v310
        %v593 = vunpack.c.l.b16 %v311
        %v594 = vunpack.c.l.b16 %v312
        %v595 = vunpack.c.l.b16 %v313
        %v596 = vunpack.c.l.b16 %v314
        %v597 = vunpack.c.l.b16 %v315
        %v598 = vunpack.c.l.b16 %v316
        %v599 = vunpack.c.l.b16 %v317
        %v600 = vunpack.c.l.b16 %v318
        %v601 = vunpack.c.l.b16 %v319
        %v602 = vunpack.c.l.b16 %v320
        %v603 = vunpack.c.l.b16 %v321
        %v604 = vunpack.c.l.b16 %v322
        %v605 = vunpack.c.l.b16 %v323
        %v606 = vunpack.c.l.b16 %v324
        %v607 = vunpack.c.l.b16 %v325
        %v608 = vpack.c.b16 %v593, %v592
        %v609 = vpack.c.b16 %v595, %v594
        %v610 = vpack.c.b16 %v597, %v596
        %v611 = vpack.c.b16 %v599, %v598
        %v612 = vpack.c.b16 %v601, %v600
        %v613 = vpack.c.b16 %v603, %v602
        %v614 = vpack.c.b16 %v605, %v604
        %v615 = vpack.c.b16 %v607, %v606
        %624 = vmatprep.subr.bf16.mxu0 0
        %625 = vmatpush1.bf16.msra.mxu0 %v615
        %626 = vmatprep.subr.bf16.mxu0 0
        %627 = vmatpush1.bf16.msra.mxu0 %v614
        %628 = vmatprep.subr.bf16.mxu0 0
        %629 = vmatpush1.bf16.msra.mxu0 %v613
        %630 = vmatprep.subr.bf16.mxu0 0
        %631 = vmatpush1.bf16.msra.mxu0 %v612
        %632 = vmatprep.subr.bf16.mxu0 0
        %633 = vmatpush1.bf16.msra.mxu0 %v611
        %634 = vmatprep.subr.bf16.mxu0 0
        %635 = vmatpush1.bf16.msra.mxu0 %v610
        %636 = vmatprep.subr.bf16.mxu0 0
        %637 = vmatpush1.bf16.msra.mxu0 %v609
        %638 = vmatprep.subr.bf16.mxu0 0
        %639 = vmatpush1.bf16.msra.mxu0 %v608
        %640 = vmatprep.subr.bf16.mxu0 0
        %641 = vmatpush2.bf16.msra.mxu0 0
        %642 = vmatprep.subr.bf16.mxu0 0
        %643 = vmatpush2.bf16.msra.mxu0 0
        %644 = vmatprep.subr.bf16.mxu0 0
        %645 = vmatpush2.bf16.msra.mxu0 0
        %646 = vmatprep.subr.bf16.mxu0 0
        %647 = vmatpush2.bf16.msra.mxu0 0
        %648 = vmatprep.subr.bf16.mxu0 0
        %649 = vmatpush2.bf16.msra.mxu0 0
        %650 = vmatprep.subr.bf16.mxu0 0
        %651 = vmatpush2.bf16.msra.mxu0 0
        %652 = vmatprep.subr.bf16.mxu0 0
        %653 = vmatpush2.bf16.msra.mxu0 0
        %654 = vmatprep.subr.bf16.mxu0 0
        %655 = vmatpush2.bf16.msra.mxu0 0
        %656 = vmatprep.mubr.bf16.mxu0 0
        %657 = vmatmul.mubr.bf16.gmra.mxu0 %v302
        %v658 = vpop.f32.mrf.mxu0
        %v659 = vadd.f32 %v514, %v658
        %v660 = vpop.f32.mrf.mxu0
        %v661 = vpop.f32.mrf.mxu0
        %v662 = vadd.f32 %v517, %v661
        %v663 = vpop.f32.mrf.mxu0
        %664 = vmatprep.mubr.bf16.mxu0 0
        %665 = vmatmul.mubr.bf16.gmra.mxu0 %v303
        %v666 = vpop.f32.mrf.mxu0
        %v667 = vadd.f32 %v522, %v666
        %v668 = vpop.f32.mrf.mxu0
        %v669 = vpop.f32.mrf.mxu0
        %v670 = vadd.f32 %v525, %v669
        %v671 = vpop.f32.mrf.mxu0
        %672 = vmatprep.mubr.bf16.mxu0 0
        %673 = vmatmul.mubr.bf16.gmra.mxu0 %v304
        %v674 = vpop.f32.mrf.mxu0
        %v675 = vadd.f32 %v530, %v674
        %v676 = vpop.f32.mrf.mxu0
        %v677 = vpop.f32.mrf.mxu0
        %v678 = vadd.f32 %v533, %v677
        %v679 = vpop.f32.mrf.mxu0
        %680 = vmatprep.mubr.bf16.mxu0 0
        %681 = vmatmul.mubr.bf16.gmra.mxu0 %v305
        %v682 = vpop.f32.mrf.mxu0
        %v683 = vadd.f32 %v538, %v682
        %v684 = vpop.f32.mrf.mxu0
        %v685 = vpop.f32.mrf.mxu0
        %v686 = vadd.f32 %v541, %v685
        %v687 = vpop.f32.mrf.mxu0
        %688 = vmatprep.mubr.bf16.mxu0 0
        %689 = vmatmul.mubr.bf16.gmra.mxu0 %v306
        %v690 = vpop.f32.mrf.mxu0
        %v691 = vadd.f32 %v546, %v690
        %v692 = vpop.f32.mrf.mxu0
        %v693 = vpop.f32.mrf.mxu0
        %v694 = vadd.f32 %v549, %v693
        %v695 = vpop.f32.mrf.mxu0
        %696 = vmatprep.mubr.bf16.mxu0 0
        %697 = vmatmul.mubr.bf16.gmra.mxu0 %v307
        %v698 = vpop.f32.mrf.mxu0
        %v699 = vadd.f32 %v554, %v698
        %v700 = vpop.f32.mrf.mxu0
        %v701 = vpop.f32.mrf.mxu0
        %v702 = vadd.f32 %v557, %v701
        %v703 = vpop.f32.mrf.mxu0
        %704 = vmatprep.mubr.bf16.mxu0 0
        %705 = vmatmul.mubr.bf16.gmra.mxu0 %v308
        %v706 = vpop.f32.mrf.mxu0
        %v707 = vadd.f32 %v562, %v706
        %v708 = vpop.f32.mrf.mxu0
        %v709 = vpop.f32.mrf.mxu0
        %v710 = vadd.f32 %v565, %v709
        %v711 = vpop.f32.mrf.mxu0
        %712 = vmatprep.mubr.bf16.mxu0 0
        %713 = vmatmul.mubr.bf16.gmra.mxu0 %v309
        %v714 = vpop.f32.mrf.mxu0
        %v715 = vadd.f32 %v570, %v714
        %v716 = vpop.f32.mrf.mxu0
        %v717 = vpop.f32.mrf.mxu0
        %v718 = vadd.f32 %v573, %v717
        %v719 = vpop.f32.mrf.mxu0
        %720 = vdwg.mxu0
        %vm721 = vcmask 1043456
        %v722 = vrot.slane %v278, 4
        %v723 = vrot.slane %v279, 4
        %v724 = vsel %vm721, %v722, %v723
        %v725 = vrot.slane %v280, 4
        %v726 = vsel %vm721, %v723, %v725
        %v727 = vrot.slane %v281, 4
        %v728 = vrot.slane %v282, 4
        %v729 = vsel %vm721, %v727, %v728
        %v730 = vrot.slane %v283, 4
        %v731 = vsel %vm721, %v728, %v730
        %v732 = vrot.slane %v284, 4
        %v733 = vrot.slane %v285, 4
        %v734 = vsel %vm721, %v732, %v733
        %v735 = vrot.slane %v286, 4
        %v736 = vsel %vm721, %v733, %v735
        %v737 = vrot.slane %v287, 4
        %v738 = vrot.slane %v288, 4
        %v739 = vsel %vm721, %v737, %v738
        %v740 = vrot.slane %v289, 4
        %v741 = vsel %vm721, %v738, %v740
        %v742 = vrot.slane %v290, 4
        %v743 = vrot.slane %v291, 4
        %v744 = vsel %vm721, %v742, %v743
        %v745 = vrot.slane %v292, 4
        %v746 = vsel %vm721, %v743, %v745
        %v747 = vrot.slane %v293, 4
        %v748 = vrot.slane %v294, 4
        %v749 = vsel %vm721, %v747, %v748
        %v750 = vrot.slane %v295, 4
        %v751 = vsel %vm721, %v748, %v750
        %v752 = vrot.slane %v296, 4
        %v753 = vrot.slane %v297, 4
        %v754 = vsel %vm721, %v752, %v753
        %v755 = vrot.slane %v298, 4
        %v756 = vsel %vm721, %v753, %v755
        %v757 = vrot.slane %v299, 4
        %v758 = vrot.slane %v300, 4
        %v759 = vsel %vm721, %v757, %v758
        %v760 = vrot.slane %v301, 4
        %v761 = vsel %vm721, %v758, %v760
        %v778 = vpack.c.bf16 %v726, %v724
        %v779 = vpack.c.bf16 %v731, %v729
        %v780 = vpack.c.bf16 %v736, %v734
        %v781 = vpack.c.bf16 %v741, %v739
        %v782 = vpack.c.bf16 %v746, %v744
        %v783 = vpack.c.bf16 %v751, %v749
        %v784 = vpack.c.bf16 %v756, %v754
        %v785 = vpack.c.bf16 %v761, %v759
        %v786 = vld [vmem:[#allocation5 + $0x80] sm:$0xf]
        %v787 = vld [vmem:[#allocation5 + $0x84] sm:$0xf]
        %v788 = vld [vmem:[#allocation5 + $0x88] sm:$0xf]
        %v789 = vld [vmem:[#allocation5 + $0x8c] sm:$0xf]
        %v790 = vld [vmem:[#allocation5 + $0x90] sm:$0xf]
        %v791 = vld [vmem:[#allocation5 + $0x94] sm:$0xf]
        %v792 = vld [vmem:[#allocation5 + $0x98] sm:$0xf]
        %v793 = vld [vmem:[#allocation5 + $0x9c] sm:$0xf]
        %v794 = vld [vmem:[#allocation5 + $0xa0] sm:$0xf]
        %v795 = vld [vmem:[#allocation5 + $0xa4] sm:$0xf]
        %v796 = vld [vmem:[#allocation5 + $0xa8] sm:$0xf]
        %v797 = vld [vmem:[#allocation5 + $0xac] sm:$0xf]
        %v798 = vld [vmem:[#allocation5 + $0xb0] sm:$0xf]
        %v799 = vld [vmem:[#allocation5 + $0xb4] sm:$0xf]
        %v800 = vld [vmem:[#allocation5 + $0xb8] sm:$0xf]
        %v801 = vld [vmem:[#allocation5 + $0xbc] sm:$0xf]
        %v818 = vunpack.c.l.b16 %v786
        %v819 = vunpack.c.l.b16 %v787
        %v820 = vunpack.c.l.b16 %v788
        %v821 = vunpack.c.l.b16 %v789
        %v822 = vunpack.c.l.b16 %v790
        %v823 = vunpack.c.l.b16 %v791
        %v824 = vunpack.c.l.b16 %v792
        %v825 = vunpack.c.l.b16 %v793
        %v826 = vunpack.c.l.b16 %v794
        %v827 = vunpack.c.l.b16 %v795
        %v828 = vunpack.c.l.b16 %v796
        %v829 = vunpack.c.l.b16 %v797
        %v830 = vunpack.c.l.b16 %v798
        %v831 = vunpack.c.l.b16 %v799
        %v832 = vunpack.c.l.b16 %v800
        %v833 = vunpack.c.l.b16 %v801
        %v834 = vpack.c.b16 %v819, %v818
        %v835 = vpack.c.b16 %v821, %v820
        %v836 = vpack.c.b16 %v823, %v822
        %v837 = vpack.c.b16 %v825, %v824
        %v838 = vpack.c.b16 %v827, %v826
        %v839 = vpack.c.b16 %v829, %v828
        %v840 = vpack.c.b16 %v831, %v830
        %v841 = vpack.c.b16 %v833, %v832
        %850 = vmatprep.subr.bf16.mxu0 0
        %851 = vmatpush1.bf16.msra.mxu0 %v841
        %852 = vmatprep.subr.bf16.mxu0 0
        %853 = vmatpush1.bf16.msra.mxu0 %v840
        %854 = vmatprep.subr.bf16.mxu0 0
        %855 = vmatpush1.bf16.msra.mxu0 %v839
        %856 = vmatprep.subr.bf16.mxu0 0
        %857 = vmatpush1.bf16.msra.mxu0 %v838
        %858 = vmatprep.subr.bf16.mxu0 0
        %859 = vmatpush1.bf16.msra.mxu0 %v837
        %860 = vmatprep.subr.bf16.mxu0 0
        %861 = vmatpush1.bf16.msra.mxu0 %v836
        %862 = vmatprep.subr.bf16.mxu0 0
        %863 = vmatpush1.bf16.msra.mxu0 %v835
        %864 = vmatprep.subr.bf16.mxu0 0
        %865 = vmatpush1.bf16.msra.mxu0 %v834
        %866 = vmatprep.subr.bf16.mxu0 0
        %867 = vmatpush2.bf16.msra.mxu0 0
        %868 = vmatprep.subr.bf16.mxu0 0
        %869 = vmatpush2.bf16.msra.mxu0 0
        %870 = vmatprep.subr.bf16.mxu0 0
        %871 = vmatpush2.bf16.msra.mxu0 0
        %872 = vmatprep.subr.bf16.mxu0 0
        %873 = vmatpush2.bf16.msra.mxu0 0
        %874 = vmatprep.subr.bf16.mxu0 0
        %875 = vmatpush2.bf16.msra.mxu0 0
        %876 = vmatprep.subr.bf16.mxu0 0
        %877 = vmatpush2.bf16.msra.mxu0 0
        %878 = vmatprep.subr.bf16.mxu0 0
        %879 = vmatpush2.bf16.msra.mxu0 0
        %880 = vmatprep.subr.bf16.mxu0 0
        %881 = vmatpush2.bf16.msra.mxu0 0
        %882 = vmatprep.mubr.bf16.mxu0 0
        %883 = vmatmul.mubr.bf16.gmra.mxu0 %v778
        %v884 = vpop.f32.mrf.mxu0
        %v885 = vadd.f32 0.0, %v884
        %v886 = vpop.f32.mrf.mxu0
        %v887 = vpop.f32.mrf.mxu0
        %v888 = vadd.f32 0.0, %v887
        %v889 = vpop.f32.mrf.mxu0
        %890 = vmatprep.mubr.bf16.mxu0 0
        %891 = vmatmul.mubr.bf16.gmra.mxu0 %v779
        %v892 = vpop.f32.mrf.mxu0
        %v893 = vadd.f32 0.0, %v892
        %v894 = vpop.f32.mrf.mxu0
        %v895 = vpop.f32.mrf.mxu0
        %v896 = vadd.f32 0.0, %v895
        %v897 = vpop.f32.mrf.mxu0
        %898 = vmatprep.mubr.bf16.mxu0 0
        %899 = vmatmul.mubr.bf16.gmra.mxu0 %v780
        %v900 = vpop.f32.mrf.mxu0
        %v901 = vadd.f32 0.0, %v900
        %v902 = vpop.f32.mrf.mxu0
        %v903 = vpop.f32.mrf.mxu0
        %v904 = vadd.f32 0.0, %v903
        %v905 = vpop.f32.mrf.mxu0
        %906 = vmatprep.mubr.bf16.mxu0 0
        %907 = vmatmul.mubr.bf16.gmra.mxu0 %v781
        %v908 = vpop.f32.mrf.mxu0
        %v909 = vadd.f32 0.0, %v908
        %v910 = vpop.f32.mrf.mxu0
        %v911 = vpop.f32.mrf.mxu0
        %v912 = vadd.f32 0.0, %v911
        %v913 = vpop.f32.mrf.mxu0
        %914 = vmatprep.mubr.bf16.mxu0 0
        %915 = vmatmul.mubr.bf16.gmra.mxu0 %v782
        %v916 = vpop.f32.mrf.mxu0
        %v917 = vadd.f32 0.0, %v916
        %v918 = vpop.f32.mrf.mxu0
        %v919 = vpop.f32.mrf.mxu0
        %v920 = vadd.f32 0.0, %v919
        %v921 = vpop.f32.mrf.mxu0
        %922 = vmatprep.mubr.bf16.mxu0 0
        %923 = vmatmul.mubr.bf16.gmra.mxu0 %v783
        %v924 = vpop.f32.mrf.mxu0
        %v925 = vadd.f32 0.0, %v924
        %v926 = vpop.f32.mrf.mxu0
        %v927 = vpop.f32.mrf.mxu0
        %v928 = vadd.f32 0.0, %v927
        %v929 = vpop.f32.mrf.mxu0
        %930 = vmatprep.mubr.bf16.mxu0 0
        %931 = vmatmul.mubr.bf16.gmra.mxu0 %v784
        %v932 = vpop.f32.mrf.mxu0
        %v933 = vadd.f32 0.0, %v932
        %v934 = vpop.f32.mrf.mxu0
        %v935 = vpop.f32.mrf.mxu0
        %v936 = vadd.f32 0.0, %v935
        %v937 = vpop.f32.mrf.mxu0
        %938 = vmatprep.mubr.bf16.mxu0 0
        %939 = vmatmul.mubr.bf16.gmra.mxu0 %v785
        %v940 = vpop.f32.mrf.mxu0
        %v941 = vadd.f32 0.0, %v940
        %v942 = vpop.f32.mrf.mxu0
        %v943 = vpop.f32.mrf.mxu0
        %v944 = vadd.f32 0.0, %v943
        %v945 = vpop.f32.mrf.mxu0
        %946 = vdwg.mxu0
        %v947 = vadd.f32 %v659, %v885
        %v948 = vadd.f32 %v662, %v888
        %v949 = vadd.f32 %v667, %v893
        %v950 = vadd.f32 %v670, %v896
        %v951 = vadd.f32 %v675, %v901
        %v952 = vadd.f32 %v678, %v904
        %v953 = vadd.f32 %v683, %v909
        %v954 = vadd.f32 %v686, %v912
        %v955 = vadd.f32 %v691, %v917
        %v956 = vadd.f32 %v694, %v920
        %v957 = vadd.f32 %v699, %v925
        %v958 = vadd.f32 %v702, %v928
        %v959 = vadd.f32 %v707, %v933
        %v960 = vadd.f32 %v710, %v936
        %v961 = vadd.f32 %v715, %v941
        %v962 = vadd.f32 %v718, %v944
        %s963 = sadd.s32 %s250, 2
        %s964 = smul.u32 %s963, 3
        %s965 = smul.addr %s964, 4
        %s966 = scalar_lea.vmem %s215, %s965 [#allocation2]
        %v967 = vld [vmem:[%s966] sm:$0xf]
        %v968 = vld [vmem:[%s966 + $0x4] sm:$0xf]
        %v969 = vld [vmem:[%s966 + $0x8] sm:$0xf]
        %v970 = vld [vmem:[%s966 + $0xc] sm:$0xf]
        %v971 = vld [vmem:[%s966 + $0x10] sm:$0xf]
        %v972 = vld [vmem:[%s966 + $0x14] sm:$0xf]
        %v973 = vld [vmem:[%s966 + $0x18] sm:$0xf]
        %v974 = vld [vmem:[%s966 + $0x1c] sm:$0xf]
        %v975 = vld [vmem:[%s966 + $0x20] sm:$0xf]
        %v976 = vld [vmem:[%s966 + $0x24] sm:$0xf]
        %v977 = vld [vmem:[%s966 + $0x28] sm:$0xf]
        %v978 = vld [vmem:[%s966 + $0x2c] sm:$0xf]
        %v979 = vld [vmem:[%s966 + $0x30] sm:$0xf]
        %v980 = vld [vmem:[%s966 + $0x34] sm:$0xf]
        %v981 = vld [vmem:[%s966 + $0x38] sm:$0xf]
        %v982 = vld [vmem:[%s966 + $0x3c] sm:$0xf]
        %v983 = vld [vmem:[%s966 + $0x40] sm:$0xf]
        %v984 = vld [vmem:[%s966 + $0x44] sm:$0xf]
        %v985 = vld [vmem:[%s966 + $0x48] sm:$0xf]
        %v986 = vld [vmem:[%s966 + $0x4c] sm:$0xf]
        %v987 = vld [vmem:[%s966 + $0x50] sm:$0xf]
        %v988 = vld [vmem:[%s966 + $0x54] sm:$0xf]
        %v989 = vld [vmem:[%s966 + $0x58] sm:$0xf]
        %v990 = vld [vmem:[%s966 + $0x5c] sm:$0xf]
        %v991 = vunpack.c.l.bf16 %v967
        %v992 = vunpack.c.l.bf16 %v968
        %v993 = vunpack.c.l.bf16 %v969
        %v994 = vunpack.c.l.bf16 %v970
        %v995 = vunpack.c.l.bf16 %v971
        %v996 = vunpack.c.l.bf16 %v972
        %v997 = vunpack.c.l.bf16 %v973
        %v998 = vunpack.c.l.bf16 %v974
        %v999 = vunpack.c.l.bf16 %v975
        %v1000 = vunpack.c.l.bf16 %v976
        %v1001 = vunpack.c.l.bf16 %v977
        %v1002 = vunpack.c.l.bf16 %v978
        %v1003 = vunpack.c.l.bf16 %v979
        %v1004 = vunpack.c.l.bf16 %v980
        %v1005 = vunpack.c.l.bf16 %v981
        %v1006 = vunpack.c.l.bf16 %v982
        %v1007 = vunpack.c.l.bf16 %v983
        %v1008 = vunpack.c.l.bf16 %v984
        %v1009 = vunpack.c.l.bf16 %v985
        %v1010 = vunpack.c.l.bf16 %v986
        %v1011 = vunpack.c.l.bf16 %v987
        %v1012 = vunpack.c.l.bf16 %v988
        %v1013 = vunpack.c.l.bf16 %v989
        %v1014 = vunpack.c.l.bf16 %v990
        %v1015 = vpack.c.bf16 %v992, %v991
        %v1016 = vpack.c.bf16 %v995, %v994
        %v1017 = vpack.c.bf16 %v998, %v997
        %v1018 = vpack.c.bf16 %v1001, %v1000
        %v1019 = vpack.c.bf16 %v1004, %v1003
        %v1020 = vpack.c.bf16 %v1007, %v1006
        %v1021 = vpack.c.bf16 %v1010, %v1009
        %v1022 = vpack.c.bf16 %v1013, %v1012
        %v1023 = vld [vmem:[#allocation5 + $0xc0] sm:$0xf]
        %v1024 = vld [vmem:[#allocation5 + $0xc4] sm:$0xf]
        %v1025 = vld [vmem:[#allocation5 + $0xc8] sm:$0xf]
        %v1026 = vld [vmem:[#allocation5 + $0xcc] sm:$0xf]
        %v1027 = vld [vmem:[#allocation5 + $0xd0] sm:$0xf]
        %v1028 = vld [vmem:[#allocation5 + $0xd4] sm:$0xf]
        %v1029 = vld [vmem:[#allocation5 + $0xd8] sm:$0xf]
        %v1030 = vld [vmem:[#allocation5 + $0xdc] sm:$0xf]
        %v1031 = vld [vmem:[#allocation5 + $0xe0] sm:$0xf]
        %v1032 = vld [vmem:[#allocation5 + $0xe4] sm:$0xf]
        %v1033 = vld [vmem:[#allocation5 + $0xe8] sm:$0xf]
        %v1034 = vld [vmem:[#allocation5 + $0xec] sm:$0xf]
        %v1035 = vld [vmem:[#allocation5 + $0xf0] sm:$0xf]
        %v1036 = vld [vmem:[#allocation5 + $0xf4] sm:$0xf]
        %v1037 = vld [vmem:[#allocation5 + $0xf8] sm:$0xf]
        %v1038 = vld [vmem:[#allocation5 + $0xfc] sm:$0xf]
        %v1055 = vunpack.c.l.b16 %v1023
        %v1056 = vunpack.c.l.b16 %v1024
        %v1057 = vunpack.c.l.b16 %v1025
        %v1058 = vunpack.c.l.b16 %v1026
        %v1059 = vunpack.c.l.b16 %v1027
        %v1060 = vunpack.c.l.b16 %v1028
        %v1061 = vunpack.c.l.b16 %v1029
        %v1062 = vunpack.c.l.b16 %v1030
        %v1063 = vunpack.c.l.b16 %v1031
        %v1064 = vunpack.c.l.b16 %v1032
        %v1065 = vunpack.c.l.b16 %v1033
        %v1066 = vunpack.c.l.b16 %v1034
        %v1067 = vunpack.c.l.b16 %v1035
        %v1068 = vunpack.c.l.b16 %v1036
        %v1069 = vunpack.c.l.b16 %v1037
        %v1070 = vunpack.c.l.b16 %v1038
        %v1071 = vpack.c.b16 %v1056, %v1055
        %v1072 = vpack.c.b16 %v1058, %v1057
        %v1073 = vpack.c.b16 %v1060, %v1059
        %v1074 = vpack.c.b16 %v1062, %v1061
        %v1075 = vpack.c.b16 %v1064, %v1063
        %v1076 = vpack.c.b16 %v1066, %v1065
        %v1077 = vpack.c.b16 %v1068, %v1067
        %v1078 = vpack.c.b16 %v1070, %v1069
        %1087 = vmatprep.subr.bf16.mxu0 0
        %1088 = vmatpush1.bf16.msra.mxu0 %v1078
        %1089 = vmatprep.subr.bf16.mxu0 0
        %1090 = vmatpush1.bf16.msra.mxu0 %v1077
        %1091 = vmatprep.subr.bf16.mxu0 0
        %1092 = vmatpush1.bf16.msra.mxu0 %v1076
        %1093 = vmatprep.subr.bf16.mxu0 0
        %1094 = vmatpush1.bf16.msra.mxu0 %v1075
        %1095 = vmatprep.subr.bf16.mxu0 0
        %1096 = vmatpush1.bf16.msra.mxu0 %v1074
        %1097 = vmatprep.subr.bf16.mxu0 0
        %1098 = vmatpush1.bf16.msra.mxu0 %v1073
        %1099 = vmatprep.subr.bf16.mxu0 0
        %1100 = vmatpush1.bf16.msra.mxu0 %v1072
        %1101 = vmatprep.subr.bf16.mxu0 0
        %1102 = vmatpush1.bf16.msra.mxu0 %v1071
        %1103 = vmatprep.subr.bf16.mxu0 0
        %1104 = vmatpush2.bf16.msra.mxu0 0
        %1105 = vmatprep.subr.bf16.mxu0 0
        %1106 = vmatpush2.bf16.msra.mxu0 0
        %1107 = vmatprep.subr.bf16.mxu0 0
        %1108 = vmatpush2.bf16.msra.mxu0 0
        %1109 = vmatprep.subr.bf16.mxu0 0
        %1110 = vmatpush2.bf16.msra.mxu0 0
        %1111 = vmatprep.subr.bf16.mxu0 0
        %1112 = vmatpush2.bf16.msra.mxu0 0
        %1113 = vmatprep.subr.bf16.mxu0 0
        %1114 = vmatpush2.bf16.msra.mxu0 0
        %1115 = vmatprep.subr.bf16.mxu0 0
        %1116 = vmatpush2.bf16.msra.mxu0 0
        %1117 = vmatprep.subr.bf16.mxu0 0
        %1118 = vmatpush2.bf16.msra.mxu0 0
        %1119 = vmatprep.mubr.bf16.mxu0 0
        %1120 = vmatmul.mubr.bf16.gmra.mxu0 %v1015
        %v1121 = vpop.f32.mrf.mxu0
        %v1122 = vadd.f32 0.0, %v1121
        %v1123 = vpop.f32.mrf.mxu0
        %v1124 = vpop.f32.mrf.mxu0
        %v1125 = vadd.f32 0.0, %v1124
        %v1126 = vpop.f32.mrf.mxu0
        %1127 = vmatprep.mubr.bf16.mxu0 0
        %1128 = vmatmul.mubr.bf16.gmra.mxu0 %v1016
        %v1129 = vpop.f32.mrf.mxu0
        %v1130 = vadd.f32 0.0, %v1129
        %v1131 = vpop.f32.mrf.mxu0
        %v1132 = vpop.f32.mrf.mxu0
        %v1133 = vadd.f32 0.0, %v1132
        %v1134 = vpop.f32.mrf.mxu0
        %1135 = vmatprep.mubr.bf16.mxu0 0
        %1136 = vmatmul.mubr.bf16.gmra.mxu0 %v1017
        %v1137 = vpop.f32.mrf.mxu0
        %v1138 = vadd.f32 0.0, %v1137
        %v1139 = vpop.f32.mrf.mxu0
        %v1140 = vpop.f32.mrf.mxu0
        %v1141 = vadd.f32 0.0, %v1140
        %v1142 = vpop.f32.mrf.mxu0
        %1143 = vmatprep.mubr.bf16.mxu0 0
        %1144 = vmatmul.mubr.bf16.gmra.mxu0 %v1018
        %v1145 = vpop.f32.mrf.mxu0
        %v1146 = vadd.f32 0.0, %v1145
        %v1147 = vpop.f32.mrf.mxu0
        %v1148 = vpop.f32.mrf.mxu0
        %v1149 = vadd.f32 0.0, %v1148
        %v1150 = vpop.f32.mrf.mxu0
        %1151 = vmatprep.mubr.bf16.mxu0 0
        %1152 = vmatmul.mubr.bf16.gmra.mxu0 %v1019
        %v1153 = vpop.f32.mrf.mxu0
        %v1154 = vadd.f32 0.0, %v1153
        %v1155 = vpop.f32.mrf.mxu0
        %v1156 = vpop.f32.mrf.mxu0
        %v1157 = vadd.f32 0.0, %v1156
        %v1158 = vpop.f32.mrf.mxu0
        %1159 = vmatprep.mubr.bf16.mxu0 0
        %1160 = vmatmul.mubr.bf16.gmra.mxu0 %v1020
        %v1161 = vpop.f32.mrf.mxu0
        %v1162 = vadd.f32 0.0, %v1161
        %v1163 = vpop.f32.mrf.mxu0
        %v1164 = vpop.f32.mrf.mxu0
        %v1165 = vadd.f32 0.0, %v1164
        %v1166 = vpop.f32.mrf.mxu0
        %1167 = vmatprep.mubr.bf16.mxu0 0
        %1168 = vmatmul.mubr.bf16.gmra.mxu0 %v1021
        %v1169 = vpop.f32.mrf.mxu0
        %v1170 = vadd.f32 0.0, %v1169
        %v1171 = vpop.f32.mrf.mxu0
        %v1172 = vpop.f32.mrf.mxu0
        %v1173 = vadd.f32 0.0, %v1172
        %v1174 = vpop.f32.mrf.mxu0
        %1175 = vmatprep.mubr.bf16.mxu0 0
        %1176 = vmatmul.mubr.bf16.gmra.mxu0 %v1022
        %v1177 = vpop.f32.mrf.mxu0
        %v1178 = vadd.f32 0.0, %v1177
        %v1179 = vpop.f32.mrf.mxu0
        %v1180 = vpop.f32.mrf.mxu0
        %v1181 = vadd.f32 0.0, %v1180
        %v1182 = vpop.f32.mrf.mxu0
        %1183 = vdwg.mxu0
        %v1184 = vadd.f32 %v947, %v1122
        %v1185 = vadd.f32 %v948, %v1125
        %v1186 = vadd.f32 %v949, %v1130
        %v1187 = vadd.f32 %v950, %v1133
        %v1188 = vadd.f32 %v951, %v1138
        %v1189 = vadd.f32 %v952, %v1141
        %v1190 = vadd.f32 %v953, %v1146
        %v1191 = vadd.f32 %v954, %v1149
        %v1192 = vadd.f32 %v955, %v1154
        %v1193 = vadd.f32 %v956, %v1157
        %v1194 = vadd.f32 %v957, %v1162
        %v1195 = vadd.f32 %v958, %v1165
        %v1196 = vadd.f32 %v959, %v1170
        %v1197 = vadd.f32 %v960, %v1173
        %v1198 = vadd.f32 %v961, %v1178
        %v1199 = vadd.f32 %v962, %v1181
        %v1224 = vrot.slane %v991, 2
        %v1225 = vrot.slane %v992, 2
        %v1226 = vsel %vm350, %v1224, %v1225
        %v1227 = vrot.slane %v993, 2
        %v1228 = vsel %vm350, %v1225, %v1227
        %v1229 = vrot.slane %v994, 2
        %v1230 = vrot.slane %v995, 2
        %v1231 = vsel %vm350, %v1229, %v1230
        %v1232 = vrot.slane %v996, 2
        %v1233 = vsel %vm350, %v1230, %v1232
        %v1234 = vrot.slane %v997, 2
        %v1235 = vrot.slane %v998, 2
        %v1236 = vsel %vm350, %v1234, %v1235
        %v1237 = vrot.slane %v999, 2
        %v1238 = vsel %vm350, %v1235, %v1237
        %v1239 = vrot.slane %v1000, 2
        %v1240 = vrot.slane %v1001, 2
        %v1241 = vsel %vm350, %v1239, %v1240
        %v1242 = vrot.slane %v1002, 2
        %v1243 = vsel %vm350, %v1240, %v1242
        %v1244 = vrot.slane %v1003, 2
        %v1245 = vrot.slane %v1004, 2
        %v1246 = vsel %vm350, %v1244, %v1245
        %v1247 = vrot.slane %v1005, 2
        %v1248 = vsel %vm350, %v1245, %v1247
        %v1249 = vrot.slane %v1006, 2
        %v1250 = vrot.slane %v1007, 2
        %v1251 = vsel %vm350, %v1249, %v1250
        %v1252 = vrot.slane %v1008, 2
        %v1253 = vsel %vm350, %v1250, %v1252
        %v1254 = vrot.slane %v1009, 2
        %v1255 = vrot.slane %v1010, 2
        %v1256 = vsel %vm350, %v1254, %v1255
        %v1257 = vrot.slane %v1011, 2
        %v1258 = vsel %vm350, %v1255, %v1257
        %v1259 = vrot.slane %v1012, 2
        %v1260 = vrot.slane %v1013, 2
        %v1261 = vsel %vm350, %v1259, %v1260
        %v1262 = vrot.slane %v1014, 2
        %v1263 = vsel %vm350, %v1260, %v1262
        %v1280 = vpack.c.bf16 %v1228, %v1226
        %v1281 = vpack.c.bf16 %v1233, %v1231
        %v1282 = vpack.c.bf16 %v1238, %v1236
        %v1283 = vpack.c.bf16 %v1243, %v1241
        %v1284 = vpack.c.bf16 %v1248, %v1246
        %v1285 = vpack.c.bf16 %v1253, %v1251
        %v1286 = vpack.c.bf16 %v1258, %v1256
        %v1287 = vpack.c.bf16 %v1263, %v1261
        %v1288 = vld [vmem:[#allocation5 + $0x100] sm:$0xf]
        %v1289 = vld [vmem:[#allocation5 + $0x104] sm:$0xf]
        %v1290 = vld [vmem:[#allocation5 + $0x108] sm:$0xf]
        %v1291 = vld [vmem:[#allocation5 + $0x10c] sm:$0xf]
        %v1292 = vld [vmem:[#allocation5 + $0x110] sm:$0xf]
        %v1293 = vld [vmem:[#allocation5 + $0x114] sm:$0xf]
        %v1294 = vld [vmem:[#allocation5 + $0x118] sm:$0xf]
        %v1295 = vld [vmem:[#allocation5 + $0x11c] sm:$0xf]
        %v1296 = vld [vmem:[#allocation5 + $0x120] sm:$0xf]
        %v1297 = vld [vmem:[#allocation5 + $0x124] sm:$0xf]
        %v1298 = vld [vmem:[#allocation5 + $0x128] sm:$0xf]
        %v1299 = vld [vmem:[#allocation5 + $0x12c] sm:$0xf]
        %v1300 = vld [vmem:[#allocation5 + $0x130] sm:$0xf]
        %v1301 = vld [vmem:[#allocation5 + $0x134] sm:$0xf]
        %v1302 = vld [vmem:[#allocation5 + $0x138] sm:$0xf]
        %v1303 = vld [vmem:[#allocation5 + $0x13c] sm:$0xf]
        %v1320 = vunpack.c.l.b16 %v1288
        %v1321 = vunpack.c.l.b16 %v1289
        %v1322 = vunpack.c.l.b16 %v1290
        %v1323 = vunpack.c.l.b16 %v1291
        %v1324 = vunpack.c.l.b16 %v1292
        %v1325 = vunpack.c.l.b16 %v1293
        %v1326 = vunpack.c.l.b16 %v1294
        %v1327 = vunpack.c.l.b16 %v1295
        %v1328 = vunpack.c.l.b16 %v1296
        %v1329 = vunpack.c.l.b16 %v1297
        %v1330 = vunpack.c.l.b16 %v1298
        %v1331 = vunpack.c.l.b16 %v1299
        %v1332 = vunpack.c.l.b16 %v1300
        %v1333 = vunpack.c.l.b16 %v1301
        %v1334 = vunpack.c.l.b16 %v1302
        %v1335 = vunpack.c.l.b16 %v1303
        %v1336 = vpack.c.b16 %v1321, %v1320
        %v1337 = vpack.c.b16 %v1323, %v1322
        %v1338 = vpack.c.b16 %v1325, %v1324
        %v1339 = vpack.c.b16 %v1327, %v1326
        %v1340 = vpack.c.b16 %v1329, %v1328
        %v1341 = vpack.c.b16 %v1331, %v1330
        %v1342 = vpack.c.b16 %v1333, %v1332
        %v1343 = vpack.c.b16 %v1335, %v1334
        %1352 = vmatprep.subr.bf16.mxu0 0
        %1353 = vmatpush1.bf16.msra.mxu0 %v1343
        %1354 = vmatprep.subr.bf16.mxu0 0
        %1355 = vmatpush1.bf16.msra.mxu0 %v1342
        %1356 = vmatprep.subr.bf16.mxu0 0
        %1357 = vmatpush1.bf16.msra.mxu0 %v1341
        %1358 = vmatprep.subr.bf16.mxu0 0
        %1359 = vmatpush1.bf16.msra.mxu0 %v1340
        %1360 = vmatprep.subr.bf16.mxu0 0
        %1361 = vmatpush1.bf16.msra.mxu0 %v1339
        %1362 = vmatprep.subr.bf16.mxu0 0
        %1363 = vmatpush1.bf16.msra.mxu0 %v1338
        %1364 = vmatprep.subr.bf16.mxu0 0
        %1365 = vmatpush1.bf16.msra.mxu0 %v1337
        %1366 = vmatprep.subr.bf16.mxu0 0
        %1367 = vmatpush1.bf16.msra.mxu0 %v1336
        %1368 = vmatprep.subr.bf16.mxu0 0
        %1369 = vmatpush2.bf16.msra.mxu0 0
        %1370 = vmatprep.subr.bf16.mxu0 0
        %1371 = vmatpush2.bf16.msra.mxu0 0
        %1372 = vmatprep.subr.bf16.mxu0 0
        %1373 = vmatpush2.bf16.msra.mxu0 0
        %1374 = vmatprep.subr.bf16.mxu0 0
        %1375 = vmatpush2.bf16.msra.mxu0 0
        %1376 = vmatprep.subr.bf16.mxu0 0
        %1377 = vmatpush2.bf16.msra.mxu0 0
        %1378 = vmatprep.subr.bf16.mxu0 0
        %1379 = vmatpush2.bf16.msra.mxu0 0
        %1380 = vmatprep.subr.bf16.mxu0 0
        %1381 = vmatpush2.bf16.msra.mxu0 0
        %1382 = vmatprep.subr.bf16.mxu0 0
        %1383 = vmatpush2.bf16.msra.mxu0 0
        %1384 = vmatprep.mubr.bf16.mxu0 0
        %1385 = vmatmul.mubr.bf16.gmra.mxu0 %v1280
        %v1386 = vpop.f32.mrf.mxu0
        %v1387 = vadd.f32 0.0, %v1386
        %v1388 = vpop.f32.mrf.mxu0
        %v1389 = vpop.f32.mrf.mxu0
        %v1390 = vadd.f32 0.0, %v1389
        %v1391 = vpop.f32.mrf.mxu0
        %1392 = vmatprep.mubr.bf16.mxu0 0
        %1393 = vmatmul.mubr.bf16.gmra.mxu0 %v1281
        %v1394 = vpop.f32.mrf.mxu0
        %v1395 = vadd.f32 0.0, %v1394
        %v1396 = vpop.f32.mrf.mxu0
        %v1397 = vpop.f32.mrf.mxu0
        %v1398 = vadd.f32 0.0, %v1397
        %v1399 = vpop.f32.mrf.mxu0
        %1400 = vmatprep.mubr.bf16.mxu0 0
        %1401 = vmatmul.mubr.bf16.gmra.mxu0 %v1282
        %v1402 = vpop.f32.mrf.mxu0
        %v1403 = vadd.f32 0.0, %v1402
        %v1404 = vpop.f32.mrf.mxu0
        %v1405 = vpop.f32.mrf.mxu0
        %v1406 = vadd.f32 0.0, %v1405
        %v1407 = vpop.f32.mrf.mxu0
        %1408 = vmatprep.mubr.bf16.mxu0 0
        %1409 = vmatmul.mubr.bf16.gmra.mxu0 %v1283
        %v1410 = vpop.f32.mrf.mxu0
        %v1411 = vadd.f32 0.0, %v1410
        %v1412 = vpop.f32.mrf.mxu0
        %v1413 = vpop.f32.mrf.mxu0
        %v1414 = vadd.f32 0.0, %v1413
        %v1415 = vpop.f32.mrf.mxu0
        %1416 = vmatprep.mubr.bf16.mxu0 0
        %1417 = vmatmul.mubr.bf16.gmra.mxu0 %v1284
        %v1418 = vpop.f32.mrf.mxu0
        %v1419 = vadd.f32 0.0, %v1418
        %v1420 = vpop.f32.mrf.mxu0
        %v1421 = vpop.f32.mrf.mxu0
        %v1422 = vadd.f32 0.0, %v1421
        %v1423 = vpop.f32.mrf.mxu0
        %1424 = vmatprep.mubr.bf16.mxu0 0
        %1425 = vmatmul.mubr.bf16.gmra.mxu0 %v1285
        %v1426 = vpop.f32.mrf.mxu0
        %v1427 = vadd.f32 0.0, %v1426
        %v1428 = vpop.f32.mrf.mxu0
        %v1429 = vpop.f32.mrf.mxu0
        %v1430 = vadd.f32 0.0, %v1429
        %v1431 = vpop.f32.mrf.mxu0
        %1432 = vmatprep.mubr.bf16.mxu0 0
        %1433 = vmatmul.mubr.bf16.gmra.mxu0 %v1286
        %v1434 = vpop.f32.mrf.mxu0
        %v1435 = vadd.f32 0.0, %v1434
        %v1436 = vpop.f32.mrf.mxu0
        %v1437 = vpop.f32.mrf.mxu0
        %v1438 = vadd.f32 0.0, %v1437
        %v1439 = vpop.f32.mrf.mxu0
        %1440 = vmatprep.mubr.bf16.mxu0 0
        %1441 = vmatmul.mubr.bf16.gmra.mxu0 %v1287
        %v1442 = vpop.f32.mrf.mxu0
        %v1443 = vadd.f32 0.0, %v1442
        %v1444 = vpop.f32.mrf.mxu0
        %v1445 = vpop.f32.mrf.mxu0
        %v1446 = vadd.f32 0.0, %v1445
        %v1447 = vpop.f32.mrf.mxu0
        %1448 = vdwg.mxu0
        %v1449 = vadd.f32 %v1184, %v1387
        %v1450 = vadd.f32 %v1185, %v1390
        %v1451 = vadd.f32 %v1186, %v1395
        %v1452 = vadd.f32 %v1187, %v1398
        %v1453 = vadd.f32 %v1188, %v1403
        %v1454 = vadd.f32 %v1189, %v1406
        %v1455 = vadd.f32 %v1190, %v1411
        %v1456 = vadd.f32 %v1191, %v1414
        %v1457 = vadd.f32 %v1192, %v1419
        %v1458 = vadd.f32 %v1193, %v1422
        %v1459 = vadd.f32 %v1194, %v1427
        %v1460 = vadd.f32 %v1195, %v1430
        %v1461 = vadd.f32 %v1196, %v1435
        %v1462 = vadd.f32 %v1197, %v1438
        %v1463 = vadd.f32 %v1198, %v1443
        %v1464 = vadd.f32 %v1199, %v1446
        %v1465 = vrot.slane %v991, 4
        %v1466 = vrot.slane %v992, 4
        %v1467 = vsel %vm721, %v1465, %v1466
        %v1468 = vrot.slane %v993, 4
        %v1469 = vsel %vm721, %v1466, %v1468
        %v1470 = vrot.slane %v994, 4
        %v1471 = vrot.slane %v995, 4
        %v1472 = vsel %vm721, %v1470, %v1471
        %v1473 = vrot.slane %v996, 4
        %v1474 = vsel %vm721, %v1471, %v1473
        %v1475 = vrot.slane %v997, 4
        %v1476 = vrot.slane %v998, 4
        %v1477 = vsel %vm721, %v1475, %v1476
        %v1478 = vrot.slane %v999, 4
        %v1479 = vsel %vm721, %v1476, %v1478
        %v1480 = vrot.slane %v1000, 4
        %v1481 = vrot.slane %v1001, 4
        %v1482 = vsel %vm721, %v1480, %v1481
        %v1483 = vrot.slane %v1002, 4
        %v1484 = vsel %vm721, %v1481, %v1483
        %v1485 = vrot.slane %v1003, 4
        %v1486 = vrot.slane %v1004, 4
        %v1487 = vsel %vm721, %v1485, %v1486
        %v1488 = vrot.slane %v1005, 4
        %v1489 = vsel %vm721, %v1486, %v1488
        %v1490 = vrot.slane %v1006, 4
        %v1491 = vrot.slane %v1007, 4
        %v1492 = vsel %vm721, %v1490, %v1491
        %v1493 = vrot.slane %v1008, 4
        %v1494 = vsel %vm721, %v1491, %v1493
        %v1495 = vrot.slane %v1009, 4
        %v1496 = vrot.slane %v1010, 4
        %v1497 = vsel %vm721, %v1495, %v1496
        %v1498 = vrot.slane %v1011, 4
        %v1499 = vsel %vm721, %v1496, %v1498
        %v1500 = vrot.slane %v1012, 4
        %v1501 = vrot.slane %v1013, 4
        %v1502 = vsel %vm721, %v1500, %v1501
        %v1503 = vrot.slane %v1014, 4
        %v1504 = vsel %vm721, %v1501, %v1503
        %v1521 = vpack.c.bf16 %v1469, %v1467
        %v1522 = vpack.c.bf16 %v1474, %v1472
        %v1523 = vpack.c.bf16 %v1479, %v1477
        %v1524 = vpack.c.bf16 %v1484, %v1482
        %v1525 = vpack.c.bf16 %v1489, %v1487
        %v1526 = vpack.c.bf16 %v1494, %v1492
        %v1527 = vpack.c.bf16 %v1499, %v1497
        %v1528 = vpack.c.bf16 %v1504, %v1502
        %v1529 = vld [vmem:[#allocation5 + $0x140] sm:$0xf]
        %v1530 = vld [vmem:[#allocation5 + $0x144] sm:$0xf]
        %v1531 = vld [vmem:[#allocation5 + $0x148] sm:$0xf]
        %v1532 = vld [vmem:[#allocation5 + $0x14c] sm:$0xf]
        %v1533 = vld [vmem:[#allocation5 + $0x150] sm:$0xf]
        %v1534 = vld [vmem:[#allocation5 + $0x154] sm:$0xf]
        %v1535 = vld [vmem:[#allocation5 + $0x158] sm:$0xf]
        %v1536 = vld [vmem:[#allocation5 + $0x15c] sm:$0xf]
        %v1537 = vld [vmem:[#allocation5 + $0x160] sm:$0xf]
        %v1538 = vld [vmem:[#allocation5 + $0x164] sm:$0xf]
        %v1539 = vld [vmem:[#allocation5 + $0x168] sm:$0xf]
        %v1540 = vld [vmem:[#allocation5 + $0x16c] sm:$0xf]
        %v1541 = vld [vmem:[#allocation5 + $0x170] sm:$0xf]
        %v1542 = vld [vmem:[#allocation5 + $0x174] sm:$0xf]
        %v1543 = vld [vmem:[#allocation5 + $0x178] sm:$0xf]
        %v1544 = vld [vmem:[#allocation5 + $0x17c] sm:$0xf]
        %v1561 = vunpack.c.l.b16 %v1529
        %v1562 = vunpack.c.l.b16 %v1530
        %v1563 = vunpack.c.l.b16 %v1531
        %v1564 = vunpack.c.l.b16 %v1532
        %v1565 = vunpack.c.l.b16 %v1533
        %v1566 = vunpack.c.l.b16 %v1534
        %v1567 = vunpack.c.l.b16 %v1535
        %v1568 = vunpack.c.l.b16 %v1536
        %v1569 = vunpack.c.l.b16 %v1537
        %v1570 = vunpack.c.l.b16 %v1538
        %v1571 = vunpack.c.l.b16 %v1539
        %v1572 = vunpack.c.l.b16 %v1540
        %v1573 = vunpack.c.l.b16 %v1541
        %v1574 = vunpack.c.l.b16 %v1542
        %v1575 = vunpack.c.l.b16 %v1543
        %v1576 = vunpack.c.l.b16 %v1544
        %v1577 = vpack.c.b16 %v1562, %v1561
        %v1578 = vpack.c.b16 %v1564, %v1563
        %v1579 = vpack.c.b16 %v1566, %v1565
        %v1580 = vpack.c.b16 %v1568, %v1567
        %v1581 = vpack.c.b16 %v1570, %v1569
        %v1582 = vpack.c.b16 %v1572, %v1571
        %v1583 = vpack.c.b16 %v1574, %v1573
        %v1584 = vpack.c.b16 %v1576, %v1575
        %1593 = vmatprep.subr.bf16.mxu0 0
        %1594 = vmatpush1.bf16.msra.mxu0 %v1584
        %1595 = vmatprep.subr.bf16.mxu0 0
        %1596 = vmatpush1.bf16.msra.mxu0 %v1583
        %1597 = vmatprep.subr.bf16.mxu0 0
        %1598 = vmatpush1.bf16.msra.mxu0 %v1582
        %1599 = vmatprep.subr.bf16.mxu0 0
        %1600 = vmatpush1.bf16.msra.mxu0 %v1581
        %1601 = vmatprep.subr.bf16.mxu0 0
        %1602 = vmatpush1.bf16.msra.mxu0 %v1580
        %1603 = vmatprep.subr.bf16.mxu0 0
        %1604 = vmatpush1.bf16.msra.mxu0 %v1579
        %1605 = vmatprep.subr.bf16.mxu0 0
        %1606 = vmatpush1.bf16.msra.mxu0 %v1578
        %1607 = vmatprep.subr.bf16.mxu0 0
        %1608 = vmatpush1.bf16.msra.mxu0 %v1577
        %1609 = vmatprep.subr.bf16.mxu0 0
        %1610 = vmatpush2.bf16.msra.mxu0 0
        %1611 = vmatprep.subr.bf16.mxu0 0
        %1612 = vmatpush2.bf16.msra.mxu0 0
        %1613 = vmatprep.subr.bf16.mxu0 0
        %1614 = vmatpush2.bf16.msra.mxu0 0
        %1615 = vmatprep.subr.bf16.mxu0 0
        %1616 = vmatpush2.bf16.msra.mxu0 0
        %1617 = vmatprep.subr.bf16.mxu0 0
        %1618 = vmatpush2.bf16.msra.mxu0 0
        %1619 = vmatprep.subr.bf16.mxu0 0
        %1620 = vmatpush2.bf16.msra.mxu0 0
        %1621 = vmatprep.subr.bf16.mxu0 0
        %1622 = vmatpush2.bf16.msra.mxu0 0
        %1623 = vmatprep.subr.bf16.mxu0 0
        %1624 = vmatpush2.bf16.msra.mxu0 0
        %1625 = vmatprep.mubr.bf16.mxu0 0
        %1626 = vmatmul.mubr.bf16.gmra.mxu0 %v1521
        %v1627 = vpop.f32.mrf.mxu0
        %v1628 = vadd.f32 0.0, %v1627
        %v1629 = vpop.f32.mrf.mxu0
        %v1630 = vpop.f32.mrf.mxu0
        %v1631 = vadd.f32 0.0, %v1630
        %v1632 = vpop.f32.mrf.mxu0
        %1633 = vmatprep.mubr.bf16.mxu0 0
        %1634 = vmatmul.mubr.bf16.gmra.mxu0 %v1522
        %v1635 = vpop.f32.mrf.mxu0
        %v1636 = vadd.f32 0.0, %v1635
        %v1637 = vpop.f32.mrf.mxu0
        %v1638 = vpop.f32.mrf.mxu0
        %v1639 = vadd.f32 0.0, %v1638
        %v1640 = vpop.f32.mrf.mxu0
        %1641 = vmatprep.mubr.bf16.mxu0 0
        %1642 = vmatmul.mubr.bf16.gmra.mxu0 %v1523
        %v1643 = vpop.f32.mrf.mxu0
        %v1644 = vadd.f32 0.0, %v1643
        %v1645 = vpop.f32.mrf.mxu0
        %v1646 = vpop.f32.mrf.mxu0
        %v1647 = vadd.f32 0.0, %v1646
        %v1648 = vpop.f32.mrf.mxu0
        %1649 = vmatprep.mubr.bf16.mxu0 0
        %1650 = vmatmul.mubr.bf16.gmra.mxu0 %v1524
        %v1651 = vpop.f32.mrf.mxu0
        %v1652 = vadd.f32 0.0, %v1651
        %v1653 = vpop.f32.mrf.mxu0
        %v1654 = vpop.f32.mrf.mxu0
        %v1655 = vadd.f32 0.0, %v1654
        %v1656 = vpop.f32.mrf.mxu0
        %1657 = vmatprep.mubr.bf16.mxu0 0
        %1658 = vmatmul.mubr.bf16.gmra.mxu0 %v1525
        %v1659 = vpop.f32.mrf.mxu0
        %v1660 = vadd.f32 0.0, %v1659
        %v1661 = vpop.f32.mrf.mxu0
        %v1662 = vpop.f32.mrf.mxu0
        %v1663 = vadd.f32 0.0, %v1662
        %v1664 = vpop.f32.mrf.mxu0
        %1665 = vmatprep.mubr.bf16.mxu0 0
        %1666 = vmatmul.mubr.bf16.gmra.mxu0 %v1526
        %v1667 = vpop.f32.mrf.mxu0
        %v1668 = vadd.f32 0.0, %v1667
        %v1669 = vpop.f32.mrf.mxu0
        %v1670 = vpop.f32.mrf.mxu0
        %v1671 = vadd.f32 0.0, %v1670
        %v1672 = vpop.f32.mrf.mxu0
        %1673 = vmatprep.mubr.bf16.mxu0 0
        %1674 = vmatmul.mubr.bf16.gmra.mxu0 %v1527
        %v1675 = vpop.f32.mrf.mxu0
        %v1676 = vadd.f32 0.0, %v1675
        %v1677 = vpop.f32.mrf.mxu0
        %v1678 = vpop.f32.mrf.mxu0
        %v1679 = vadd.f32 0.0, %v1678
        %v1680 = vpop.f32.mrf.mxu0
        %1681 = vmatprep.mubr.bf16.mxu0 0
        %1682 = vmatmul.mubr.bf16.gmra.mxu0 %v1528
        %v1683 = vpop.f32.mrf.mxu0
        %v1684 = vadd.f32 0.0, %v1683
        %v1685 = vpop.f32.mrf.mxu0
        %v1686 = vpop.f32.mrf.mxu0
        %v1687 = vadd.f32 0.0, %v1686
        %v1688 = vpop.f32.mrf.mxu0
        %1689 = vdwg.mxu0
        %v1690 = vadd.f32 %v1449, %v1628
        %v1691 = vadd.f32 %v1450, %v1631
        %v1692 = vadd.f32 %v1451, %v1636
        %v1693 = vadd.f32 %v1452, %v1639
        %v1694 = vadd.f32 %v1453, %v1644
        %v1695 = vadd.f32 %v1454, %v1647
        %v1696 = vadd.f32 %v1455, %v1652
        %v1697 = vadd.f32 %v1456, %v1655
        %v1698 = vadd.f32 %v1457, %v1660
        %v1699 = vadd.f32 %v1458, %v1663
        %v1700 = vadd.f32 %v1459, %v1668
        %v1701 = vadd.f32 %v1460, %v1671
        %v1702 = vadd.f32 %v1461, %v1676
        %v1703 = vadd.f32 %v1462, %v1679
        %v1704 = vadd.f32 %v1463, %v1684
        %v1705 = vadd.f32 %v1464, %v1687
        %s1706 = sadd.s32 %s250, 4
        %s1707 = smul.u32 %s1706, 3
        %s1708 = smul.addr %s1707, 4
        %s1709 = scalar_lea.vmem %s215, %s1708 [#allocation2]
        %v1710 = vld [vmem:[%s1709] sm:$0xf]
        %v1711 = vld [vmem:[%s1709 + $0x4] sm:$0xf]
        %v1712 = vld [vmem:[%s1709 + $0x8] sm:$0xf]
        %v1713 = vld [vmem:[%s1709 + $0xc] sm:$0xf]
        %v1714 = vld [vmem:[%s1709 + $0x10] sm:$0xf]
        %v1715 = vld [vmem:[%s1709 + $0x14] sm:$0xf]
        %v1716 = vld [vmem:[%s1709 + $0x18] sm:$0xf]
        %v1717 = vld [vmem:[%s1709 + $0x1c] sm:$0xf]
        %v1718 = vld [vmem:[%s1709 + $0x20] sm:$0xf]
        %v1719 = vld [vmem:[%s1709 + $0x24] sm:$0xf]
        %v1720 = vld [vmem:[%s1709 + $0x28] sm:$0xf]
        %v1721 = vld [vmem:[%s1709 + $0x2c] sm:$0xf]
        %v1722 = vld [vmem:[%s1709 + $0x30] sm:$0xf]
        %v1723 = vld [vmem:[%s1709 + $0x34] sm:$0xf]
        %v1724 = vld [vmem:[%s1709 + $0x38] sm:$0xf]
        %v1725 = vld [vmem:[%s1709 + $0x3c] sm:$0xf]
        %v1726 = vld [vmem:[%s1709 + $0x40] sm:$0xf]
        %v1727 = vld [vmem:[%s1709 + $0x44] sm:$0xf]
        %v1728 = vld [vmem:[%s1709 + $0x48] sm:$0xf]
        %v1729 = vld [vmem:[%s1709 + $0x4c] sm:$0xf]
        %v1730 = vld [vmem:[%s1709 + $0x50] sm:$0xf]
        %v1731 = vld [vmem:[%s1709 + $0x54] sm:$0xf]
        %v1732 = vld [vmem:[%s1709 + $0x58] sm:$0xf]
        %v1733 = vld [vmem:[%s1709 + $0x5c] sm:$0xf]
        %v1734 = vunpack.c.l.bf16 %v1710
        %v1735 = vunpack.c.l.bf16 %v1711
        %v1736 = vunpack.c.l.bf16 %v1712
        %v1737 = vunpack.c.l.bf16 %v1713
        %v1738 = vunpack.c.l.bf16 %v1714
        %v1739 = vunpack.c.l.bf16 %v1715
        %v1740 = vunpack.c.l.bf16 %v1716
        %v1741 = vunpack.c.l.bf16 %v1717
        %v1742 = vunpack.c.l.bf16 %v1718
        %v1743 = vunpack.c.l.bf16 %v1719
        %v1744 = vunpack.c.l.bf16 %v1720
        %v1745 = vunpack.c.l.bf16 %v1721
        %v1746 = vunpack.c.l.bf16 %v1722
        %v1747 = vunpack.c.l.bf16 %v1723
        %v1748 = vunpack.c.l.bf16 %v1724
        %v1749 = vunpack.c.l.bf16 %v1725
        %v1750 = vunpack.c.l.bf16 %v1726
        %v1751 = vunpack.c.l.bf16 %v1727
        %v1752 = vunpack.c.l.bf16 %v1728
        %v1753 = vunpack.c.l.bf16 %v1729
        %v1754 = vunpack.c.l.bf16 %v1730
        %v1755 = vunpack.c.l.bf16 %v1731
        %v1756 = vunpack.c.l.bf16 %v1732
        %v1757 = vunpack.c.l.bf16 %v1733
        %v1758 = vpack.c.bf16 %v1735, %v1734
        %v1759 = vpack.c.bf16 %v1738, %v1737
        %v1760 = vpack.c.bf16 %v1741, %v1740
        %v1761 = vpack.c.bf16 %v1744, %v1743
        %v1762 = vpack.c.bf16 %v1747, %v1746
        %v1763 = vpack.c.bf16 %v1750, %v1749
        %v1764 = vpack.c.bf16 %v1753, %v1752
        %v1765 = vpack.c.bf16 %v1756, %v1755
        %v1766 = vld [vmem:[#allocation5 + $0x180] sm:$0xf]
        %v1767 = vld [vmem:[#allocation5 + $0x184] sm:$0xf]
        %v1768 = vld [vmem:[#allocation5 + $0x188] sm:$0xf]
        %v1769 = vld [vmem:[#allocation5 + $0x18c] sm:$0xf]
        %v1770 = vld [vmem:[#allocation5 + $0x190] sm:$0xf]
        %v1771 = vld [vmem:[#allocation5 + $0x194] sm:$0xf]
        %v1772 = vld [vmem:[#allocation5 + $0x198] sm:$0xf]
        %v1773 = vld [vmem:[#allocation5 + $0x19c] sm:$0xf]
        %v1774 = vld [vmem:[#allocation5 + $0x1a0] sm:$0xf]
        %v1775 = vld [vmem:[#allocation5 + $0x1a4] sm:$0xf]
        %v1776 = vld [vmem:[#allocation5 + $0x1a8] sm:$0xf]
        %v1777 = vld [vmem:[#allocation5 + $0x1ac] sm:$0xf]
        %v1778 = vld [vmem:[#allocation5 + $0x1b0] sm:$0xf]
        %v1779 = vld [vmem:[#allocation5 + $0x1b4] sm:$0xf]
        %v1780 = vld [vmem:[#allocation5 + $0x1b8] sm:$0xf]
        %v1781 = vld [vmem:[#allocation5 + $0x1bc] sm:$0xf]
        %v1798 = vunpack.c.l.b16 %v1766
        %v1799 = vunpack.c.l.b16 %v1767
        %v1800 = vunpack.c.l.b16 %v1768
        %v1801 = vunpack.c.l.b16 %v1769
        %v1802 = vunpack.c.l.b16 %v1770
        %v1803 = vunpack.c.l.b16 %v1771
        %v1804 = vunpack.c.l.b16 %v1772
        %v1805 = vunpack.c.l.b16 %v1773
        %v1806 = vunpack.c.l.b16 %v1774
        %v1807 = vunpack.c.l.b16 %v1775
        %v1808 = vunpack.c.l.b16 %v1776
        %v1809 = vunpack.c.l.b16 %v1777
        %v1810 = vunpack.c.l.b16 %v1778
        %v1811 = vunpack.c.l.b16 %v1779
        %v1812 = vunpack.c.l.b16 %v1780
        %v1813 = vunpack.c.l.b16 %v1781
        %v1814 = vpack.c.b16 %v1799, %v1798
        %v1815 = vpack.c.b16 %v1801, %v1800
        %v1816 = vpack.c.b16 %v1803, %v1802
        %v1817 = vpack.c.b16 %v1805, %v1804
        %v1818 = vpack.c.b16 %v1807, %v1806
        %v1819 = vpack.c.b16 %v1809, %v1808
        %v1820 = vpack.c.b16 %v1811, %v1810
        %v1821 = vpack.c.b16 %v1813, %v1812
        %1830 = vmatprep.subr.bf16.mxu0 0
        %1831 = vmatpush1.bf16.msra.mxu0 %v1821
        %1832 = vmatprep.subr.bf16.mxu0 0
        %1833 = vmatpush1.bf16.msra.mxu0 %v1820
        %1834 = vmatprep.subr.bf16.mxu0 0
        %1835 = vmatpush1.bf16.msra.mxu0 %v1819
        %1836 = vmatprep.subr.bf16.mxu0 0
        %1837 = vmatpush1.bf16.msra.mxu0 %v1818
        %1838 = vmatprep.subr.bf16.mxu0 0
        %1839 = vmatpush1.bf16.msra.mxu0 %v1817
        %1840 = vmatprep.subr.bf16.mxu0 0
        %1841 = vmatpush1.bf16.msra.mxu0 %v1816
        %1842 = vmatprep.subr.bf16.mxu0 0
        %1843 = vmatpush1.bf16.msra.mxu0 %v1815
        %1844 = vmatprep.subr.bf16.mxu0 0
        %1845 = vmatpush1.bf16.msra.mxu0 %v1814
        %1846 = vmatprep.subr.bf16.mxu0 0
        %1847 = vmatpush2.bf16.msra.mxu0 0
        %1848 = vmatprep.subr.bf16.mxu0 0
        %1849 = vmatpush2.bf16.msra.mxu0 0
        %1850 = vmatprep.subr.bf16.mxu0 0
        %1851 = vmatpush2.bf16.msra.mxu0 0
        %1852 = vmatprep.subr.bf16.mxu0 0
        %1853 = vmatpush2.bf16.msra.mxu0 0
        %1854 = vmatprep.subr.bf16.mxu0 0
        %1855 = vmatpush2.bf16.msra.mxu0 0
        %1856 = vmatprep.subr.bf16.mxu0 0
        %1857 = vmatpush2.bf16.msra.mxu0 0
        %1858 = vmatprep.subr.bf16.mxu0 0
        %1859 = vmatpush2.bf16.msra.mxu0 0
        %1860 = vmatprep.subr.bf16.mxu0 0
        %1861 = vmatpush2.bf16.msra.mxu0 0
        %1862 = vmatprep.mubr.bf16.mxu0 0
        %1863 = vmatmul.mubr.bf16.gmra.mxu0 %v1758
        %v1864 = vpop.f32.mrf.mxu0
        %v1865 = vadd.f32 0.0, %v1864
        %v1866 = vpop.f32.mrf.mxu0
        %v1867 = vpop.f32.mrf.mxu0
        %v1868 = vadd.f32 0.0, %v1867
        %v1869 = vpop.f32.mrf.mxu0
        %1870 = vmatprep.mubr.bf16.mxu0 0
        %1871 = vmatmul.mubr.bf16.gmra.mxu0 %v1759
        %v1872 = vpop.f32.mrf.mxu0
        %v1873 = vadd.f32 0.0, %v1872
        %v1874 = vpop.f32.mrf.mxu0
        %v1875 = vpop.f32.mrf.mxu0
        %v1876 = vadd.f32 0.0, %v1875
        %v1877 = vpop.f32.mrf.mxu0
        %1878 = vmatprep.mubr.bf16.mxu0 0
        %1879 = vmatmul.mubr.bf16.gmra.mxu0 %v1760
        %v1880 = vpop.f32.mrf.mxu0
        %v1881 = vadd.f32 0.0, %v1880
        %v1882 = vpop.f32.mrf.mxu0
        %v1883 = vpop.f32.mrf.mxu0
        %v1884 = vadd.f32 0.0, %v1883
        %v1885 = vpop.f32.mrf.mxu0
        %1886 = vmatprep.mubr.bf16.mxu0 0
        %1887 = vmatmul.mubr.bf16.gmra.mxu0 %v1761
        %v1888 = vpop.f32.mrf.mxu0
        %v1889 = vadd.f32 0.0, %v1888
        %v1890 = vpop.f32.mrf.mxu0
        %v1891 = vpop.f32.mrf.mxu0
        %v1892 = vadd.f32 0.0, %v1891
        %v1893 = vpop.f32.mrf.mxu0
        %1894 = vmatprep.mubr.bf16.mxu0 0
        %1895 = vmatmul.mubr.bf16.gmra.mxu0 %v1762
        %v1896 = vpop.f32.mrf.mxu0
        %v1897 = vadd.f32 0.0, %v1896
        %v1898 = vpop.f32.mrf.mxu0
        %v1899 = vpop.f32.mrf.mxu0
        %v1900 = vadd.f32 0.0, %v1899
        %v1901 = vpop.f32.mrf.mxu0
        %1902 = vmatprep.mubr.bf16.mxu0 0
        %1903 = vmatmul.mubr.bf16.gmra.mxu0 %v1763
        %v1904 = vpop.f32.mrf.mxu0
        %v1905 = vadd.f32 0.0, %v1904
        %v1906 = vpop.f32.mrf.mxu0
        %v1907 = vpop.f32.mrf.mxu0
        %v1908 = vadd.f32 0.0, %v1907
        %v1909 = vpop.f32.mrf.mxu0
        %1910 = vmatprep.mubr.bf16.mxu0 0
        %1911 = vmatmul.mubr.bf16.gmra.mxu0 %v1764
        %v1912 = vpop.f32.mrf.mxu0
        %v1913 = vadd.f32 0.0, %v1912
        %v1914 = vpop.f32.mrf.mxu0
        %v1915 = vpop.f32.mrf.mxu0
        %v1916 = vadd.f32 0.0, %v1915
        %v1917 = vpop.f32.mrf.mxu0
        %1918 = vmatprep.mubr.bf16.mxu0 0
        %1919 = vmatmul.mubr.bf16.gmra.mxu0 %v1765
        %v1920 = vpop.f32.mrf.mxu0
        %v1921 = vadd.f32 0.0, %v1920
        %v1922 = vpop.f32.mrf.mxu0
        %v1923 = vpop.f32.mrf.mxu0
        %v1924 = vadd.f32 0.0, %v1923
        %v1925 = vpop.f32.mrf.mxu0
        %1926 = vdwg.mxu0
        %v1927 = vadd.f32 %v1690, %v1865
        %v1928 = vadd.f32 %v1691, %v1868
        %v1929 = vadd.f32 %v1692, %v1873
        %v1930 = vadd.f32 %v1693, %v1876
        %v1931 = vadd.f32 %v1694, %v1881
        %v1932 = vadd.f32 %v1695, %v1884
        %v1933 = vadd.f32 %v1696, %v1889
        %v1934 = vadd.f32 %v1697, %v1892
        %v1935 = vadd.f32 %v1698, %v1897
        %v1936 = vadd.f32 %v1699, %v1900
        %v1937 = vadd.f32 %v1700, %v1905
        %v1938 = vadd.f32 %v1701, %v1908
        %v1939 = vadd.f32 %v1702, %v1913
        %v1940 = vadd.f32 %v1703, %v1916
        %v1941 = vadd.f32 %v1704, %v1921
        %v1942 = vadd.f32 %v1705, %v1924
        %v1967 = vrot.slane %v1734, 2
        %v1968 = vrot.slane %v1735, 2
        %v1969 = vsel %vm350, %v1967, %v1968
        %v1970 = vrot.slane %v1736, 2
        %v1971 = vsel %vm350, %v1968, %v1970
        %v1972 = vrot.slane %v1737, 2
        %v1973 = vrot.slane %v1738, 2
        %v1974 = vsel %vm350, %v1972, %v1973
        %v1975 = vrot.slane %v1739, 2
        %v1976 = vsel %vm350, %v1973, %v1975
        %v1977 = vrot.slane %v1740, 2
        %v1978 = vrot.slane %v1741, 2
        %v1979 = vsel %vm350, %v1977, %v1978
        %v1980 = vrot.slane %v1742, 2
        %v1981 = vsel %vm350, %v1978, %v1980
        %v1982 = vrot.slane %v1743, 2
        %v1983 = vrot.slane %v1744, 2
        %v1984 = vsel %vm350, %v1982, %v1983
        %v1985 = vrot.slane %v1745, 2
        %v1986 = vsel %vm350, %v1983, %v1985
        %v1987 = vrot.slane %v1746, 2
        %v1988 = vrot.slane %v1747, 2
        %v1989 = vsel %vm350, %v1987, %v1988
        %v1990 = vrot.slane %v1748, 2
        %v1991 = vsel %vm350, %v1988, %v1990
        %v1992 = vrot.slane %v1749, 2
        %v1993 = vrot.slane %v1750, 2
        %v1994 = vsel %vm350, %v1992, %v1993
        %v1995 = vrot.slane %v1751, 2
        %v1996 = vsel %vm350, %v1993, %v1995
        %v1997 = vrot.slane %v1752, 2
        %v1998 = vrot.slane %v1753, 2
        %v1999 = vsel %vm350, %v1997, %v1998
        %v2000 = vrot.slane %v1754, 2
        %v2001 = vsel %vm350, %v1998, %v2000
        %v2002 = vrot.slane %v1755, 2
        %v2003 = vrot.slane %v1756, 2
        %v2004 = vsel %vm350, %v2002, %v2003
        %v2005 = vrot.slane %v1757, 2
        %v2006 = vsel %vm350, %v2003, %v2005
        %v2023 = vpack.c.bf16 %v1971, %v1969
        %v2024 = vpack.c.bf16 %v1976, %v1974
        %v2025 = vpack.c.bf16 %v1981, %v1979
        %v2026 = vpack.c.bf16 %v1986, %v1984
        %v2027 = vpack.c.bf16 %v1991, %v1989
        %v2028 = vpack.c.bf16 %v1996, %v1994
        %v2029 = vpack.c.bf16 %v2001, %v1999
        %v2030 = vpack.c.bf16 %v2006, %v2004
        %v2031 = vld [vmem:[#allocation5 + $0x1c0] sm:$0xf]
        %v2032 = vld [vmem:[#allocation5 + $0x1c4] sm:$0xf]
        %v2033 = vld [vmem:[#allocation5 + $0x1c8] sm:$0xf]
        %v2034 = vld [vmem:[#allocation5 + $0x1cc] sm:$0xf]
        %v2035 = vld [vmem:[#allocation5 + $0x1d0] sm:$0xf]
        %v2036 = vld [vmem:[#allocation5 + $0x1d4] sm:$0xf]
        %v2037 = vld [vmem:[#allocation5 + $0x1d8] sm:$0xf]
        %v2038 = vld [vmem:[#allocation5 + $0x1dc] sm:$0xf]
        %v2039 = vld [vmem:[#allocation5 + $0x1e0] sm:$0xf]
        %v2040 = vld [vmem:[#allocation5 + $0x1e4] sm:$0xf]
        %v2041 = vld [vmem:[#allocation5 + $0x1e8] sm:$0xf]
        %v2042 = vld [vmem:[#allocation5 + $0x1ec] sm:$0xf]
        %v2043 = vld [vmem:[#allocation5 + $0x1f0] sm:$0xf]
        %v2044 = vld [vmem:[#allocation5 + $0x1f4] sm:$0xf]
        %v2045 = vld [vmem:[#allocation5 + $0x1f8] sm:$0xf]
        %v2046 = vld [vmem:[#allocation5 + $0x1fc] sm:$0xf]
        %v2063 = vunpack.c.l.b16 %v2031
        %v2064 = vunpack.c.l.b16 %v2032
        %v2065 = vunpack.c.l.b16 %v2033
        %v2066 = vunpack.c.l.b16 %v2034
        %v2067 = vunpack.c.l.b16 %v2035
        %v2068 = vunpack.c.l.b16 %v2036
        %v2069 = vunpack.c.l.b16 %v2037
        %v2070 = vunpack.c.l.b16 %v2038
        %v2071 = vunpack.c.l.b16 %v2039
        %v2072 = vunpack.c.l.b16 %v2040
        %v2073 = vunpack.c.l.b16 %v2041
        %v2074 = vunpack.c.l.b16 %v2042
        %v2075 = vunpack.c.l.b16 %v2043
        %v2076 = vunpack.c.l.b16 %v2044
        %v2077 = vunpack.c.l.b16 %v2045
        %v2078 = vunpack.c.l.b16 %v2046
        %v2079 = vpack.c.b16 %v2064, %v2063
        %v2080 = vpack.c.b16 %v2066, %v2065
        %v2081 = vpack.c.b16 %v2068, %v2067
        %v2082 = vpack.c.b16 %v2070, %v2069
        %v2083 = vpack.c.b16 %v2072, %v2071
        %v2084 = vpack.c.b16 %v2074, %v2073
        %v2085 = vpack.c.b16 %v2076, %v2075
        %v2086 = vpack.c.b16 %v2078, %v2077
        %2095 = vmatprep.subr.bf16.mxu0 0
        %2096 = vmatpush1.bf16.msra.mxu0 %v2086
        %2097 = vmatprep.subr.bf16.mxu0 0
        %2098 = vmatpush1.bf16.msra.mxu0 %v2085
        %2099 = vmatprep.subr.bf16.mxu0 0
        %2100 = vmatpush1.bf16.msra.mxu0 %v2084
        %2101 = vmatprep.subr.bf16.mxu0 0
        %2102 = vmatpush1.bf16.msra.mxu0 %v2083
        %2103 = vmatprep.subr.bf16.mxu0 0
        %2104 = vmatpush1.bf16.msra.mxu0 %v2082
        %2105 = vmatprep.subr.bf16.mxu0 0
        %2106 = vmatpush1.bf16.msra.mxu0 %v2081
        %2107 = vmatprep.subr.bf16.mxu0 0
        %2108 = vmatpush1.bf16.msra.mxu0 %v2080
        %2109 = vmatprep.subr.bf16.mxu0 0
        %2110 = vmatpush1.bf16.msra.mxu0 %v2079
        %2111 = vmatprep.subr.bf16.mxu0 0
        %2112 = vmatpush2.bf16.msra.mxu0 0
        %2113 = vmatprep.subr.bf16.mxu0 0
        %2114 = vmatpush2.bf16.msra.mxu0 0
        %2115 = vmatprep.subr.bf16.mxu0 0
        %2116 = vmatpush2.bf16.msra.mxu0 0
        %2117 = vmatprep.subr.bf16.mxu0 0
        %2118 = vmatpush2.bf16.msra.mxu0 0
        %2119 = vmatprep.subr.bf16.mxu0 0
        %2120 = vmatpush2.bf16.msra.mxu0 0
        %2121 = vmatprep.subr.bf16.mxu0 0
        %2122 = vmatpush2.bf16.msra.mxu0 0
        %2123 = vmatprep.subr.bf16.mxu0 0
        %2124 = vmatpush2.bf16.msra.mxu0 0
        %2125 = vmatprep.subr.bf16.mxu0 0
        %2126 = vmatpush2.bf16.msra.mxu0 0
        %2127 = vmatprep.mubr.bf16.mxu0 0
        %2128 = vmatmul.mubr.bf16.gmra.mxu0 %v2023
        %v2129 = vpop.f32.mrf.mxu0
        %v2130 = vadd.f32 0.0, %v2129
        %v2131 = vpop.f32.mrf.mxu0
        %v2132 = vpop.f32.mrf.mxu0
        %v2133 = vadd.f32 0.0, %v2132
        %v2134 = vpop.f32.mrf.mxu0
        %2135 = vmatprep.mubr.bf16.mxu0 0
        %2136 = vmatmul.mubr.bf16.gmra.mxu0 %v2024
        %v2137 = vpop.f32.mrf.mxu0
        %v2138 = vadd.f32 0.0, %v2137
        %v2139 = vpop.f32.mrf.mxu0
        %v2140 = vpop.f32.mrf.mxu0
        %v2141 = vadd.f32 0.0, %v2140
        %v2142 = vpop.f32.mrf.mxu0
        %2143 = vmatprep.mubr.bf16.mxu0 0
        %2144 = vmatmul.mubr.bf16.gmra.mxu0 %v2025
        %v2145 = vpop.f32.mrf.mxu0
        %v2146 = vadd.f32 0.0, %v2145
        %v2147 = vpop.f32.mrf.mxu0
        %v2148 = vpop.f32.mrf.mxu0
        %v2149 = vadd.f32 0.0, %v2148
        %v2150 = vpop.f32.mrf.mxu0
        %2151 = vmatprep.mubr.bf16.mxu0 0
        %2152 = vmatmul.mubr.bf16.gmra.mxu0 %v2026
        %v2153 = vpop.f32.mrf.mxu0
        %v2154 = vadd.f32 0.0, %v2153
        %v2155 = vpop.f32.mrf.mxu0
        %v2156 = vpop.f32.mrf.mxu0
        %v2157 = vadd.f32 0.0, %v2156
        %v2158 = vpop.f32.mrf.mxu0
        %2159 = vmatprep.mubr.bf16.mxu0 0
        %2160 = vmatmul.mubr.bf16.gmra.mxu0 %v2027
        %v2161 = vpop.f32.mrf.mxu0
        %v2162 = vadd.f32 0.0, %v2161
        %v2163 = vpop.f32.mrf.mxu0
        %v2164 = vpop.f32.mrf.mxu0
        %v2165 = vadd.f32 0.0, %v2164
        %v2166 = vpop.f32.mrf.mxu0
        %2167 = vmatprep.mubr.bf16.mxu0 0
        %2168 = vmatmul.mubr.bf16.gmra.mxu0 %v2028
        %v2169 = vpop.f32.mrf.mxu0
        %v2170 = vadd.f32 0.0, %v2169
        %v2171 = vpop.f32.mrf.mxu0
        %v2172 = vpop.f32.mrf.mxu0
        %v2173 = vadd.f32 0.0, %v2172
        %v2174 = vpop.f32.mrf.mxu0
        %2175 = vmatprep.mubr.bf16.mxu0 0
        %2176 = vmatmul.mubr.bf16.gmra.mxu0 %v2029
        %v2177 = vpop.f32.mrf.mxu0
        %v2178 = vadd.f32 0.0, %v2177
        %v2179 = vpop.f32.mrf.mxu0
        %v2180 = vpop.f32.mrf.mxu0
        %v2181 = vadd.f32 0.0, %v2180
        %v2182 = vpop.f32.mrf.mxu0
        %2183 = vmatprep.mubr.bf16.mxu0 0
        %2184 = vmatmul.mubr.bf16.gmra.mxu0 %v2030
        %v2185 = vpop.f32.mrf.mxu0
        %v2186 = vadd.f32 0.0, %v2185
        %v2187 = vpop.f32.mrf.mxu0
        %v2188 = vpop.f32.mrf.mxu0
        %v2189 = vadd.f32 0.0, %v2188
        %v2190 = vpop.f32.mrf.mxu0
        %2191 = vdwg.mxu0
        %v2192 = vadd.f32 %v1927, %v2130
        %v2193 = vadd.f32 %v1928, %v2133
        %v2194 = vadd.f32 %v1929, %v2138
        %v2195 = vadd.f32 %v1930, %v2141
        %v2196 = vadd.f32 %v1931, %v2146
        %v2197 = vadd.f32 %v1932, %v2149
        %v2198 = vadd.f32 %v1933, %v2154
        %v2199 = vadd.f32 %v1934, %v2157
        %v2200 = vadd.f32 %v1935, %v2162
        %v2201 = vadd.f32 %v1936, %v2165
        %v2202 = vadd.f32 %v1937, %v2170
        %v2203 = vadd.f32 %v1938, %v2173
        %v2204 = vadd.f32 %v1939, %v2178
        %v2205 = vadd.f32 %v1940, %v2181
        %v2206 = vadd.f32 %v1941, %v2186
        %v2207 = vadd.f32 %v1942, %v2189
        %v2208 = vrot.slane %v1734, 4
        %v2209 = vrot.slane %v1735, 4
        %v2210 = vsel %vm721, %v2208, %v2209
        %v2211 = vrot.slane %v1736, 4
        %v2212 = vsel %vm721, %v2209, %v2211
        %v2213 = vrot.slane %v1737, 4
        %v2214 = vrot.slane %v1738, 4
        %v2215 = vsel %vm721, %v2213, %v2214
        %v2216 = vrot.slane %v1739, 4
        %v2217 = vsel %vm721, %v2214, %v2216
        %v2218 = vrot.slane %v1740, 4
        %v2219 = vrot.slane %v1741, 4
        %v2220 = vsel %vm721, %v2218, %v2219
        %v2221 = vrot.slane %v1742, 4
        %v2222 = vsel %vm721, %v2219, %v2221
        %v2223 = vrot.slane %v1743, 4
        %v2224 = vrot.slane %v1744, 4
        %v2225 = vsel %vm721, %v2223, %v2224
        %v2226 = vrot.slane %v1745, 4
        %v2227 = vsel %vm721, %v2224, %v2226
        %v2228 = vrot.slane %v1746, 4
        %v2229 = vrot.slane %v1747, 4
        %v2230 = vsel %vm721, %v2228, %v2229
        %v2231 = vrot.slane %v1748, 4
        %v2232 = vsel %vm721, %v2229, %v2231
        %v2233 = vrot.slane %v1749, 4
        %v2234 = vrot.slane %v1750, 4
        %v2235 = vsel %vm721, %v2233, %v2234
        %v2236 = vrot.slane %v1751, 4
        %v2237 = vsel %vm721, %v2234, %v2236
        %v2238 = vrot.slane %v1752, 4
        %v2239 = vrot.slane %v1753, 4
        %v2240 = vsel %vm721, %v2238, %v2239
        %v2241 = vrot.slane %v1754, 4
        %v2242 = vsel %vm721, %v2239, %v2241
        %v2243 = vrot.slane %v1755, 4
        %v2244 = vrot.slane %v1756, 4
        %v2245 = vsel %vm721, %v2243, %v2244
        %v2246 = vrot.slane %v1757, 4
        %v2247 = vsel %vm721, %v2244, %v2246
        %v2264 = vpack.c.bf16 %v2212, %v2210
        %v2265 = vpack.c.bf16 %v2217, %v2215
        %v2266 = vpack.c.bf16 %v2222, %v2220
        %v2267 = vpack.c.bf16 %v2227, %v2225
        %v2268 = vpack.c.bf16 %v2232, %v2230
        %v2269 = vpack.c.bf16 %v2237, %v2235
        %v2270 = vpack.c.bf16 %v2242, %v2240
        %v2271 = vpack.c.bf16 %v2247, %v2245
        %v2272 = vld [vmem:[#allocation5 + $0x200] sm:$0xf]
        %v2273 = vld [vmem:[#allocation5 + $0x204] sm:$0xf]
        %v2274 = vld [vmem:[#allocation5 + $0x208] sm:$0xf]
        %v2275 = vld [vmem:[#allocation5 + $0x20c] sm:$0xf]
        %v2276 = vld [vmem:[#allocation5 + $0x210] sm:$0xf]
        %v2277 = vld [vmem:[#allocation5 + $0x214] sm:$0xf]
        %v2278 = vld [vmem:[#allocation5 + $0x218] sm:$0xf]
        %v2279 = vld [vmem:[#allocation5 + $0x21c] sm:$0xf]
        %v2280 = vld [vmem:[#allocation5 + $0x220] sm:$0xf]
        %v2281 = vld [vmem:[#allocation5 + $0x224] sm:$0xf]
        %v2282 = vld [vmem:[#allocation5 + $0x228] sm:$0xf]
        %v2283 = vld [vmem:[#allocation5 + $0x22c] sm:$0xf]
        %v2284 = vld [vmem:[#allocation5 + $0x230] sm:$0xf]
        %v2285 = vld [vmem:[#allocation5 + $0x234] sm:$0xf]
        %v2286 = vld [vmem:[#allocation5 + $0x238] sm:$0xf]
        %v2287 = vld [vmem:[#allocation5 + $0x23c] sm:$0xf]
        %v2304 = vunpack.c.l.b16 %v2272
        %v2305 = vunpack.c.l.b16 %v2273
        %v2306 = vunpack.c.l.b16 %v2274
        %v2307 = vunpack.c.l.b16 %v2275
        %v2308 = vunpack.c.l.b16 %v2276
        %v2309 = vunpack.c.l.b16 %v2277
        %v2310 = vunpack.c.l.b16 %v2278
        %v2311 = vunpack.c.l.b16 %v2279
        %v2312 = vunpack.c.l.b16 %v2280
        %v2313 = vunpack.c.l.b16 %v2281
        %v2314 = vunpack.c.l.b16 %v2282
        %v2315 = vunpack.c.l.b16 %v2283
        %v2316 = vunpack.c.l.b16 %v2284
        %v2317 = vunpack.c.l.b16 %v2285
        %v2318 = vunpack.c.l.b16 %v2286
        %v2319 = vunpack.c.l.b16 %v2287
        %v2320 = vpack.c.b16 %v2305, %v2304
        %v2321 = vpack.c.b16 %v2307, %v2306
        %v2322 = vpack.c.b16 %v2309, %v2308
        %v2323 = vpack.c.b16 %v2311, %v2310
        %v2324 = vpack.c.b16 %v2313, %v2312
        %v2325 = vpack.c.b16 %v2315, %v2314
        %v2326 = vpack.c.b16 %v2317, %v2316
        %v2327 = vpack.c.b16 %v2319, %v2318
        %2336 = vmatprep.subr.bf16.mxu0 0
        %2337 = vmatpush1.bf16.msra.mxu0 %v2327
        %2338 = vmatprep.subr.bf16.mxu0 0
        %2339 = vmatpush1.bf16.msra.mxu0 %v2326
        %2340 = vmatprep.subr.bf16.mxu0 0
        %2341 = vmatpush1.bf16.msra.mxu0 %v2325
        %2342 = vmatprep.subr.bf16.mxu0 0
        %2343 = vmatpush1.bf16.msra.mxu0 %v2324
        %2344 = vmatprep.subr.bf16.mxu0 0
        %2345 = vmatpush1.bf16.msra.mxu0 %v2323
        %2346 = vmatprep.subr.bf16.mxu0 0
        %2347 = vmatpush1.bf16.msra.mxu0 %v2322
        %2348 = vmatprep.subr.bf16.mxu0 0
        %2349 = vmatpush1.bf16.msra.mxu0 %v2321
        %2350 = vmatprep.subr.bf16.mxu0 0
        %2351 = vmatpush1.bf16.msra.mxu0 %v2320
        %2352 = vmatprep.subr.bf16.mxu0 0
        %2353 = vmatpush2.bf16.msra.mxu0 0
        %2354 = vmatprep.subr.bf16.mxu0 0
        %2355 = vmatpush2.bf16.msra.mxu0 0
        %2356 = vmatprep.subr.bf16.mxu0 0
        %2357 = vmatpush2.bf16.msra.mxu0 0
        %2358 = vmatprep.subr.bf16.mxu0 0
        %2359 = vmatpush2.bf16.msra.mxu0 0
        %2360 = vmatprep.subr.bf16.mxu0 0
        %2361 = vmatpush2.bf16.msra.mxu0 0
        %2362 = vmatprep.subr.bf16.mxu0 0
        %2363 = vmatpush2.bf16.msra.mxu0 0
        %2364 = vmatprep.subr.bf16.mxu0 0
        %2365 = vmatpush2.bf16.msra.mxu0 0
        %2366 = vmatprep.subr.bf16.mxu0 0
        %2367 = vmatpush2.bf16.msra.mxu0 0
        %2368 = vmatprep.mubr.bf16.mxu0 0
        %2369 = vmatmul.mubr.bf16.gmra.mxu0 %v2264
        %v2370 = vpop.f32.mrf.mxu0
        %v2371 = vadd.f32 0.0, %v2370
        %v2372 = vpop.f32.mrf.mxu0
        %v2373 = vpop.f32.mrf.mxu0
        %v2374 = vadd.f32 0.0, %v2373
        %v2375 = vpop.f32.mrf.mxu0
        %2376 = vmatprep.mubr.bf16.mxu0 0
        %2377 = vmatmul.mubr.bf16.gmra.mxu0 %v2265
        %v2378 = vpop.f32.mrf.mxu0
        %v2379 = vadd.f32 0.0, %v2378
        %v2380 = vpop.f32.mrf.mxu0
        %v2381 = vpop.f32.mrf.mxu0
        %v2382 = vadd.f32 0.0, %v2381
        %v2383 = vpop.f32.mrf.mxu0
        %2384 = vmatprep.mubr.bf16.mxu0 0
        %2385 = vmatmul.mubr.bf16.gmra.mxu0 %v2266
        %v2386 = vpop.f32.mrf.mxu0
        %v2387 = vadd.f32 0.0, %v2386
        %v2388 = vpop.f32.mrf.mxu0
        %v2389 = vpop.f32.mrf.mxu0
        %v2390 = vadd.f32 0.0, %v2389
        %v2391 = vpop.f32.mrf.mxu0
        %2392 = vmatprep.mubr.bf16.mxu0 0
        %2393 = vmatmul.mubr.bf16.gmra.mxu0 %v2267
        %v2394 = vpop.f32.mrf.mxu0
        %v2395 = vadd.f32 0.0, %v2394
        %v2396 = vpop.f32.mrf.mxu0
        %v2397 = vpop.f32.mrf.mxu0
        %v2398 = vadd.f32 0.0, %v2397
        %v2399 = vpop.f32.mrf.mxu0
        %2400 = vmatprep.mubr.bf16.mxu0 0
        %2401 = vmatmul.mubr.bf16.gmra.mxu0 %v2268
        %v2402 = vpop.f32.mrf.mxu0
        %v2403 = vadd.f32 0.0, %v2402
        %v2404 = vpop.f32.mrf.mxu0
        %v2405 = vpop.f32.mrf.mxu0
        %v2406 = vadd.f32 0.0, %v2405
        %v2407 = vpop.f32.mrf.mxu0
        %2408 = vmatprep.mubr.bf16.mxu0 0
        %2409 = vmatmul.mubr.bf16.gmra.mxu0 %v2269
        %v2410 = vpop.f32.mrf.mxu0
        %v2411 = vadd.f32 0.0, %v2410
        %v2412 = vpop.f32.mrf.mxu0
        %v2413 = vpop.f32.mrf.mxu0
        %v2414 = vadd.f32 0.0, %v2413
        %v2415 = vpop.f32.mrf.mxu0
        %2416 = vmatprep.mubr.bf16.mxu0 0
        %2417 = vmatmul.mubr.bf16.gmra.mxu0 %v2270
        %v2418 = vpop.f32.mrf.mxu0
        %v2419 = vadd.f32 0.0, %v2418
        %v2420 = vpop.f32.mrf.mxu0
        %v2421 = vpop.f32.mrf.mxu0
        %v2422 = vadd.f32 0.0, %v2421
        %v2423 = vpop.f32.mrf.mxu0
        %2424 = vmatprep.mubr.bf16.mxu0 0
        %2425 = vmatmul.mubr.bf16.gmra.mxu0 %v2271
        %v2426 = vpop.f32.mrf.mxu0
        %v2427 = vadd.f32 0.0, %v2426
        %v2428 = vpop.f32.mrf.mxu0
        %v2429 = vpop.f32.mrf.mxu0
        %v2430 = vadd.f32 0.0, %v2429
        %v2431 = vpop.f32.mrf.mxu0
        %2432 = vdwg.mxu0
        %v2433 = vadd.f32 %v2192, %v2371
        %v2434 = vadd.f32 %v2193, %v2374
        %v2435 = vadd.f32 %v2194, %v2379
        %v2436 = vadd.f32 %v2195, %v2382
        %v2437 = vadd.f32 %v2196, %v2387
        %v2438 = vadd.f32 %v2197, %v2390
        %v2439 = vadd.f32 %v2198, %v2395
        %v2440 = vadd.f32 %v2199, %v2398
        %v2441 = vadd.f32 %v2200, %v2403
        %v2442 = vadd.f32 %v2201, %v2406
        %v2443 = vadd.f32 %v2202, %v2411
        %v2444 = vadd.f32 %v2203, %v2414
        %v2445 = vadd.f32 %v2204, %v2419
        %v2446 = vadd.f32 %v2205, %v2422
        %v2447 = vadd.f32 %v2206, %v2427
        %v2448 = vadd.f32 %v2207, %v2430
        %v2449 = vld [vmem:[%s247] sm:$0x1]
        %v2451 = vlaneseq
        %v2452 = vshrl.u32 %v2451, 7
        %v2453 = vsub.s32 0, %v2452
        %v2454 = vrot.slane %v2449, %v2453
        %v2456 = vadd.f32 %v2433, %v2454
        %v2457 = vadd.f32 %v2434, %v2454
        %v2458 = vadd.f32 %v2435, %v2454
        %v2459 = vadd.f32 %v2436, %v2454
        %v2460 = vadd.f32 %v2437, %v2454
        %v2461 = vadd.f32 %v2438, %v2454
        %v2462 = vadd.f32 %v2439, %v2454
        %v2463 = vadd.f32 %v2440, %v2454
        %v2464 = vadd.f32 %v2441, %v2454
        %v2465 = vadd.f32 %v2442, %v2454
        %v2466 = vadd.f32 %v2443, %v2454
        %v2467 = vadd.f32 %v2444, %v2454
        %v2468 = vadd.f32 %v2445, %v2454
        %v2469 = vadd.f32 %v2446, %v2454
        %v2470 = vadd.f32 %v2447, %v2454
        %v2471 = vadd.f32 %v2448, %v2454
        %v2472 = vmax.f32 %v2456, 0.0
        %v2473 = vmax.f32 %v2457, 0.0
        %v2474 = vmax.f32 %v2458, 0.0
        %v2475 = vmax.f32 %v2459, 0.0
        %v2476 = vmax.f32 %v2460, 0.0
        %v2477 = vmax.f32 %v2461, 0.0
        %v2478 = vmax.f32 %v2462, 0.0
        %v2479 = vmax.f32 %v2463, 0.0
        %v2480 = vmax.f32 %v2464, 0.0
        %v2481 = vmax.f32 %v2465, 0.0
        %v2482 = vmax.f32 %v2466, 0.0
        %v2483 = vmax.f32 %v2467, 0.0
        %v2484 = vmax.f32 %v2468, 0.0
        %v2485 = vmax.f32 %v2469, 0.0
        %v2486 = vmax.f32 %v2470, 0.0
        %v2487 = vmax.f32 %v2471, 0.0
        %2488 = vst [vmem:[%s244] sm:$0xff] %v2472
        %2489 = vst [vmem:[%s244 + $0x8] sm:$0xff] %v2473
        %2490 = vst [vmem:[%s244 + $0x10] sm:$0xff] %v2474
        %2491 = vst [vmem:[%s244 + $0x18] sm:$0xff] %v2475
        %2492 = vst [vmem:[%s244 + $0x20] sm:$0xff] %v2476
        %2493 = vst [vmem:[%s244 + $0x28] sm:$0xff] %v2477
        %2494 = vst [vmem:[%s244 + $0x30] sm:$0xff] %v2478
        %2495 = vst [vmem:[%s244 + $0x38] sm:$0xff] %v2479
        %2496 = vst [vmem:[%s244 + $0x40] sm:$0xff] %v2480
        %2497 = vst [vmem:[%s244 + $0x48] sm:$0xff] %v2481
        %2498 = vst [vmem:[%s244 + $0x50] sm:$0xff] %v2482
        %2499 = vst [vmem:[%s244 + $0x58] sm:$0xff] %v2483
        %2500 = vst [vmem:[%s244 + $0x60] sm:$0xff] %v2484
        %2501 = vst [vmem:[%s244 + $0x68] sm:$0xff] %v2485
        %2502 = vst [vmem:[%s244 + $0x70] sm:$0xff] %v2486
        %2503 = vst [vmem:[%s244 + $0x78] sm:$0xff] %v2487
        %s2504 = sand.u32 %s130, 1
        %s2505 = scalar_lea.sflag [#allocation4], %s2504
        %s2506 = sand.u32 %s130, 1
        %s2507 = smul.addr %s2506, 128
        %s2508 = scalar_lea.vmem [#allocation7], %s2507
        // Predicated region
        $region41: #{tpu_custom_call.1} parent=31 // pred_check
          %p2509 = pneg %p140
        $region42: #{tpu_custom_call.1} parent=31 // pred_check_branch
          %2511 = sbr.rel (%p2509) target = $region44
        $region43: #{tpu_custom_call.1} parent=31 // pred_region
          %s2512 = smul.u32 8, %s28
          %s2514 = ssub.s32 2048, 2048
          %2515 = vsyncadd %s2505, %s2514
          %s2516 = smul.addr %s2512, 2
          %s2517 = sadd.s32 %s27, %s2516
          %s2518 = smul.addr %s26, 32
          %s2519 = sadd.s32 %s2517, %s2518
          %s2520 = smul.addr %s2519, 128
          %s2521 = scalar_lea.hbm %s3, %s2520
          %s2522 = sshll.u32 %s2508, 4
          %s2523 = int_to_ptr.vmem [resolvable:$true] %s2522
          %2528 = dma.vmem_to_hbm [thread:$0]  %s2523, 2048, %s2521, %s2505, 128, 128, 8
        $region44: #{tpu_custom_call.1} parent=31 // pred_fallthru
          _
      $region32: #{tpu_custom_call.1} parent=5 // pred_fallthru
        _
      %p2529 = scmp.le.s32.totalorder 2, %s16
      // Predicated region
      $region45: #{tpu_custom_call.1} parent=5 // pred_check
        %p2530 = pneg %p2529
      $region46: #{tpu_custom_call.1} parent=5 // pred_check_branch
        %2532 = sbr.rel (%p2530) target = $region48
      $region47: #{tpu_custom_call.1} parent=5 // pred_region
        %s2533 = ssub.s32 %s16, 2
        // Predicated region
        $region49: #{tpu_custom_call.1} parent=47 // pred_check
          %p2534 = pneg %p146
        $region50: #{tpu_custom_call.1} parent=47 // pred_check_branch
          %2536 = sbr.rel (%p2534) target = $region52
        $region51: #{tpu_custom_call.1} parent=47 // pred_region
          %s2537 = sand.u32 %s131, 1
          %s2538 = scalar_lea.sflag [#allocation4], %s2537
          %s2539 = sand.u32 %s131, 1
          %s2540 = smul.addr %s2539, 128
          %s2541 = scalar_lea.vmem [#allocation7], %s2540
          %2542 = dma.done %s2538, 2048
        $region52: #{tpu_custom_call.1} parent=47 // pred_fallthru
          _
      $region48: #{tpu_custom_call.1} parent=5 // pred_fallthru
        _
    $region6: #{tpu_custom_call.1} parent=1 // loop_footer
      %s20 = sadd.s32 1, %s16
    $region7: #{tpu_custom_call.1} parent=1 // loop_footer_branch
      %15 = sbr.rel target = $region3
    $region8: #{tpu_custom_call.1} parent=1 // loop_exit
      _
    %2543 = vsyncpa [#allocation3], 1
    %s2544 = scalar_lea.sflag [#allocation3], 1
    %2545 = vsyncpa %s2544, 1
    %2546 = vsyncpa [#allocation6], 1
    %2547 = vsyncpa [#allocation4], 1
    %s2548 = scalar_lea.sflag [#allocation4], 1
    %2549 = vsyncpa %s2548, 1

</llo_original>
